<compile_context>
chip_gen: v7x
topology: tpu7x:2x2x1
jax: 0.10.0
libtpu: 0.0.40
codegen_flags: <defaults>
</compile_context>

<pallas_src>
import functools

import jax
import jax.numpy as jnp
from jax.experimental import pallas as pl
from jax.experimental.pallas import tpu as pltpu

LN_EPS = 1e-5
LEAKY_SLOPE = 0.1                 # matches nn.LeakyReLU(0.1) in the PyTorch spec
HIDDEN_WIDTHS = (384, 256, 256, 128)
VEC_PAD = max(HIDDEN_WIDTHS)      # packed epilogue-vector row width (384)


def _layernorm_f32(z, g, be):
    # Two-pass, numerically stable (matches PyTorch LayerNorm): mean, then
    # mean of squared deviation; biased variance, eps inside rsqrt.
    mu = jnp.mean(z, axis=-1, keepdims=True)
    d = z - mu
    var = jnp.mean(d * d, axis=-1, keepdims=True)
    return d * jax.lax.rsqrt(var + LN_EPS) * g + be


def _leaky_relu(h):
    # slope < 1  =>  max(h, slope*h) == LeakyReLU(h); one vmax, no cmp+select.
    return jnp.maximum(h, LEAKY_SLOPE * h)


def dql_mlp_kernel(x_ref, w1_ref, w2_ref, w3_ref, w4_ref, w5t_ref,
                   vec_ref, b5t_ref, o_ref, *, matmul_dtype):
    h = x_ref[...].astype(jnp.float32)

    # Blocks 1..4: Linear -> LayerNorm -> (Dropout = identity, eval) -> LeakyReLU
    # TODO(synk): training-mode Dropout(0.1) (RNG masking) is not implemented;
    # this kernel is the standard deployed / eval forward pass.
    for li, (w_ref, width) in enumerate(zip((w1_ref, w2_ref, w3_ref, w4_ref),
                                            HIDDEN_WIDTHS)):
        row = 3 * li
        b  = vec_ref[pl.ds(row + 0, 1), pl.ds(0, width)]   # (1, width) f32
        g  = vec_ref[pl.ds(row + 1, 1), pl.ds(0, width)]
        be = vec_ref[pl.ds(row + 2, 1), pl.ds(0, width)]
        z = jnp.dot(h.astype(matmul_dtype), w_ref[...],
                    preferred_element_type=jnp.float32) + b
        h = _leaky_relu(_layernorm_f32(z, g, be))

    # Head, transposed (q@k^T form): (a_pad,128) x (bt,128)^T -> (a_pad, bt).
    out_t = jax.lax.dot_general(
        w5t_ref[...], h.astype(matmul_dtype),
        dimension_numbers=(((1,), (1,)), ((), ())),
        preferred_element_type=jnp.float32) + b5t_ref[...]
    o_ref[...] = out_t.astype(o_ref.dtype)


def _num_tensorcores():
    """Best-effort: TensorCores one Pallas kernel can span on this chip."""
    try:
        kind = jax.devices()[0].device_kind.lower()
    except Exception:
        return 1
    # v4 / v5p / v7x: 2 TensorCores share "parallel" grid axes; v5e/v6e: 1.
    return 2 if any(tag in kind for tag in ("v7", "v5p", "v4")) else 1


def _auto_batch_tile(batch, num_cores):
    # Minimum number of grid steps (>= num_cores so no TensorCore idles),
    # capped at ~1024 rows/step; tiles > 128 rounded up to a multiple of 256
    # so the MXU sees a full 256-row M on v6e/v7x (v5e MXU is 128-wide).
    steps = max(num_cores, pl.cdiv(batch, 1024))
    bt = pl.cdiv(batch, steps)
    return 128 if bt <= 128 else pl.cdiv(bt, 256) * 256


def dql_forward(x, params, *, batch_tile=None, matmul_dtype=jnp.bfloat16):
    """x: (B, state_dim) f32.  params: flat f32 tuple as in init_params."""
    B, state_dim = x.shape
    (w1, b1, g1, be1,
     w2, b2, g2, be2,
     w3, b3, g3, be3,
     w4, b4, g4, be4,
     w5, b5) = params
    action_dim = w5.shape[-1]

    bt = batch_tile if batch_tile is not None else _auto_batch_tile(B, _num_tensorcores())
    assert bt % 128 == 0, "batch_tile must be a multiple of 128"
    B_pad = pl.cdiv(B, bt) * bt
    if B_pad != B:
        x = jnp.pad(x, ((0, B_pad - B), (0, 0)))

    # Head pre-transposed and sublane-padded: (a_pad, 128) weights, (a_pad, 1) bias.
    a_pad = max(8, pl.cdiv(action_dim, 8) * 8)
    w5t = jnp.pad(w5, ((0, 0), (0, a_pad - action_dim))).T.astype(matmul_dtype)
    b5t = jnp.pad(b5, ((0, 0), (0, a_pad - action_dim))).T          # (a_pad, 1) f32

    # Coalesce the 12 per-layer epilogue vectors into one (12, 384) f32 array.
    rows = []
    for bb, gg, bbe in ((b1, g1, be1), (b2, g2, be2), (b3, g3, be3), (b4, g4, be4)):
        for v in (bb, gg, bbe):
            v2 = v.reshape(1, -1)
            rows.append(jnp.pad(v2, ((0, 0), (0, VEC_PAD - v2.shape[-1]))))
    vecs = jnp.concatenate(rows, axis=0).astype(jnp.float32)        # (12, 384)

    # Hidden-layer weights resident in VMEM as bf16 (grid-invariant blocks).
    w1c, w2c, w3c, w4c = (w.astype(matmul_dtype) for w in (w1, w2, w3, w4))

    grid = (B_pad // bt,)
    full = lambda p: pl.BlockSpec(p.shape, lambda i: (0,) * p.ndim)
    in_specs = [pl.BlockSpec((bt, state_dim), lambda i: (i, 0)),
                full(w1c), full(w2c), full(w3c), full(w4c), full(w5t),
                full(vecs), full(b5t)]
    out_spec = pl.BlockSpec((a_pad, bt), lambda i: (0, i))

    out_t = pl.pallas_call(
        functools.partial(dql_mlp_kernel, matmul_dtype=matmul_dtype),
        out_shape=jax.ShapeDtypeStruct((a_pad, B_pad), jnp.float32),
        grid_spec=pltpu.PrefetchScalarGridSpec(
            num_scalar_prefetch=0,
            grid=grid,
            in_specs=in_specs,
            out_specs=out_spec,
        ),
        compiler_params=pltpu.CompilerParams(
            dimension_semantics=("parallel",),
        ),
    )(x, w1c, w2c, w3c, w4c, w5t, vecs, b5t)

    return out_t[:action_dim, :B].T                                  # (B, action_dim)


def init_params(key, state_dim, action_dim):
    """Deterministic synthetic params.  Linear weights stored as (in, out)."""
    dims = [state_dim, 384, 256, 256, 128, action_dim]
    params = []
    keys = jax.random.split(key, 5)
    for li in range(5):
        fan_in, fan_out = dims[li], dims[li + 1]
        kw, kb = jax.random.split(keys[li])
        bound = 1.0 / jnp.sqrt(fan_in)
        w = jax.random.uniform(kw, (fan_in, fan_out), jnp.float32, -bound, bound)
        b = jax.random.uniform(kb, (1, fan_out), jnp.float32, -bound, bound)
        params.append(w)
        params.append(b)
        if li < 4:  # LayerNorm after the first 4 linears
            params.append(jnp.ones((1, fan_out), jnp.float32))   # gamma
            params.append(jnp.zeros((1, fan_out), jnp.float32))  # beta
    return tuple(params)


def reference_forward(x, params, *, matmul_dtype=jnp.bfloat16):
    """Pure-JAX reference with the same precision choices as the kernel."""
    (w1, b1, g1, be1,
     w2, b2, g2, be2,
     w3, b3, g3, be3,
     w4, b4, g4, be4,
     w5, b5) = params

    def block(h, w, b, g, be):
        z = jnp.dot(h.astype(matmul_dtype), w.astype(matmul_dtype),
                    preferred_element_type=jnp.float32) + b
        return _leaky_relu(_layernorm_f32(z, g, be))

    h = block(x, w1, b1, g1, be1)
    h = block(h, w2, b2, g2, be2)
    h = block(h, w3, b3, g3, be3)
    h = block(h, w4, b4, g4, be4)
    return jnp.dot(h.astype(matmul_dtype), w5.astype(matmul_dtype),
                   preferred_element_type=jnp.float32) + b5


if __name__ == "__main__":
    state_dim = 8
    action_dim = 4
    batch = 256          # replay-buffer-sized batch

    key = jax.random.PRNGKey(0)
    kx, kp = jax.random.split(key)
    x = jax.random.normal(kx, (batch, state_dim), dtype=jnp.float32)
    params = init_params(kp, state_dim, action_dim)

    out = dql_forward(x, params)           # batch_tile auto: 1 step (v5e/v6e), 2 (v7x)
    out = jax.block_until_ready(out)

    ref = reference_forward(x, params)
    assert out.shape == (batch, action_dim)
    assert jnp.allclose(out, ref, atol=2e-3, rtol=2e-3), "mismatch vs reference"

    print("KERNEL_OK")
</pallas_src>

<mosaic_0001>
module attributes {stable_mosaic.version = 11 : i64} {
  func.func @dql_mlp_kernel(%arg0: i32, %arg1: memref<256x8xf32, #tpu.memory_space<vmem>>, %arg2: memref<8x384xbf16, #tpu.memory_space<vmem>>, %arg3: memref<384x256xbf16, #tpu.memory_space<vmem>>, %arg4: memref<256x256xbf16, #tpu.memory_space<vmem>>, %arg5: memref<256x128xbf16, #tpu.memory_space<vmem>>, %arg6: memref<8x128xbf16, #tpu.memory_space<vmem>>, %arg7: memref<12x384xf32, #tpu.memory_space<vmem>>, %arg8: memref<8x1xf32, #tpu.memory_space<vmem>>, %arg9: memref<8x256xf32, #tpu.memory_space<vmem>>) attributes {dimension_semantics = [#tpu.dimension_semantics<parallel>], iteration_bounds = array<i64: 1>, scalar_prefetch = 0 : i64, scratch_operands = 0 : i64, tpu.core_type = #tpu.core_type<tc>, window_params = [{transform_indices = @transform_0, window_bounds = array<i64: 256, 8>}, {pipeline_mode = #tpu.pipeline_mode<synchronous>, transform_indices = @transform_1, window_bounds = array<i64: 8, 384>}, {pipeline_mode = #tpu.pipeline_mode<synchronous>, transform_indices = @transform_2, window_bounds = array<i64: 384, 256>}, {pipeline_mode = #tpu.pipeline_mode<synchronous>, transform_indices = @transform_3, window_bounds = array<i64: 256, 256>}, {pipeline_mode = #tpu.pipeline_mode<synchronous>, transform_indices = @transform_4, window_bounds = array<i64: 256, 128>}, {pipeline_mode = #tpu.pipeline_mode<synchronous>, transform_indices = @transform_5, window_bounds = array<i64: 8, 128>}, {pipeline_mode = #tpu.pipeline_mode<synchronous>, transform_indices = @transform_6, window_bounds = array<i64: 12, 384>}, {pipeline_mode = #tpu.pipeline_mode<synchronous>, transform_indices = @transform_7, window_bounds = array<i64: 8, 1>}, {transform_indices = @transform_8, window_bounds = array<i64: 8, 256>}]} {
    %c0 = arith.constant 0 : index
    %c0_0 = arith.constant 0 : index
    %0 = vector.load %arg1[%c0, %c0_0] : memref<256x8xf32, #tpu.memory_space<vmem>>, vector<256x8xf32>
    %c0_1 = arith.constant 0 : index
    %c0_2 = arith.constant 0 : index
    %1 = vector.load %arg7[%c0_1, %c0_2] : memref<12x384xf32, #tpu.memory_space<vmem>>, vector<1x384xf32>
    %c1 = arith.constant 1 : index
    %c0_3 = arith.constant 0 : index
    %2 = vector.load %arg7[%c1, %c0_3] : memref<12x384xf32, #tpu.memory_space<vmem>>, vector<1x384xf32>
    %c2 = arith.constant 2 : index
    %c0_4 = arith.constant 0 : index
    %3 = vector.load %arg7[%c2, %c0_4] : memref<12x384xf32, #tpu.memory_space<vmem>>, vector<1x384xf32>
    %4 = arith.truncf %0 : vector<256x8xf32> to vector<256x8xbf16>
    %c0_5 = arith.constant 0 : index
    %c0_6 = arith.constant 0 : index
    %5 = vector.load %arg2[%c0_5, %c0_6] : memref<8x384xbf16, #tpu.memory_space<vmem>>, vector<8x384xbf16>
    %cst = arith.constant dense<0.000000e+00> : vector<256x384xf32>
    %6 = tpu.matmul %4, %5, %cst {dimension_numbers = #tpu.dot_dimension_numbers<[1], [0], [0], [1], [0, 0, 1, 1], [], []>} : vector<256x8xbf16>, vector<8x384xbf16>, vector<256x384xf32> -> vector<256x384xf32>
    %7 = vector.broadcast %1 : vector<1x384xf32> to vector<256x384xf32>
    %8 = arith.addf %6, %7 : vector<256x384xf32>
    %cst_7 = arith.constant dense<0.000000e+00> : vector<256xf32>
    %9 = vector.multi_reduction <add>, %8, %cst_7 [1] : vector<256x384xf32> to vector<256xf32>
    %10 = vector.shape_cast %9 : vector<256xf32> to vector<256x1xf32>
    %cst_8 = arith.constant 3.840000e+02 : f32
    %11 = vector.broadcast %cst_8 : f32 to vector<256x1xf32>
    %12 = arith.divf %10, %11 : vector<256x1xf32>
    %13 = vector.broadcast %12 : vector<256x1xf32> to vector<256x384xf32>
    %14 = arith.subf %8, %13 : vector<256x384xf32>
    %15 = arith.mulf %14, %14 : vector<256x384xf32>
    %cst_9 = arith.constant dense<0.000000e+00> : vector<256xf32>
    %16 = vector.multi_reduction <add>, %15, %cst_9 [1] : vector<256x384xf32> to vector<256xf32>
    %17 = vector.shape_cast %16 : vector<256xf32> to vector<256x1xf32>
    %cst_10 = arith.constant 3.840000e+02 : f32
    %18 = vector.broadcast %cst_10 : f32 to vector<256x1xf32>
    %19 = arith.divf %17, %18 : vector<256x1xf32>
    %cst_11 = arith.constant 9.99999974E-6 : f32
    %20 = vector.broadcast %cst_11 : f32 to vector<256x1xf32>
    %21 = arith.addf %19, %20 : vector<256x1xf32>
    %22 = math.rsqrt %21 : vector<256x1xf32>
    %23 = vector.broadcast %22 : vector<256x1xf32> to vector<256x384xf32>
    %24 = arith.mulf %14, %23 : vector<256x384xf32>
    %25 = vector.broadcast %2 : vector<1x384xf32> to vector<256x384xf32>
    %26 = arith.mulf %24, %25 : vector<256x384xf32>
    %27 = vector.broadcast %3 : vector<1x384xf32> to vector<256x384xf32>
    %28 = arith.addf %26, %27 : vector<256x384xf32>
    %cst_12 = arith.constant 1.000000e-01 : f32
    %29 = vector.broadcast %cst_12 : f32 to vector<256x384xf32>
    %30 = arith.mulf %29, %28 : vector<256x384xf32>
    %31 = arith.maximumf %28, %30 : vector<256x384xf32>
    %c3 = arith.constant 3 : index
    %c0_13 = arith.constant 0 : index
    %32 = vector.load %arg7[%c3, %c0_13] : memref<12x384xf32, #tpu.memory_space<vmem>>, vector<1x256xf32>
    %c4 = arith.constant 4 : index
    %c0_14 = arith.constant 0 : index
    %33 = vector.load %arg7[%c4, %c0_14] : memref<12x384xf32, #tpu.memory_space<vmem>>, vector<1x256xf32>
    %c5 = arith.constant 5 : index
    %c0_15 = arith.constant 0 : index
    %34 = vector.load %arg7[%c5, %c0_15] : memref<12x384xf32, #tpu.memory_space<vmem>>, vector<1x256xf32>
    %35 = arith.truncf %31 : vector<256x384xf32> to vector<256x384xbf16>
    %c0_16 = arith.constant 0 : index
    %c0_17 = arith.constant 0 : index
    %36 = vector.load %arg3[%c0_16, %c0_17] : memref<384x256xbf16, #tpu.memory_space<vmem>>, vector<384x256xbf16>
    %cst_18 = arith.constant dense<0.000000e+00> : vector<256x256xf32>
    %37 = tpu.matmul %35, %36, %cst_18 {dimension_numbers = #tpu.dot_dimension_numbers<[1], [0], [0], [1], [0, 0, 1, 1], [], []>} : vector<256x384xbf16>, vector<384x256xbf16>, vector<256x256xf32> -> vector<256x256xf32>
    %38 = vector.broadcast %32 : vector<1x256xf32> to vector<256x256xf32>
    %39 = arith.addf %37, %38 : vector<256x256xf32>
    %cst_19 = arith.constant dense<0.000000e+00> : vector<256xf32>
    %40 = vector.multi_reduction <add>, %39, %cst_19 [1] : vector<256x256xf32> to vector<256xf32>
    %41 = vector.shape_cast %40 : vector<256xf32> to vector<256x1xf32>
    %cst_20 = arith.constant 2.560000e+02 : f32
    %42 = vector.broadcast %cst_20 : f32 to vector<256x1xf32>
    %43 = arith.divf %41, %42 : vector<256x1xf32>
    %44 = vector.broadcast %43 : vector<256x1xf32> to vector<256x256xf32>
    %45 = arith.subf %39, %44 : vector<256x256xf32>
    %46 = arith.mulf %45, %45 : vector<256x256xf32>
    %cst_21 = arith.constant dense<0.000000e+00> : vector<256xf32>
    %47 = vector.multi_reduction <add>, %46, %cst_21 [1] : vector<256x256xf32> to vector<256xf32>
    %48 = vector.shape_cast %47 : vector<256xf32> to vector<256x1xf32>
    %cst_22 = arith.constant 2.560000e+02 : f32
    %49 = vector.broadcast %cst_22 : f32 to vector<256x1xf32>
    %50 = arith.divf %48, %49 : vector<256x1xf32>
    %cst_23 = arith.constant 9.99999974E-6 : f32
    %51 = vector.broadcast %cst_23 : f32 to vector<256x1xf32>
    %52 = arith.addf %50, %51 : vector<256x1xf32>
    %53 = math.rsqrt %52 : vector<256x1xf32>
    %54 = vector.broadcast %53 : vector<256x1xf32> to vector<256x256xf32>
    %55 = arith.mulf %45, %54 : vector<256x256xf32>
    %56 = vector.broadcast %33 : vector<1x256xf32> to vector<256x256xf32>
    %57 = arith.mulf %55, %56 : vector<256x256xf32>
    %58 = vector.broadcast %34 : vector<1x256xf32> to vector<256x256xf32>
    %59 = arith.addf %57, %58 : vector<256x256xf32>
    %cst_24 = arith.constant 1.000000e-01 : f32
    %60 = vector.broadcast %cst_24 : f32 to vector<256x256xf32>
    %61 = arith.mulf %60, %59 : vector<256x256xf32>
    %62 = arith.maximumf %59, %61 : vector<256x256xf32>
    %c6 = arith.constant 6 : index
    %c0_25 = arith.constant 0 : index
    %63 = vector.load %arg7[%c6, %c0_25] : memref<12x384xf32, #tpu.memory_space<vmem>>, vector<1x256xf32>
    %c7 = arith.constant 7 : index
    %c0_26 = arith.constant 0 : index
    %64 = vector.load %arg7[%c7, %c0_26] : memref<12x384xf32, #tpu.memory_space<vmem>>, vector<1x256xf32>
    %c8 = arith.constant 8 : index
    %c0_27 = arith.constant 0 : index
    %65 = vector.load %arg7[%c8, %c0_27] : memref<12x384xf32, #tpu.memory_space<vmem>>, vector<1x256xf32>
    %66 = arith.truncf %62 : vector<256x256xf32> to vector<256x256xbf16>
    %c0_28 = arith.constant 0 : index
    %c0_29 = arith.constant 0 : index
    %67 = vector.load %arg4[%c0_28, %c0_29] : memref<256x256xbf16, #tpu.memory_space<vmem>>, vector<256x256xbf16>
    %cst_30 = arith.constant dense<0.000000e+00> : vector<256x256xf32>
    %68 = tpu.matmul %66, %67, %cst_30 {dimension_numbers = #tpu.dot_dimension_numbers<[1], [0], [0], [1], [0, 0, 1, 1], [], []>} : vector<256x256xbf16>, vector<256x256xbf16>, vector<256x256xf32> -> vector<256x256xf32>
    %69 = vector.broadcast %63 : vector<1x256xf32> to vector<256x256xf32>
    %70 = arith.addf %68, %69 : vector<256x256xf32>
    %cst_31 = arith.constant dense<0.000000e+00> : vector<256xf32>
    %71 = vector.multi_reduction <add>, %70, %cst_31 [1] : vector<256x256xf32> to vector<256xf32>
    %72 = vector.shape_cast %71 : vector<256xf32> to vector<256x1xf32>
    %cst_32 = arith.constant 2.560000e+02 : f32
    %73 = vector.broadcast %cst_32 : f32 to vector<256x1xf32>
    %74 = arith.divf %72, %73 : vector<256x1xf32>
    %75 = vector.broadcast %74 : vector<256x1xf32> to vector<256x256xf32>
    %76 = arith.subf %70, %75 : vector<256x256xf32>
    %77 = arith.mulf %76, %76 : vector<256x256xf32>
    %cst_33 = arith.constant dense<0.000000e+00> : vector<256xf32>
    %78 = vector.multi_reduction <add>, %77, %cst_33 [1] : vector<256x256xf32> to vector<256xf32>
    %79 = vector.shape_cast %78 : vector<256xf32> to vector<256x1xf32>
    %cst_34 = arith.constant 2.560000e+02 : f32
    %80 = vector.broadcast %cst_34 : f32 to vector<256x1xf32>
    %81 = arith.divf %79, %80 : vector<256x1xf32>
    %cst_35 = arith.constant 9.99999974E-6 : f32
    %82 = vector.broadcast %cst_35 : f32 to vector<256x1xf32>
    %83 = arith.addf %81, %82 : vector<256x1xf32>
    %84 = math.rsqrt %83 : vector<256x1xf32>
    %85 = vector.broadcast %84 : vector<256x1xf32> to vector<256x256xf32>
    %86 = arith.mulf %76, %85 : vector<256x256xf32>
    %87 = vector.broadcast %64 : vector<1x256xf32> to vector<256x256xf32>
    %88 = arith.mulf %86, %87 : vector<256x256xf32>
    %89 = vector.broadcast %65 : vector<1x256xf32> to vector<256x256xf32>
    %90 = arith.addf %88, %89 : vector<256x256xf32>
    %cst_36 = arith.constant 1.000000e-01 : f32
    %91 = vector.broadcast %cst_36 : f32 to vector<256x256xf32>
    %92 = arith.mulf %91, %90 : vector<256x256xf32>
    %93 = arith.maximumf %90, %92 : vector<256x256xf32>
    %c9 = arith.constant 9 : index
    %c0_37 = arith.constant 0 : index
    %94 = vector.load %arg7[%c9, %c0_37] : memref<12x384xf32, #tpu.memory_space<vmem>>, vector<1x128xf32>
    %c10 = arith.constant 10 : index
    %c0_38 = arith.constant 0 : index
    %95 = vector.load %arg7[%c10, %c0_38] : memref<12x384xf32, #tpu.memory_space<vmem>>, vector<1x128xf32>
    %c11 = arith.constant 11 : index
    %c0_39 = arith.constant 0 : index
    %96 = vector.load %arg7[%c11, %c0_39] : memref<12x384xf32, #tpu.memory_space<vmem>>, vector<1x128xf32>
    %97 = arith.truncf %93 : vector<256x256xf32> to vector<256x256xbf16>
    %c0_40 = arith.constant 0 : index
    %c0_41 = arith.constant 0 : index
    %98 = vector.load %arg5[%c0_40, %c0_41] : memref<256x128xbf16, #tpu.memory_space<vmem>>, vector<256x128xbf16>
    %cst_42 = arith.constant dense<0.000000e+00> : vector<256x128xf32>
    %99 = tpu.matmul %97, %98, %cst_42 {dimension_numbers = #tpu.dot_dimension_numbers<[1], [0], [0], [1], [0, 0, 1, 1], [], []>} : vector<256x256xbf16>, vector<256x128xbf16>, vector<256x128xf32> -> vector<256x128xf32>
    %100 = vector.broadcast %94 : vector<1x128xf32> to vector<256x128xf32>
    %101 = arith.addf %99, %100 : vector<256x128xf32>
    %cst_43 = arith.constant dense<0.000000e+00> : vector<256xf32>
    %102 = vector.multi_reduction <add>, %101, %cst_43 [1] : vector<256x128xf32> to vector<256xf32>
    %103 = vector.shape_cast %102 : vector<256xf32> to vector<256x1xf32>
    %cst_44 = arith.constant 1.280000e+02 : f32
    %104 = vector.broadcast %cst_44 : f32 to vector<256x1xf32>
    %105 = arith.divf %103, %104 : vector<256x1xf32>
    %106 = vector.broadcast %105 : vector<256x1xf32> to vector<256x128xf32>
    %107 = arith.subf %101, %106 : vector<256x128xf32>
    %108 = arith.mulf %107, %107 : vector<256x128xf32>
    %cst_45 = arith.constant dense<0.000000e+00> : vector<256xf32>
    %109 = vector.multi_reduction <add>, %108, %cst_45 [1] : vector<256x128xf32> to vector<256xf32>
    %110 = vector.shape_cast %109 : vector<256xf32> to vector<256x1xf32>
    %cst_46 = arith.constant 1.280000e+02 : f32
    %111 = vector.broadcast %cst_46 : f32 to vector<256x1xf32>
    %112 = arith.divf %110, %111 : vector<256x1xf32>
    %cst_47 = arith.constant 9.99999974E-6 : f32
    %113 = vector.broadcast %cst_47 : f32 to vector<256x1xf32>
    %114 = arith.addf %112, %113 : vector<256x1xf32>
    %115 = math.rsqrt %114 : vector<256x1xf32>
    %116 = vector.broadcast %115 : vector<256x1xf32> to vector<256x128xf32>
    %117 = arith.mulf %107, %116 : vector<256x128xf32>
    %118 = vector.broadcast %95 : vector<1x128xf32> to vector<256x128xf32>
    %119 = arith.mulf %117, %118 : vector<256x128xf32>
    %120 = vector.broadcast %96 : vector<1x128xf32> to vector<256x128xf32>
    %121 = arith.addf %119, %120 : vector<256x128xf32>
    %cst_48 = arith.constant 1.000000e-01 : f32
    %122 = vector.broadcast %cst_48 : f32 to vector<256x128xf32>
    %123 = arith.mulf %122, %121 : vector<256x128xf32>
    %124 = arith.maximumf %121, %123 : vector<256x128xf32>
    %c0_49 = arith.constant 0 : index
    %c0_50 = arith.constant 0 : index
    %125 = vector.load %arg6[%c0_49, %c0_50] : memref<8x128xbf16, #tpu.memory_space<vmem>>, vector<8x128xbf16>
    %126 = arith.truncf %124 : vector<256x128xf32> to vector<256x128xbf16>
    %cst_51 = arith.constant dense<0.000000e+00> : vector<8x256xf32>
    %127 = tpu.matmul %125, %126, %cst_51 {dimension_numbers = #tpu.dot_dimension_numbers<[1], [1], [0], [0], [0, 0, 1, 0], [], []>} : vector<8x128xbf16>, vector<256x128xbf16>, vector<8x256xf32> -> vector<8x256xf32>
    %c0_52 = arith.constant 0 : index
    %c0_53 = arith.constant 0 : index
    %128 = vector.load %arg8[%c0_52, %c0_53] : memref<8x1xf32, #tpu.memory_space<vmem>>, vector<8x1xf32>
    %129 = vector.broadcast %128 : vector<8x1xf32> to vector<8x256xf32>
    %130 = arith.addf %127, %129 : vector<8x256xf32>
    %c0_54 = arith.constant 0 : index
    %c0_55 = arith.constant 0 : index
    %131 = vector.load %arg9[%c0_54, %c0_55] : memref<8x256xf32, #tpu.memory_space<vmem>>, vector<8x256xf32>
    tpu.vector_store %arg9[%c0_54, %c0_55], %130 {strides = array<i32>} : memref<8x256xf32, #tpu.memory_space<vmem>>, vector<8x256xf32>,
    return
  }
  func.func @transform_0(%arg0: i32) -> (i32, i32) {
    %c0_i32 = arith.constant 0 : i32
    %c0_i32_0 = arith.constant 0 : i32
    return %arg0, %c0_i32 : i32, i32
  }
  func.func @transform_1(%arg0: i32) -> (i32, i32) {
    %c0_i32 = arith.constant 0 : i32
    %c0_i32_0 = arith.constant 0 : i32
    %c0_i32_1 = arith.constant 0 : i32
    return %c0_i32, %c0_i32_0 : i32, i32
  }
  func.func @transform_2(%arg0: i32) -> (i32, i32) {
    %c0_i32 = arith.constant 0 : i32
    %c0_i32_0 = arith.constant 0 : i32
    %c0_i32_1 = arith.constant 0 : i32
    return %c0_i32, %c0_i32_0 : i32, i32
  }
  func.func @transform_3(%arg0: i32) -> (i32, i32) {
    %c0_i32 = arith.constant 0 : i32
    %c0_i32_0 = arith.constant 0 : i32
    %c0_i32_1 = arith.constant 0 : i32
    return %c0_i32, %c0_i32_0 : i32, i32
  }
  func.func @transform_4(%arg0: i32) -> (i32, i32) {
    %c0_i32 = arith.constant 0 : i32
    %c0_i32_0 = arith.constant 0 : i32
    %c0_i32_1 = arith.constant 0 : i32
    return %c0_i32, %c0_i32_0 : i32, i32
  }
  func.func @transform_5(%arg0: i32) -> (i32, i32) {
    %c0_i32 = arith.constant 0 : i32
    %c0_i32_0 = arith.constant 0 : i32
    %c0_i32_1 = arith.constant 0 : i32
    return %c0_i32, %c0_i32_0 : i32, i32
  }
  func.func @transform_6(%arg0: i32) -> (i32, i32) {
    %c0_i32 = arith.constant 0 : i32
    %c0_i32_0 = arith.constant 0 : i32
    %c0_i32_1 = arith.constant 0 : i32
    return %c0_i32, %c0_i32_0 : i32, i32
  }
  func.func @transform_7(%arg0: i32) -> (i32, i32) {
    %c0_i32 = arith.constant 0 : i32
    %c0_i32_0 = arith.constant 0 : i32
    %c0_i32_1 = arith.constant 0 : i32
    return %c0_i32, %c0_i32_0 : i32, i32
  }
  func.func @transform_8(%arg0: i32) -> (i32, i32) {
    %c0_i32 = arith.constant 0 : i32
    %c0_i32_0 = arith.constant 0 : i32
    return %c0_i32, %arg0 : i32, i32
  }
}

</mosaic_0001>

<llo_original>
// kernel: tpu_custom_call.1
$region0: #{tpu_custom_call.1}
  #allocation0 [shape = 'u32[]', space=smem, size = 0x4, offset = 0x4, fixed_abs, tag = 'smem constant byte address 0x4 - core index']
  #allocation1 [shape = 'u32[144,128]{1,0:T(1,128)}', space=vmem, size = 0x12000, scoped, tag = 'internal scratch']
  %s0 = inlined_call_operand.vmem [shape: f32[256,8], index: 0, kind: input, shape index: {}]
  %s1 = inlined_call_operand.vmem [shape: bf16[8,384], index: 1, kind: input, shape index: {}]
  %s2 = inlined_call_operand.hbm [shape: bf16[384,256], index: 2, kind: input, shape index: {}]
  %s3 = inlined_call_operand.vmem [shape: bf16[256,256], index: 3, kind: input, shape index: {}]
  %s4 = inlined_call_operand.hbm [shape: bf16[256,128], index: 4, kind: input, shape index: {}]
  %s5 = inlined_call_operand.vmem [shape: bf16[8,128], index: 5, kind: input, shape index: {}]
  %s6 = inlined_call_operand.hbm [shape: f32[12,384], index: 6, kind: input, shape index: {}]
  %s7 = inlined_call_operand.vmem [shape: f32[8,1], index: 7, kind: input, shape index: {}]
  %s8 = inlined_call_operand.hbm [shape: f32[8,256], index: 8, kind: output, shape index: {}]
  %s9 = sld [smem:[#allocation0]]
  $region54: #{tpu_custom_call.1} parent=0
    _
  %s11 = ssub.s32 1, %s9
  %s12 = scalar_select 0, %s11, %s9
  $region1: #{tpu_custom_call.1} parent=0
    #allocation2 [shape = 'u8[196608]{0}', space=vmem, size = 0x30000, scoped, tag = 'input window, operand 2, single buffered']
    #allocation3 [shape = 's32[1]{0}', space=sflag, size = 0x4, scoped, tag = 'scoped memory for tpu_custom_call.1']
    #allocation4 [shape = 's32[1]{0}', space=sflag, size = 0x4, scoped, tag = 'scoped memory for tpu_custom_call.1']
    #allocation5 [shape = 'u8[65536]{0}', space=vmem, size = 0x10000, scoped, tag = 'input window, operand 4, single buffered']
    #allocation6 [shape = 's32[1]{0}', space=sflag, size = 0x4, scoped, tag = 'scoped memory for tpu_custom_call.1']
    #allocation7 [shape = 'u8[24576]{0}', space=vmem, size = 0x6000, scoped, tag = 'input window, operand 6, single buffered']
    #allocation8 [shape = 'u8[8192]{0}', space=vmem, size = 0x2000, scoped, tag = 'output window, operand 0, single buffered']
    %13 = vsyncpa [#allocation3], 0
    %14 = vsyncpa [#allocation6], 0
    %15 = vsyncpa [#allocation4], 0
    // Predicated region
    $region2: #{tpu_custom_call.1} parent=1 // pred_check
      _
    $region3: #{tpu_custom_call.1} parent=1 // pred_check_branch
      %17 = sbr.rel (0) target = $region5
    $region4: #{tpu_custom_call.1} parent=1 // pred_region
      _
    $region5: #{tpu_custom_call.1} parent=1 // pred_fallthru
      _
    // Predicated region
    $region6: #{tpu_custom_call.1} parent=1 // pred_check
      _
    $region7: #{tpu_custom_call.1} parent=1 // pred_check_branch
      %19 = sbr.rel (0) target = $region9
    $region8: #{tpu_custom_call.1} parent=1 // pred_region
      _
    $region9: #{tpu_custom_call.1} parent=1 // pred_fallthru
      _
    // Predicated region
    $region10: #{tpu_custom_call.1} parent=1 // pred_check
      _
    $region11: #{tpu_custom_call.1} parent=1 // pred_check_branch
      %21 = sbr.rel (0) target = $region13
    $region12: #{tpu_custom_call.1} parent=1 // pred_region
      %s23 = ssub.s32 6144, 6144
      %24 = vsyncadd [#allocation3], %s23
      %s25 = sshll.u32 [#allocation2], 4
      %s26 = int_to_ptr.vmem [resolvable:$true] %s25
      %31 = dma.hbm_to_vmem [thread:$0]  %s2, 6144, %s26, [#allocation3], 128, 128, 8
    $region13: #{tpu_custom_call.1} parent=1 // pred_fallthru
      _
    // Predicated region
    $region14: #{tpu_custom_call.1} parent=1 // pred_check
      _
    $region15: #{tpu_custom_call.1} parent=1 // pred_check_branch
      %33 = sbr.rel (0) target = $region17
    $region16: #{tpu_custom_call.1} parent=1 // pred_region
      _
    $region17: #{tpu_custom_call.1} parent=1 // pred_fallthru
      _
    // Predicated region
    $region18: #{tpu_custom_call.1} parent=1 // pred_check
      _
    $region19: #{tpu_custom_call.1} parent=1 // pred_check_branch
      %35 = sbr.rel (0) target = $region21
    $region20: #{tpu_custom_call.1} parent=1 // pred_region
      %s37 = ssub.s32 2048, 2048
      %38 = vsyncadd [#allocation6], %s37
      %s39 = sshll.u32 [#allocation5], 4
      %s40 = int_to_ptr.vmem [resolvable:$true] %s39
      %45 = dma.hbm_to_vmem [thread:$0]  %s4, 2048, %s40, [#allocation6], 64, 64, 4
    $region21: #{tpu_custom_call.1} parent=1 // pred_fallthru
      _
    // Predicated region
    $region22: #{tpu_custom_call.1} parent=1 // pred_check
      _
    $region23: #{tpu_custom_call.1} parent=1 // pred_check_branch
      %47 = sbr.rel (0) target = $region25
    $region24: #{tpu_custom_call.1} parent=1 // pred_region
      _
    $region25: #{tpu_custom_call.1} parent=1 // pred_fallthru
      _
    // Predicated region
    $region26: #{tpu_custom_call.1} parent=1 // pred_check
      _
    $region27: #{tpu_custom_call.1} parent=1 // pred_check_branch
      %49 = sbr.rel (0) target = $region29
    $region28: #{tpu_custom_call.1} parent=1 // pred_region
      %s51 = ssub.s32 768, 768
      %52 = vsyncadd [#allocation6], %s51
      %s53 = sshll.u32 [#allocation7], 4
      %s54 = int_to_ptr.vmem [resolvable:$true] %s53
      %59 = dma.hbm_to_vmem [thread:$0]  %s6, 768, %s54, [#allocation6], 384, 384, 24
    $region29: #{tpu_custom_call.1} parent=1 // pred_fallthru
      _
    // Predicated region
    $region30: #{tpu_custom_call.1} parent=1 // pred_check
      _
    $region31: #{tpu_custom_call.1} parent=1 // pred_check_branch
      %61 = sbr.rel (0) target = $region33
    $region32: #{tpu_custom_call.1} parent=1 // pred_region
      _
    $region33: #{tpu_custom_call.1} parent=1 // pred_fallthru
      _
    // Predicated region
    $region34: #{tpu_custom_call.1} parent=1 // pred_check
      _
    $region35: #{tpu_custom_call.1} parent=1 // pred_check_branch
      %63 = sbr.rel (0) target = $region37
    $region36: #{tpu_custom_call.1} parent=1 // pred_region
      %64 = dma.done [#allocation3], 6144
    $region37: #{tpu_custom_call.1} parent=1 // pred_fallthru
      _
    // Predicated region
    $region38: #{tpu_custom_call.1} parent=1 // pred_check
      _
    $region39: #{tpu_custom_call.1} parent=1 // pred_check_branch
      %66 = sbr.rel (0) target = $region41
    $region40: #{tpu_custom_call.1} parent=1 // pred_region
      %67 = dma.done [#allocation6], 2048
    $region41: #{tpu_custom_call.1} parent=1 // pred_fallthru
      _
    // Predicated region
    $region42: #{tpu_custom_call.1} parent=1 // pred_check
      _
    $region43: #{tpu_custom_call.1} parent=1 // pred_check_branch
      %69 = sbr.rel (0) target = $region45
    $region44: #{tpu_custom_call.1} parent=1 // pred_region
      %70 = dma.done [#allocation6], 768
    $region45: #{tpu_custom_call.1} parent=1 // pred_fallthru
      _
    %v72 = vld [vmem:[%s0] sm:$0xff]
    %v73 = vld [vmem:[%s0 + $0x8] sm:$0xff]
    %v74 = vld [vmem:[%s0 + $0x10] sm:$0xff]
    %v75 = vld [vmem:[%s0 + $0x18] sm:$0xff]
    %v76 = vld [vmem:[%s0 + $0x20] sm:$0xff]
    %v77 = vld [vmem:[%s0 + $0x28] sm:$0xff]
    %v78 = vld [vmem:[%s0 + $0x30] sm:$0xff]
    %v79 = vld [vmem:[%s0 + $0x38] sm:$0xff]
    %v80 = vld [vmem:[%s0 + $0x40] sm:$0xff]
    %v81 = vld [vmem:[%s0 + $0x48] sm:$0xff]
    %v82 = vld [vmem:[%s0 + $0x50] sm:$0xff]
    %v83 = vld [vmem:[%s0 + $0x58] sm:$0xff]
    %v84 = vld [vmem:[%s0 + $0x60] sm:$0xff]
    %v85 = vld [vmem:[%s0 + $0x68] sm:$0xff]
    %v86 = vld [vmem:[%s0 + $0x70] sm:$0xff]
    %v87 = vld [vmem:[%s0 + $0x78] sm:$0xff]
    %v88 = vld [vmem:[%s0 + $0x80] sm:$0xff]
    %v89 = vld [vmem:[%s0 + $0x88] sm:$0xff]
    %v90 = vld [vmem:[%s0 + $0x90] sm:$0xff]
    %v91 = vld [vmem:[%s0 + $0x98] sm:$0xff]
    %v92 = vld [vmem:[%s0 + $0xa0] sm:$0xff]
    %v93 = vld [vmem:[%s0 + $0xa8] sm:$0xff]
    %v94 = vld [vmem:[%s0 + $0xb0] sm:$0xff]
    %v95 = vld [vmem:[%s0 + $0xb8] sm:$0xff]
    %v96 = vld [vmem:[%s0 + $0xc0] sm:$0xff]
    %v97 = vld [vmem:[%s0 + $0xc8] sm:$0xff]
    %v98 = vld [vmem:[%s0 + $0xd0] sm:$0xff]
    %v99 = vld [vmem:[%s0 + $0xd8] sm:$0xff]
    %v100 = vld [vmem:[%s0 + $0xe0] sm:$0xff]
    %v101 = vld [vmem:[%s0 + $0xe8] sm:$0xff]
    %v102 = vld [vmem:[%s0 + $0xf0] sm:$0xff]
    %v103 = vld [vmem:[%s0 + $0xf8] sm:$0xff]
    %v104 = vld [vmem:[#allocation7] ss:$8 sm:$0x7]
    %s105 = scalar_lea.vmem [#allocation7], 1
    %v106 = vld [vmem:[%s105] ss:$8 sm:$0x7]
    %s107 = scalar_lea.vmem [#allocation7], 2
    %v108 = vld [vmem:[%s107] ss:$8 sm:$0x7]
    %v109 = vpack.c.bf16 %v73, %v72
    %v110 = vpack.c.bf16 %v75, %v74
    %v111 = vpack.c.bf16 %v77, %v76
    %v112 = vpack.c.bf16 %v79, %v78
    %v113 = vpack.c.bf16 %v81, %v80
    %v114 = vpack.c.bf16 %v83, %v82
    %v115 = vpack.c.bf16 %v85, %v84
    %v116 = vpack.c.bf16 %v87, %v86
    %v117 = vpack.c.bf16 %v89, %v88
    %v118 = vpack.c.bf16 %v91, %v90
    %v119 = vpack.c.bf16 %v93, %v92
    %v120 = vpack.c.bf16 %v95, %v94
    %v121 = vpack.c.bf16 %v97, %v96
    %v122 = vpack.c.bf16 %v99, %v98
    %v123 = vpack.c.bf16 %v101, %v100
    %v124 = vpack.c.bf16 %v103, %v102
    %v125 = vld [vmem:[%s1] sm:$0xff]
    %v126 = vld [vmem:[%s1 + $0x8] sm:$0xf]
    %v128 = vlaneseq
    %v129 = vshrl.u32 %v128, 7
    %v130 = vsub.s32 0, %v129
    %v131 = vrot.slane %v104, %v130
    %v132 = vlaneseq
    %v133 = vshrl.u32 %v132, 7
    %v134 = vsub.s32 1, %v133
    %v135 = vrot.slane %v104, %v134
    %v136 = vlaneseq
    %v137 = vshrl.u32 %v136, 7
    %v138 = vsub.s32 2, %v137
    %v139 = vrot.slane %v104, %v138
    %v145 = vunpack.c.l.b16 %v125
    %v146 = vunpack.c.h.b16 %v125
    %v147 = vunpack.c.l.b16 %v126
    %v148 = vpack.c.b16 %v145, %v145
    %v149 = vpack.c.b16 %v146, %v146
    %v150 = vpack.c.b16 %v147, %v147
    %vm151 = vcmask 64512
    %v153 = vsel %vm151, %v109, 0
    %v156 = vsel %vm151, %v110, 0
    %v159 = vsel %vm151, %v111, 0
    %v162 = vsel %vm151, %v112, 0
    %v165 = vsel %vm151, %v113, 0
    %v168 = vsel %vm151, %v114, 0
    %v171 = vsel %vm151, %v115, 0
    %v174 = vsel %vm151, %v116, 0
    %v177 = vsel %vm151, %v117, 0
    %v180 = vsel %vm151, %v118, 0
    %v183 = vsel %vm151, %v119, 0
    %v186 = vsel %vm151, %v120, 0
    %v189 = vsel %vm151, %v121, 0
    %v192 = vsel %vm151, %v122, 0
    %v195 = vsel %vm151, %v123, 0
    %v198 = vsel %vm151, %v124, 0
    %vm200 = vcmask 1043456
    %v202 = vsel %vm200, %v148, 0
    %v205 = vsel %vm200, %v149, 0
    %v208 = vsel %vm200, %v150, 0
    %210 = vmatprep.subr.bf16.mxu0 %v205
    %211 = vmatpush1.bf16.msra.mxu0 %v202
    %212 = vmatprep.subr.bf16.mxu0 0
    %213 = vmatpush1.bf16.msra.mxu0 0
    %214 = vmatprep.subr.bf16.mxu0 0
    %215 = vmatpush1.bf16.msra.mxu0 0
    %216 = vmatprep.subr.bf16.mxu0 0
    %217 = vmatpush1.bf16.msra.mxu0 0
    %218 = vmatprep.subr.bf16.mxu0 0
    %219 = vmatpush1.bf16.msra.mxu0 0
    %220 = vmatprep.subr.bf16.mxu0 0
    %221 = vmatpush1.bf16.msra.mxu0 0
    %222 = vmatprep.subr.bf16.mxu0 0
    %223 = vmatpush1.bf16.msra.mxu0 0
    %224 = vmatprep.subr.bf16.mxu0 0
    %225 = vmatpush1.bf16.msra.mxu0 0
    %226 = vmatprep.subr.bf16.mxu0 0
    %227 = vmatpush1.bf16.msra.mxu0 0
    %228 = vmatprep.subr.bf16.mxu0 0
    %229 = vmatpush1.bf16.msra.mxu0 0
    %230 = vmatprep.subr.bf16.mxu0 0
    %231 = vmatpush1.bf16.msra.mxu0 0
    %232 = vmatprep.subr.bf16.mxu0 0
    %233 = vmatpush1.bf16.msra.mxu0 0
    %234 = vmatprep.subr.bf16.mxu0 0
    %235 = vmatpush1.bf16.msra.mxu0 0
    %236 = vmatprep.subr.bf16.mxu0 0
    %237 = vmatpush1.bf16.msra.mxu0 0
    %238 = vmatprep.subr.bf16.mxu0 0
    %239 = vmatpush1.bf16.msra.mxu0 0
    %240 = vmatprep.subr.bf16.mxu0 0
    %241 = vmatpush1.bf16.msra.mxu0 0
    %242 = vmatprep.mubr.bf16.mxu0 0
    %243 = vmatmul.mubr.bf16.gmra.mrb[0].mxu0 %v153
    %v244 = vpop.f32.mrb[0].mxu0
    %v245 = vadd.f32 %v131, %v244
    %v246 = vpop.f32.mrb[0].mxu0
    %v247 = vadd.f32 %v135, %v246
    %v248 = vpop.f32.mrb[0].mxu0
    %v249 = vadd.f32 %v131, %v248
    %v250 = vpop.f32.mrb[0].mxu0
    %v251 = vadd.f32 %v135, %v250
    %252 = vmatprep.mubr.bf16.mxu0 0
    %253 = vmatmul.mubr.bf16.gmra.mrb[0].mxu0 %v156
    %v254 = vpop.f32.mrb[0].mxu0
    %v255 = vadd.f32 %v131, %v254
    %v256 = vpop.f32.mrb[0].mxu0
    %v257 = vadd.f32 %v135, %v256
    %v258 = vpop.f32.mrb[0].mxu0
    %v259 = vadd.f32 %v131, %v258
    %v260 = vpop.f32.mrb[0].mxu0
    %v261 = vadd.f32 %v135, %v260
    %262 = vmatprep.mubr.bf16.mxu0 0
    %263 = vmatmul.mubr.bf16.gmra.mrb[0].mxu0 %v159
    %v264 = vpop.f32.mrb[0].mxu0
    %v265 = vadd.f32 %v131, %v264
    %v266 = vpop.f32.mrb[0].mxu0
    %v267 = vadd.f32 %v135, %v266
    %v268 = vpop.f32.mrb[0].mxu0
    %v269 = vadd.f32 %v131, %v268
    %v270 = vpop.f32.mrb[0].mxu0
    %v271 = vadd.f32 %v135, %v270
    %272 = vmatprep.mubr.bf16.mxu0 0
    %273 = vmatmul.mubr.bf16.gmra.mrb[0].mxu0 %v162
    %v274 = vpop.f32.mrb[0].mxu0
    %v275 = vadd.f32 %v131, %v274
    %v276 = vpop.f32.mrb[0].mxu0
    %v277 = vadd.f32 %v135, %v276
    %v278 = vpop.f32.mrb[0].mxu0
    %v279 = vadd.f32 %v131, %v278
    %v280 = vpop.f32.mrb[0].mxu0
    %v281 = vadd.f32 %v135, %v280
    %282 = vmatprep.mubr.bf16.mxu0 0
    %283 = vmatmul.mubr.bf16.gmra.mrb[0].mxu0 %v165
    %v284 = vpop.f32.mrb[0].mxu0
    %v285 = vadd.f32 %v131, %v284
    %v286 = vpop.f32.mrb[0].mxu0
    %v287 = vadd.f32 %v135, %v286
    %v288 = vpop.f32.mrb[0].mxu0
    %v289 = vadd.f32 %v131, %v288
    %v290 = vpop.f32.mrb[0].mxu0
    %v291 = vadd.f32 %v135, %v290
    %292 = vmatprep.mubr.bf16.mxu0 0
    %293 = vmatmul.mubr.bf16.gmra.mrb[0].mxu0 %v168
    %v294 = vpop.f32.mrb[0].mxu0
    %v295 = vadd.f32 %v131, %v294
    %v296 = vpop.f32.mrb[0].mxu0
    %v297 = vadd.f32 %v135, %v296
    %v298 = vpop.f32.mrb[0].mxu0
    %v299 = vadd.f32 %v131, %v298
    %v300 = vpop.f32.mrb[0].mxu0
    %v301 = vadd.f32 %v135, %v300
    %302 = vmatprep.mubr.bf16.mxu0 0
    %303 = vmatmul.mubr.bf16.gmra.mrb[0].mxu0 %v171
    %v304 = vpop.f32.mrb[0].mxu0
    %v305 = vadd.f32 %v131, %v304
    %v306 = vpop.f32.mrb[0].mxu0
    %v307 = vadd.f32 %v135, %v306
    %v308 = vpop.f32.mrb[0].mxu0
    %v309 = vadd.f32 %v131, %v308
    %v310 = vpop.f32.mrb[0].mxu0
    %v311 = vadd.f32 %v135, %v310
    %312 = vmatprep.mubr.bf16.mxu0 0
    %313 = vmatmul.mubr.bf16.gmra.mrb[0].mxu0 %v174
    %v314 = vpop.f32.mrb[0].mxu0
    %v315 = vadd.f32 %v131, %v314
    %v316 = vpop.f32.mrb[0].mxu0
    %v317 = vadd.f32 %v135, %v316
    %v318 = vpop.f32.mrb[0].mxu0
    %v319 = vadd.f32 %v131, %v318
    %v320 = vpop.f32.mrb[0].mxu0
    %v321 = vadd.f32 %v135, %v320
    %322 = vmatprep.mubr.bf16.mxu0 0
    %323 = vmatmul.mubr.bf16.gmra.mrb[0].mxu0 %v177
    %v324 = vpop.f32.mrb[0].mxu0
    %v325 = vadd.f32 %v131, %v324
    %v326 = vpop.f32.mrb[0].mxu0
    %v327 = vadd.f32 %v135, %v326
    %v328 = vpop.f32.mrb[0].mxu0
    %v329 = vadd.f32 %v131, %v328
    %v330 = vpop.f32.mrb[0].mxu0
    %v331 = vadd.f32 %v135, %v330
    %332 = vmatprep.mubr.bf16.mxu0 0
    %333 = vmatmul.mubr.bf16.gmra.mrb[0].mxu0 %v180
    %v334 = vpop.f32.mrb[0].mxu0
    %v335 = vadd.f32 %v131, %v334
    %v336 = vpop.f32.mrb[0].mxu0
    %v337 = vadd.f32 %v135, %v336
    %v338 = vpop.f32.mrb[0].mxu0
    %v339 = vadd.f32 %v131, %v338
    %v340 = vpop.f32.mrb[0].mxu0
    %v341 = vadd.f32 %v135, %v340
    %342 = vmatprep.mubr.bf16.mxu0 0
    %343 = vmatmul.mubr.bf16.gmra.mrb[0].mxu0 %v183
    %v344 = vpop.f32.mrb[0].mxu0
    %v345 = vadd.f32 %v131, %v344
    %v346 = vpop.f32.mrb[0].mxu0
    %v347 = vadd.f32 %v135, %v346
    %v348 = vpop.f32.mrb[0].mxu0
    %v349 = vadd.f32 %v131, %v348
    %v350 = vpop.f32.mrb[0].mxu0
    %v351 = vadd.f32 %v135, %v350
    %352 = vmatprep.mubr.bf16.mxu0 0
    %353 = vmatmul.mubr.bf16.gmra.mrb[0].mxu0 %v186
    %v354 = vpop.f32.mrb[0].mxu0
    %v355 = vadd.f32 %v131, %v354
    %v356 = vpop.f32.mrb[0].mxu0
    %v357 = vadd.f32 %v135, %v356
    %v358 = vpop.f32.mrb[0].mxu0
    %v359 = vadd.f32 %v131, %v358
    %v360 = vpop.f32.mrb[0].mxu0
    %v361 = vadd.f32 %v135, %v360
    %362 = vmatprep.mubr.bf16.mxu0 0
    %363 = vmatmul.mubr.bf16.gmra.mrb[0].mxu0 %v189
    %v364 = vpop.f32.mrb[0].mxu0
    %v365 = vadd.f32 %v131, %v364
    %v366 = vpop.f32.mrb[0].mxu0
    %v367 = vadd.f32 %v135, %v366
    %v368 = vpop.f32.mrb[0].mxu0
    %v369 = vadd.f32 %v131, %v368
    %v370 = vpop.f32.mrb[0].mxu0
    %v371 = vadd.f32 %v135, %v370
    %372 = vmatprep.mubr.bf16.mxu0 0
    %373 = vmatmul.mubr.bf16.gmra.mrb[0].mxu0 %v192
    %v374 = vpop.f32.mrb[0].mxu0
    %v375 = vadd.f32 %v131, %v374
    %v376 = vpop.f32.mrb[0].mxu0
    %v377 = vadd.f32 %v135, %v376
    %v378 = vpop.f32.mrb[0].mxu0
    %v379 = vadd.f32 %v131, %v378
    %v380 = vpop.f32.mrb[0].mxu0
    %v381 = vadd.f32 %v135, %v380
    %382 = vmatprep.mubr.bf16.mxu0 0
    %383 = vmatmul.mubr.bf16.gmra.mrb[0].mxu0 %v195
    %v384 = vpop.f32.mrb[0].mxu0
    %v385 = vadd.f32 %v131, %v384
    %v386 = vpop.f32.mrb[0].mxu0
    %v387 = vadd.f32 %v135, %v386
    %v388 = vpop.f32.mrb[0].mxu0
    %v389 = vadd.f32 %v131, %v388
    %v390 = vpop.f32.mrb[0].mxu0
    %v391 = vadd.f32 %v135, %v390
    %392 = vmatprep.mubr.bf16.mxu0 0
    %393 = vmatmul.mubr.bf16.gmra.mrb[0].mxu0 %v198
    %v394 = vpop.f32.mrb[0].mxu0
    %v395 = vadd.f32 %v131, %v394
    %v396 = vpop.f32.mrb[0].mxu0
    %v397 = vadd.f32 %v135, %v396
    %v398 = vpop.f32.mrb[0].mxu0
    %v399 = vadd.f32 %v131, %v398
    %v400 = vpop.f32.mrb[0].mxu0
    %v401 = vadd.f32 %v135, %v400
    %402 = vdwg.mxu0
    %403 = vmatprep.subr.bf16.mxu0 0
    %404 = vmatpush1.bf16.msra.mxu0 %v208
    %405 = vmatprep.subr.bf16.mxu0 0
    %406 = vmatpush1.bf16.msra.mxu0 0
    %407 = vmatprep.subr.bf16.mxu0 0
    %408 = vmatpush1.bf16.msra.mxu0 0
    %409 = vmatprep.subr.bf16.mxu0 0
    %410 = vmatpush1.bf16.msra.mxu0 0
    %411 = vmatprep.subr.bf16.mxu0 0
    %412 = vmatpush1.bf16.msra.mxu0 0
    %413 = vmatprep.subr.bf16.mxu0 0
    %414 = vmatpush1.bf16.msra.mxu0 0
    %415 = vmatprep.subr.bf16.mxu0 0
    %416 = vmatpush1.bf16.msra.mxu0 0
    %417 = vmatprep.subr.bf16.mxu0 0
    %418 = vmatpush1.bf16.msra.mxu0 0
    %419 = vmatprep.subr.bf16.mxu0 0
    %420 = vmatpush1.bf16.msra.mxu0 0
    %421 = vmatprep.subr.bf16.mxu0 0
    %422 = vmatpush1.bf16.msra.mxu0 0
    %423 = vmatprep.subr.bf16.mxu0 0
    %424 = vmatpush1.bf16.msra.mxu0 0
    %425 = vmatprep.subr.bf16.mxu0 0
    %426 = vmatpush1.bf16.msra.mxu0 0
    %427 = vmatprep.subr.bf16.mxu0 0
    %428 = vmatpush1.bf16.msra.mxu0 0
    %429 = vmatprep.subr.bf16.mxu0 0
    %430 = vmatpush1.bf16.msra.mxu0 0
    %431 = vmatprep.subr.bf16.mxu0 0
    %432 = vmatpush1.bf16.msra.mxu0 0
    %433 = vmatprep.subr.bf16.mxu0 0
    %434 = vmatpush1.bf16.msra.mxu0 0
    %435 = vmatprep.mubr.bf16.mxu0 0
    %436 = vmatmul.mubr.bf16.gmra.mrb[0].mxu0 %v153
    %v437 = vpop.f32.mrb[0].mxu0
    %v438 = vadd.f32 %v139, %v437
    %v439 = vpop.f32.mrb[0].mxu0
    %v440 = vpop.f32.mrb[0].mxu0
    %v441 = vadd.f32 %v139, %v440
    %v442 = vpop.f32.mrb[0].mxu0
    %443 = vmatprep.mubr.bf16.mxu0 0
    %444 = vmatmul.mubr.bf16.gmra.mrb[0].mxu0 %v156
    %v445 = vpop.f32.mrb[0].mxu0
    %v446 = vadd.f32 %v139, %v445
    %v447 = vpop.f32.mrb[0].mxu0
    %v448 = vpop.f32.mrb[0].mxu0
    %v449 = vadd.f32 %v139, %v448
    %v450 = vpop.f32.mrb[0].mxu0
    %451 = vmatprep.mubr.bf16.mxu0 0
    %452 = vmatmul.mubr.bf16.gmra.mrb[0].mxu0 %v159
    %v453 = vpop.f32.mrb[0].mxu0
    %v454 = vadd.f32 %v139, %v453
    %v455 = vpop.f32.mrb[0].mxu0
    %v456 = vpop.f32.mrb[0].mxu0
    %v457 = vadd.f32 %v139, %v456
    %v458 = vpop.f32.mrb[0].mxu0
    %459 = vmatprep.mubr.bf16.mxu0 0
    %460 = vmatmul.mubr.bf16.gmra.mrb[0].mxu0 %v162
    %v461 = vpop.f32.mrb[0].mxu0
    %v462 = vadd.f32 %v139, %v461
    %v463 = vpop.f32.mrb[0].mxu0
    %v464 = vpop.f32.mrb[0].mxu0
    %v465 = vadd.f32 %v139, %v464
    %v466 = vpop.f32.mrb[0].mxu0
    %467 = vmatprep.mubr.bf16.mxu0 0
    %468 = vmatmul.mubr.bf16.gmra.mrb[0].mxu0 %v165
    %v469 = vpop.f32.mrb[0].mxu0
    %v470 = vadd.f32 %v139, %v469
    %v471 = vpop.f32.mrb[0].mxu0
    %v472 = vpop.f32.mrb[0].mxu0
    %v473 = vadd.f32 %v139, %v472
    %v474 = vpop.f32.mrb[0].mxu0
    %475 = vmatprep.mubr.bf16.mxu0 0
    %476 = vmatmul.mubr.bf16.gmra.mrb[0].mxu0 %v168
    %v477 = vpop.f32.mrb[0].mxu0
    %v478 = vadd.f32 %v139, %v477
    %v479 = vpop.f32.mrb[0].mxu0
    %v480 = vpop.f32.mrb[0].mxu0
    %v481 = vadd.f32 %v139, %v480
    %v482 = vpop.f32.mrb[0].mxu0
    %483 = vmatprep.mubr.bf16.mxu0 0
    %484 = vmatmul.mubr.bf16.gmra.mrb[0].mxu0 %v171
    %v485 = vpop.f32.mrb[0].mxu0
    %v486 = vadd.f32 %v139, %v485
    %v487 = vpop.f32.mrb[0].mxu0
    %v488 = vpop.f32.mrb[0].mxu0
    %v489 = vadd.f32 %v139, %v488
    %v490 = vpop.f32.mrb[0].mxu0
    %491 = vmatprep.mubr.bf16.mxu0 0
    %492 = vmatmul.mubr.bf16.gmra.mrb[0].mxu0 %v174
    %v493 = vpop.f32.mrb[0].mxu0
    %v494 = vadd.f32 %v139, %v493
    %v495 = vpop.f32.mrb[0].mxu0
    %v496 = vpop.f32.mrb[0].mxu0
    %v497 = vadd.f32 %v139, %v496
    %v498 = vpop.f32.mrb[0].mxu0
    %499 = vmatprep.mubr.bf16.mxu0 0
    %500 = vmatmul.mubr.bf16.gmra.mrb[0].mxu0 %v177
    %v501 = vpop.f32.mrb[0].mxu0
    %v502 = vadd.f32 %v139, %v501
    %v503 = vpop.f32.mrb[0].mxu0
    %v504 = vpop.f32.mrb[0].mxu0
    %v505 = vadd.f32 %v139, %v504
    %v506 = vpop.f32.mrb[0].mxu0
    %507 = vmatprep.mubr.bf16.mxu0 0
    %508 = vmatmul.mubr.bf16.gmra.mrb[0].mxu0 %v180
    %v509 = vpop.f32.mrb[0].mxu0
    %v510 = vadd.f32 %v139, %v509
    %v511 = vpop.f32.mrb[0].mxu0
    %v512 = vpop.f32.mrb[0].mxu0
    %v513 = vadd.f32 %v139, %v512
    %v514 = vpop.f32.mrb[0].mxu0
    %515 = vmatprep.mubr.bf16.mxu0 0
    %516 = vmatmul.mubr.bf16.gmra.mrb[0].mxu0 %v183
    %v517 = vpop.f32.mrb[0].mxu0
    %v518 = vadd.f32 %v139, %v517
    %v519 = vpop.f32.mrb[0].mxu0
    %v520 = vpop.f32.mrb[0].mxu0
    %v521 = vadd.f32 %v139, %v520
    %v522 = vpop.f32.mrb[0].mxu0
    %523 = vmatprep.mubr.bf16.mxu0 0
    %524 = vmatmul.mubr.bf16.gmra.mrb[0].mxu0 %v186
    %v525 = vpop.f32.mrb[0].mxu0
    %v526 = vadd.f32 %v139, %v525
    %v527 = vpop.f32.mrb[0].mxu0
    %v528 = vpop.f32.mrb[0].mxu0
    %v529 = vadd.f32 %v139, %v528
    %v530 = vpop.f32.mrb[0].mxu0
    %531 = vmatprep.mubr.bf16.mxu0 0
    %532 = vmatmul.mubr.bf16.gmra.mrb[0].mxu0 %v189
    %v533 = vpop.f32.mrb[0].mxu0
    %v534 = vadd.f32 %v139, %v533
    %v535 = vpop.f32.mrb[0].mxu0
    %v536 = vpop.f32.mrb[0].mxu0
    %v537 = vadd.f32 %v139, %v536
    %v538 = vpop.f32.mrb[0].mxu0
    %539 = vmatprep.mubr.bf16.mxu0 0
    %540 = vmatmul.mubr.bf16.gmra.mrb[0].mxu0 %v192
    %v541 = vpop.f32.mrb[0].mxu0
    %v542 = vadd.f32 %v139, %v541
    %v543 = vpop.f32.mrb[0].mxu0
    %v544 = vpop.f32.mrb[0].mxu0
    %v545 = vadd.f32 %v139, %v544
    %v546 = vpop.f32.mrb[0].mxu0
    %547 = vmatprep.mubr.bf16.mxu0 0
    %548 = vmatmul.mubr.bf16.gmra.mrb[0].mxu0 %v195
    %v549 = vpop.f32.mrb[0].mxu0
    %v550 = vadd.f32 %v139, %v549
    %v551 = vpop.f32.mrb[0].mxu0
    %v552 = vpop.f32.mrb[0].mxu0
    %v553 = vadd.f32 %v139, %v552
    %v554 = vpop.f32.mrb[0].mxu0
    %555 = vmatprep.mubr.bf16.mxu0 0
    %556 = vmatmul.mubr.bf16.gmra.mrb[0].mxu0 %v198
    %v557 = vpop.f32.mrb[0].mxu0
    %v558 = vadd.f32 %v139, %v557
    %v559 = vpop.f32.mrb[0].mxu0
    %v560 = vpop.f32.mrb[0].mxu0
    %v561 = vadd.f32 %v139, %v560
    %v562 = vpop.f32.mrb[0].mxu0
    %563 = vdwg.mxu0
    %v564 = vadd.f32 %v245, %v247
    %v565 = vadd.f32 %v564, %v438
    %566 = vadd.xlane.f32.xlu0 %v565
    %v567 = vpop.xlane.xlu0 %566
    %v568 = vadd.f32 %v249, %v251
    %v569 = vadd.f32 %v568, %v441
    %570 = vadd.xlane.f32.xlu0 %v569
    %v571 = vpop.xlane.xlu0 %570
    %v572 = vadd.f32 %v255, %v257
    %v573 = vadd.f32 %v572, %v446
    %574 = vadd.xlane.f32.xlu0 %v573
    %v575 = vpop.xlane.xlu0 %574
    %v576 = vadd.f32 %v259, %v261
    %v577 = vadd.f32 %v576, %v449
    %578 = vadd.xlane.f32.xlu0 %v577
    %v579 = vpop.xlane.xlu0 %578
    %v580 = vadd.f32 %v265, %v267
    %v581 = vadd.f32 %v580, %v454
    %582 = vadd.xlane.f32.xlu0 %v581
    %v583 = vpop.xlane.xlu0 %582
    %v584 = vadd.f32 %v269, %v271
    %v585 = vadd.f32 %v584, %v457
    %586 = vadd.xlane.f32.xlu0 %v585
    %v587 = vpop.xlane.xlu0 %586
    %v588 = vadd.f32 %v275, %v277
    %v589 = vadd.f32 %v588, %v462
    %590 = vadd.xlane.f32.xlu0 %v589
    %v591 = vpop.xlane.xlu0 %590
    %v592 = vadd.f32 %v279, %v281
    %v593 = vadd.f32 %v592, %v465
    %594 = vadd.xlane.f32.xlu0 %v593
    %v595 = vpop.xlane.xlu0 %594
    %v596 = vadd.f32 %v285, %v287
    %v597 = vadd.f32 %v596, %v470
    %598 = vadd.xlane.f32.xlu0 %v597
    %v599 = vpop.xlane.xlu0 %598
    %v600 = vadd.f32 %v289, %v291
    %v601 = vadd.f32 %v600, %v473
    %602 = vadd.xlane.f32.xlu0 %v601
    %v603 = vpop.xlane.xlu0 %602
    %v604 = vadd.f32 %v295, %v297
    %v605 = vadd.f32 %v604, %v478
    %606 = vadd.xlane.f32.xlu0 %v605
    %v607 = vpop.xlane.xlu0 %606
    %v608 = vadd.f32 %v299, %v301
    %v609 = vadd.f32 %v608, %v481
    %610 = vadd.xlane.f32.xlu0 %v609
    %v611 = vpop.xlane.xlu0 %610
    %v612 = vadd.f32 %v305, %v307
    %v613 = vadd.f32 %v612, %v486
    %614 = vadd.xlane.f32.xlu0 %v613
    %v615 = vpop.xlane.xlu0 %614
    %v616 = vadd.f32 %v309, %v311
    %v617 = vadd.f32 %v616, %v489
    %618 = vadd.xlane.f32.xlu0 %v617
    %v619 = vpop.xlane.xlu0 %618
    %v620 = vadd.f32 %v315, %v317
    %v621 = vadd.f32 %v620, %v494
    %622 = vadd.xlane.f32.xlu0 %v621
    %v623 = vpop.xlane.xlu0 %622
    %v624 = vadd.f32 %v319, %v321
    %v625 = vadd.f32 %v624, %v497
    %626 = vadd.xlane.f32.xlu0 %v625
    %v627 = vpop.xlane.xlu0 %626
    %v628 = vadd.f32 %v325, %v327
    %v629 = vadd.f32 %v628, %v502
    %630 = vadd.xlane.f32.xlu0 %v629
    %v631 = vpop.xlane.xlu0 %630
    %v632 = vadd.f32 %v329, %v331
    %v633 = vadd.f32 %v632, %v505
    %634 = vadd.xlane.f32.xlu0 %v633
    %v635 = vpop.xlane.xlu0 %634
    %v636 = vadd.f32 %v335, %v337
    %v637 = vadd.f32 %v636, %v510
    %638 = vadd.xlane.f32.xlu0 %v637
    %v639 = vpop.xlane.xlu0 %638
    %v640 = vadd.f32 %v339, %v341
    %v641 = vadd.f32 %v640, %v513
    %642 = vadd.xlane.f32.xlu0 %v641
    %v643 = vpop.xlane.xlu0 %642
    %v644 = vadd.f32 %v345, %v347
    %v645 = vadd.f32 %v644, %v518
    %646 = vadd.xlane.f32.xlu0 %v645
    %v647 = vpop.xlane.xlu0 %646
    %v648 = vadd.f32 %v349, %v351
    %v649 = vadd.f32 %v648, %v521
    %650 = vadd.xlane.f32.xlu0 %v649
    %v651 = vpop.xlane.xlu0 %650
    %v652 = vadd.f32 %v355, %v357
    %v653 = vadd.f32 %v652, %v526
    %654 = vadd.xlane.f32.xlu0 %v653
    %v655 = vpop.xlane.xlu0 %654
    %v656 = vadd.f32 %v359, %v361
    %v657 = vadd.f32 %v656, %v529
    %658 = vadd.xlane.f32.xlu0 %v657
    %v659 = vpop.xlane.xlu0 %658
    %v660 = vadd.f32 %v365, %v367
    %v661 = vadd.f32 %v660, %v534
    %662 = vadd.xlane.f32.xlu0 %v661
    %v663 = vpop.xlane.xlu0 %662
    %v664 = vadd.f32 %v369, %v371
    %v665 = vadd.f32 %v664, %v537
    %666 = vadd.xlane.f32.xlu0 %v665
    %v667 = vpop.xlane.xlu0 %666
    %v668 = vadd.f32 %v375, %v377
    %v669 = vadd.f32 %v668, %v542
    %670 = vadd.xlane.f32.xlu0 %v669
    %v671 = vpop.xlane.xlu0 %670
    %v672 = vadd.f32 %v379, %v381
    %v673 = vadd.f32 %v672, %v545
    %674 = vadd.xlane.f32.xlu0 %v673
    %v675 = vpop.xlane.xlu0 %674
    %v676 = vadd.f32 %v385, %v387
    %v677 = vadd.f32 %v676, %v550
    %678 = vadd.xlane.f32.xlu0 %v677
    %v679 = vpop.xlane.xlu0 %678
    %v680 = vadd.f32 %v389, %v391
    %v681 = vadd.f32 %v680, %v553
    %682 = vadd.xlane.f32.xlu0 %v681
    %v683 = vpop.xlane.xlu0 %682
    %v684 = vadd.f32 %v395, %v397
    %v685 = vadd.f32 %v684, %v558
    %686 = vadd.xlane.f32.xlu0 %v685
    %v687 = vpop.xlane.xlu0 %686
    %v688 = vadd.f32 %v399, %v401
    %v689 = vadd.f32 %v688, %v561
    %690 = vadd.xlane.f32.xlu0 %v689
    %v691 = vpop.xlane.xlu0 %690
    %v692 = vrcp.pop 384.0
    %v693 = vmul.f32 %v567, %v692
    %v694 = vmul.f32 %v571, %v692
    %v695 = vmul.f32 %v575, %v692
    %v696 = vmul.f32 %v579, %v692
    %v697 = vmul.f32 %v583, %v692
    %v698 = vmul.f32 %v587, %v692
    %v699 = vmul.f32 %v591, %v692
    %v700 = vmul.f32 %v595, %v692
    %v701 = vmul.f32 %v599, %v692
    %v702 = vmul.f32 %v603, %v692
    %v703 = vmul.f32 %v607, %v692
    %v704 = vmul.f32 %v611, %v692
    %v705 = vmul.f32 %v615, %v692
    %v706 = vmul.f32 %v619, %v692
    %v707 = vmul.f32 %v623, %v692
    %v708 = vmul.f32 %v627, %v692
    %v709 = vmul.f32 %v631, %v692
    %v710 = vmul.f32 %v635, %v692
    %v711 = vmul.f32 %v639, %v692
    %v712 = vmul.f32 %v643, %v692
    %v713 = vmul.f32 %v647, %v692
    %v714 = vmul.f32 %v651, %v692
    %v715 = vmul.f32 %v655, %v692
    %v716 = vmul.f32 %v659, %v692
    %v717 = vmul.f32 %v663, %v692
    %v718 = vmul.f32 %v667, %v692
    %v719 = vmul.f32 %v671, %v692
    %v720 = vmul.f32 %v675, %v692
    %v721 = vmul.f32 %v679, %v692
    %v722 = vmul.f32 %v683, %v692
    %v723 = vmul.f32 %v687, %v692
    %v724 = vmul.f32 %v691, %v692
    %v725 = vsub.f32 %v245, %v693
    %v726 = vsub.f32 %v247, %v693
    %v727 = vsub.f32 %v438, %v693
    %v728 = vsub.f32 %v249, %v694
    %v729 = vsub.f32 %v251, %v694
    %v730 = vsub.f32 %v441, %v694
    %v731 = vsub.f32 %v255, %v695
    %v732 = vsub.f32 %v257, %v695
    %v733 = vsub.f32 %v446, %v695
    %v734 = vsub.f32 %v259, %v696
    %v735 = vsub.f32 %v261, %v696
    %v736 = vsub.f32 %v449, %v696
    %v737 = vsub.f32 %v265, %v697
    %v738 = vsub.f32 %v267, %v697
    %v739 = vsub.f32 %v454, %v697
    %v740 = vsub.f32 %v269, %v698
    %v741 = vsub.f32 %v271, %v698
    %v742 = vsub.f32 %v457, %v698
    %v743 = vsub.f32 %v275, %v699
    %v744 = vsub.f32 %v277, %v699
    %v745 = vsub.f32 %v462, %v699
    %v746 = vsub.f32 %v279, %v700
    %v747 = vsub.f32 %v281, %v700
    %v748 = vsub.f32 %v465, %v700
    %v749 = vsub.f32 %v285, %v701
    %v750 = vsub.f32 %v287, %v701
    %v751 = vsub.f32 %v470, %v701
    %v752 = vsub.f32 %v289, %v702
    %v753 = vsub.f32 %v291, %v702
    %v754 = vsub.f32 %v473, %v702
    %v755 = vsub.f32 %v295, %v703
    %v756 = vsub.f32 %v297, %v703
    %v757 = vsub.f32 %v478, %v703
    %v758 = vsub.f32 %v299, %v704
    %v759 = vsub.f32 %v301, %v704
    %v760 = vsub.f32 %v481, %v704
    %v761 = vsub.f32 %v305, %v705
    %v762 = vsub.f32 %v307, %v705
    %v763 = vsub.f32 %v486, %v705
    %v764 = vsub.f32 %v309, %v706
    %v765 = vsub.f32 %v311, %v706
    %v766 = vsub.f32 %v489, %v706
    %v767 = vsub.f32 %v315, %v707
    %v768 = vsub.f32 %v317, %v707
    %v769 = vsub.f32 %v494, %v707
    %v770 = vsub.f32 %v319, %v708
    %v771 = vsub.f32 %v321, %v708
    %v772 = vsub.f32 %v497, %v708
    %v773 = vsub.f32 %v325, %v709
    %v774 = vsub.f32 %v327, %v709
    %v775 = vsub.f32 %v502, %v709
    %v776 = vsub.f32 %v329, %v710
    %v777 = vsub.f32 %v331, %v710
    %v778 = vsub.f32 %v505, %v710
    %v779 = vsub.f32 %v335, %v711
    %v780 = vsub.f32 %v337, %v711
    %v781 = vsub.f32 %v510, %v711
    %v782 = vsub.f32 %v339, %v712
    %v783 = vsub.f32 %v341, %v712
    %v784 = vsub.f32 %v513, %v712
    %v785 = vsub.f32 %v345, %v713
    %v786 = vsub.f32 %v347, %v713
    %v787 = vsub.f32 %v518, %v713
    %v788 = vsub.f32 %v349, %v714
    %v789 = vsub.f32 %v351, %v714
    %v790 = vsub.f32 %v521, %v714
    %v791 = vsub.f32 %v355, %v715
    %v792 = vsub.f32 %v357, %v715
    %v793 = vsub.f32 %v526, %v715
    %v794 = vsub.f32 %v359, %v716
    %v795 = vsub.f32 %v361, %v716
    %v796 = vsub.f32 %v529, %v716
    %v797 = vsub.f32 %v365, %v717
    %v798 = vsub.f32 %v367, %v717
    %v799 = vsub.f32 %v534, %v717
    %v800 = vsub.f32 %v369, %v718
    %v801 = vsub.f32 %v371, %v718
    %v802 = vsub.f32 %v537, %v718
    %v803 = vsub.f32 %v375, %v719
    %v804 = vsub.f32 %v377, %v719
    %v805 = vsub.f32 %v542, %v719
    %v806 = vsub.f32 %v379, %v720
    %v807 = vsub.f32 %v381, %v720
    %v808 = vsub.f32 %v545, %v720
    %v809 = vsub.f32 %v385, %v721
    %v810 = vsub.f32 %v387, %v721
    %v811 = vsub.f32 %v550, %v721
    %v812 = vsub.f32 %v389, %v722
    %v813 = vsub.f32 %v391, %v722
    %v814 = vsub.f32 %v553, %v722
    %v815 = vsub.f32 %v395, %v723
    %v816 = vsub.f32 %v397, %v723
    %v817 = vsub.f32 %v558, %v723
    %v818 = vsub.f32 %v399, %v724
    %v819 = vsub.f32 %v401, %v724
    %v820 = vsub.f32 %v561, %v724
    %v821 = vmul.f32 %v725, %v725
    %v822 = vmul.f32 %v726, %v726
    %v823 = vmul.f32 %v727, %v727
    %v824 = vmul.f32 %v728, %v728
    %v825 = vmul.f32 %v729, %v729
    %v826 = vmul.f32 %v730, %v730
    %v827 = vmul.f32 %v731, %v731
    %v828 = vmul.f32 %v732, %v732
    %v829 = vmul.f32 %v733, %v733
    %v830 = vmul.f32 %v734, %v734
    %v831 = vmul.f32 %v735, %v735
    %v832 = vmul.f32 %v736, %v736
    %v833 = vmul.f32 %v737, %v737
    %v834 = vmul.f32 %v738, %v738
    %v835 = vmul.f32 %v739, %v739
    %v836 = vmul.f32 %v740, %v740
    %v837 = vmul.f32 %v741, %v741
    %v838 = vmul.f32 %v742, %v742
    %v839 = vmul.f32 %v743, %v743
    %v840 = vmul.f32 %v744, %v744
    %v841 = vmul.f32 %v745, %v745
    %v842 = vmul.f32 %v746, %v746
    %v843 = vmul.f32 %v747, %v747
    %v844 = vmul.f32 %v748, %v748
    %v845 = vmul.f32 %v749, %v749
    %v846 = vmul.f32 %v750, %v750
    %v847 = vmul.f32 %v751, %v751
    %v848 = vmul.f32 %v752, %v752
    %v849 = vmul.f32 %v753, %v753
    %v850 = vmul.f32 %v754, %v754
    %v851 = vmul.f32 %v755, %v755
    %v852 = vmul.f32 %v756, %v756
    %v853 = vmul.f32 %v757, %v757
    %v854 = vmul.f32 %v758, %v758
    %v855 = vmul.f32 %v759, %v759
    %v856 = vmul.f32 %v760, %v760
    %v857 = vmul.f32 %v761, %v761
    %v858 = vmul.f32 %v762, %v762
    %v859 = vmul.f32 %v763, %v763
    %v860 = vmul.f32 %v764, %v764
    %v861 = vmul.f32 %v765, %v765
    %v862 = vmul.f32 %v766, %v766
    %v863 = vmul.f32 %v767, %v767
    %v864 = vmul.f32 %v768, %v768
    %v865 = vmul.f32 %v769, %v769
    %v866 = vmul.f32 %v770, %v770
    %v867 = vmul.f32 %v771, %v771
    %v868 = vmul.f32 %v772, %v772
    %v869 = vmul.f32 %v773, %v773
    %v870 = vmul.f32 %v774, %v774
    %v871 = vmul.f32 %v775, %v775
    %v872 = vmul.f32 %v776, %v776
    %v873 = vmul.f32 %v777, %v777
    %v874 = vmul.f32 %v778, %v778
    %v875 = vmul.f32 %v779, %v779
    %v876 = vmul.f32 %v780, %v780
    %v877 = vmul.f32 %v781, %v781
    %v878 = vmul.f32 %v782, %v782
    %v879 = vmul.f32 %v783, %v783
    %v880 = vmul.f32 %v784, %v784
    %v881 = vmul.f32 %v785, %v785
    %v882 = vmul.f32 %v786, %v786
    %v883 = vmul.f32 %v787, %v787
    %v884 = vmul.f32 %v788, %v788
    %v885 = vmul.f32 %v789, %v789
    %v886 = vmul.f32 %v790, %v790
    %v887 = vmul.f32 %v791, %v791
    %v888 = vmul.f32 %v792, %v792
    %v889 = vmul.f32 %v793, %v793
    %v890 = vmul.f32 %v794, %v794
    %v891 = vmul.f32 %v795, %v795
    %v892 = vmul.f32 %v796, %v796
    %v893 = vmul.f32 %v797, %v797
    %v894 = vmul.f32 %v798, %v798
    %v895 = vmul.f32 %v799, %v799
    %v896 = vmul.f32 %v800, %v800
    %v897 = vmul.f32 %v801, %v801
    %v898 = vmul.f32 %v802, %v802
    %v899 = vmul.f32 %v803, %v803
    %v900 = vmul.f32 %v804, %v804
    %v901 = vmul.f32 %v805, %v805
    %v902 = vmul.f32 %v806, %v806
    %v903 = vmul.f32 %v807, %v807
    %v904 = vmul.f32 %v808, %v808
    %v905 = vmul.f32 %v809, %v809
    %v906 = vmul.f32 %v810, %v810
    %v907 = vmul.f32 %v811, %v811
    %v908 = vmul.f32 %v812, %v812
    %v909 = vmul.f32 %v813, %v813
    %v910 = vmul.f32 %v814, %v814
    %v911 = vmul.f32 %v815, %v815
    %v912 = vmul.f32 %v816, %v816
    %v913 = vmul.f32 %v817, %v817
    %v914 = vmul.f32 %v818, %v818
    %v915 = vmul.f32 %v819, %v819
    %v916 = vmul.f32 %v820, %v820
    %v917 = vadd.f32 %v821, %v822
    %v918 = vadd.f32 %v917, %v823
    %919 = vadd.xlane.f32.xlu0 %v918
    %v920 = vpop.xlane.xlu0 %919
    %v921 = vadd.f32 %v824, %v825
    %v922 = vadd.f32 %v921, %v826
    %923 = vadd.xlane.f32.xlu0 %v922
    %v924 = vpop.xlane.xlu0 %923
    %v925 = vadd.f32 %v827, %v828
    %v926 = vadd.f32 %v925, %v829
    %927 = vadd.xlane.f32.xlu0 %v926
    %v928 = vpop.xlane.xlu0 %927
    %v929 = vadd.f32 %v830, %v831
    %v930 = vadd.f32 %v929, %v832
    %931 = vadd.xlane.f32.xlu0 %v930
    %v932 = vpop.xlane.xlu0 %931
    %v933 = vadd.f32 %v833, %v834
    %v934 = vadd.f32 %v933, %v835
    %935 = vadd.xlane.f32.xlu0 %v934
    %v936 = vpop.xlane.xlu0 %935
    %v937 = vadd.f32 %v836, %v837
    %v938 = vadd.f32 %v937, %v838
    %939 = vadd.xlane.f32.xlu0 %v938
    %v940 = vpop.xlane.xlu0 %939
    %v941 = vadd.f32 %v839, %v840
    %v942 = vadd.f32 %v941, %v841
    %943 = vadd.xlane.f32.xlu0 %v942
    %v944 = vpop.xlane.xlu0 %943
    %v945 = vadd.f32 %v842, %v843
    %v946 = vadd.f32 %v945, %v844
    %947 = vadd.xlane.f32.xlu0 %v946
    %v948 = vpop.xlane.xlu0 %947
    %v949 = vadd.f32 %v845, %v846
    %v950 = vadd.f32 %v949, %v847
    %951 = vadd.xlane.f32.xlu0 %v950
    %v952 = vpop.xlane.xlu0 %951
    %v953 = vadd.f32 %v848, %v849
    %v954 = vadd.f32 %v953, %v850
    %955 = vadd.xlane.f32.xlu0 %v954
    %v956 = vpop.xlane.xlu0 %955
    %v957 = vadd.f32 %v851, %v852
    %v958 = vadd.f32 %v957, %v853
    %959 = vadd.xlane.f32.xlu0 %v958
    %v960 = vpop.xlane.xlu0 %959
    %v961 = vadd.f32 %v854, %v855
    %v962 = vadd.f32 %v961, %v856
    %963 = vadd.xlane.f32.xlu0 %v962
    %v964 = vpop.xlane.xlu0 %963
    %v965 = vadd.f32 %v857, %v858
    %v966 = vadd.f32 %v965, %v859
    %967 = vadd.xlane.f32.xlu0 %v966
    %v968 = vpop.xlane.xlu0 %967
    %v969 = vadd.f32 %v860, %v861
    %v970 = vadd.f32 %v969, %v862
    %971 = vadd.xlane.f32.xlu0 %v970
    %v972 = vpop.xlane.xlu0 %971
    %v973 = vadd.f32 %v863, %v864
    %v974 = vadd.f32 %v973, %v865
    %975 = vadd.xlane.f32.xlu0 %v974
    %v976 = vpop.xlane.xlu0 %975
    %v977 = vadd.f32 %v866, %v867
    %v978 = vadd.f32 %v977, %v868
    %979 = vadd.xlane.f32.xlu0 %v978
    %v980 = vpop.xlane.xlu0 %979
    %v981 = vadd.f32 %v869, %v870
    %v982 = vadd.f32 %v981, %v871
    %983 = vadd.xlane.f32.xlu0 %v982
    %v984 = vpop.xlane.xlu0 %983
    %v985 = vadd.f32 %v872, %v873
    %v986 = vadd.f32 %v985, %v874
    %987 = vadd.xlane.f32.xlu0 %v986
    %v988 = vpop.xlane.xlu0 %987
    %v989 = vadd.f32 %v875, %v876
    %v990 = vadd.f32 %v989, %v877
    %991 = vadd.xlane.f32.xlu0 %v990
    %v992 = vpop.xlane.xlu0 %991
    %v993 = vadd.f32 %v878, %v879
    %v994 = vadd.f32 %v993, %v880
    %995 = vadd.xlane.f32.xlu0 %v994
    %v996 = vpop.xlane.xlu0 %995
    %v997 = vadd.f32 %v881, %v882
    %v998 = vadd.f32 %v997, %v883
    %999 = vadd.xlane.f32.xlu0 %v998
    %v1000 = vpop.xlane.xlu0 %999
    %v1001 = vadd.f32 %v884, %v885
    %v1002 = vadd.f32 %v1001, %v886
    %1003 = vadd.xlane.f32.xlu0 %v1002
    %v1004 = vpop.xlane.xlu0 %1003
    %v1005 = vadd.f32 %v887, %v888
    %v1006 = vadd.f32 %v1005, %v889
    %1007 = vadd.xlane.f32.xlu0 %v1006
    %v1008 = vpop.xlane.xlu0 %1007
    %v1009 = vadd.f32 %v890, %v891
    %v1010 = vadd.f32 %v1009, %v892
    %1011 = vadd.xlane.f32.xlu0 %v1010
    %v1012 = vpop.xlane.xlu0 %1011
    %v1013 = vadd.f32 %v893, %v894
    %v1014 = vadd.f32 %v1013, %v895
    %1015 = vadd.xlane.f32.xlu0 %v1014
    %v1016 = vpop.xlane.xlu0 %1015
    %v1017 = vadd.f32 %v896, %v897
    %v1018 = vadd.f32 %v1017, %v898
    %1019 = vadd.xlane.f32.xlu0 %v1018
    %v1020 = vpop.xlane.xlu0 %1019
    %v1021 = vadd.f32 %v899, %v900
    %v1022 = vadd.f32 %v1021, %v901
    %1023 = vadd.xlane.f32.xlu0 %v1022
    %v1024 = vpop.xlane.xlu0 %1023
    %v1025 = vadd.f32 %v902, %v903
    %v1026 = vadd.f32 %v1025, %v904
    %1027 = vadd.xlane.f32.xlu0 %v1026
    %v1028 = vpop.xlane.xlu0 %1027
    %v1029 = vadd.f32 %v905, %v906
    %v1030 = vadd.f32 %v1029, %v907
    %1031 = vadd.xlane.f32.xlu0 %v1030
    %v1032 = vpop.xlane.xlu0 %1031
    %v1033 = vadd.f32 %v908, %v909
    %v1034 = vadd.f32 %v1033, %v910
    %1035 = vadd.xlane.f32.xlu0 %v1034
    %v1036 = vpop.xlane.xlu0 %1035
    %v1037 = vadd.f32 %v911, %v912
    %v1038 = vadd.f32 %v1037, %v913
    %1039 = vadd.xlane.f32.xlu0 %v1038
    %v1040 = vpop.xlane.xlu0 %1039
    %v1041 = vadd.f32 %v914, %v915
    %v1042 = vadd.f32 %v1041, %v916
    %1043 = vadd.xlane.f32.xlu0 %v1042
    %v1044 = vpop.xlane.xlu0 %1043
    %v1045 = vmul.f32 %v920, %v692
    %v1046 = vmul.f32 %v924, %v692
    %v1047 = vmul.f32 %v928, %v692
    %v1048 = vmul.f32 %v932, %v692
    %v1049 = vmul.f32 %v936, %v692
    %v1050 = vmul.f32 %v940, %v692
    %v1051 = vmul.f32 %v944, %v692
    %v1052 = vmul.f32 %v948, %v692
    %v1053 = vmul.f32 %v952, %v692
    %v1054 = vmul.f32 %v956, %v692
    %v1055 = vmul.f32 %v960, %v692
    %v1056 = vmul.f32 %v964, %v692
    %v1057 = vmul.f32 %v968, %v692
    %v1058 = vmul.f32 %v972, %v692
    %v1059 = vmul.f32 %v976, %v692
    %v1060 = vmul.f32 %v980, %v692
    %v1061 = vmul.f32 %v984, %v692
    %v1062 = vmul.f32 %v988, %v692
    %v1063 = vmul.f32 %v992, %v692
    %v1064 = vmul.f32 %v996, %v692
    %v1065 = vmul.f32 %v1000, %v692
    %v1066 = vmul.f32 %v1004, %v692
    %v1067 = vmul.f32 %v1008, %v692
    %v1068 = vmul.f32 %v1012, %v692
    %v1069 = vmul.f32 %v1016, %v692
    %v1070 = vmul.f32 %v1020, %v692
    %v1071 = vmul.f32 %v1024, %v692
    %v1072 = vmul.f32 %v1028, %v692
    %v1073 = vmul.f32 %v1032, %v692
    %v1074 = vmul.f32 %v1036, %v692
    %v1075 = vmul.f32 %v1040, %v692
    %v1076 = vmul.f32 %v1044, %v692
    %v1077 = vadd.f32 %v1045, 1e-05
    %v1078 = vadd.f32 %v1046, 1e-05
    %v1079 = vadd.f32 %v1047, 1e-05
    %v1080 = vadd.f32 %v1048, 1e-05
    %v1081 = vadd.f32 %v1049, 1e-05
    %v1082 = vadd.f32 %v1050, 1e-05
    %v1083 = vadd.f32 %v1051, 1e-05
    %v1084 = vadd.f32 %v1052, 1e-05
    %v1085 = vadd.f32 %v1053, 1e-05
    %v1086 = vadd.f32 %v1054, 1e-05
    %v1087 = vadd.f32 %v1055, 1e-05
    %v1088 = vadd.f32 %v1056, 1e-05
    %v1089 = vadd.f32 %v1057, 1e-05
    %v1090 = vadd.f32 %v1058, 1e-05
    %v1091 = vadd.f32 %v1059, 1e-05
    %v1092 = vadd.f32 %v1060, 1e-05
    %v1093 = vadd.f32 %v1061, 1e-05
    %v1094 = vadd.f32 %v1062, 1e-05
    %v1095 = vadd.f32 %v1063, 1e-05
    %v1096 = vadd.f32 %v1064, 1e-05
    %v1097 = vadd.f32 %v1065, 1e-05
    %v1098 = vadd.f32 %v1066, 1e-05
    %v1099 = vadd.f32 %v1067, 1e-05
    %v1100 = vadd.f32 %v1068, 1e-05
    %v1101 = vadd.f32 %v1069, 1e-05
    %v1102 = vadd.f32 %v1070, 1e-05
    %v1103 = vadd.f32 %v1071, 1e-05
    %v1104 = vadd.f32 %v1072, 1e-05
    %v1105 = vadd.f32 %v1073, 1e-05
    %v1106 = vadd.f32 %v1074, 1e-05
    %v1107 = vadd.f32 %v1075, 1e-05
    %v1108 = vadd.f32 %v1076, 1e-05
    %v1109 = vrsqrt.pop %v1077
    %v1110 = vrsqrt.pop %v1078
    %v1111 = vrsqrt.pop %v1079
    %v1112 = vrsqrt.pop %v1080
    %v1113 = vrsqrt.pop %v1081
    %v1114 = vrsqrt.pop %v1082
    %v1115 = vrsqrt.pop %v1083
    %v1116 = vrsqrt.pop %v1084
    %v1117 = vrsqrt.pop %v1085
    %v1118 = vrsqrt.pop %v1086
    %v1119 = vrsqrt.pop %v1087
    %v1120 = vrsqrt.pop %v1088
    %v1121 = vrsqrt.pop %v1089
    %v1122 = vrsqrt.pop %v1090
    %v1123 = vrsqrt.pop %v1091
    %v1124 = vrsqrt.pop %v1092
    %v1125 = vrsqrt.pop %v1093
    %v1126 = vrsqrt.pop %v1094
    %v1127 = vrsqrt.pop %v1095
    %v1128 = vrsqrt.pop %v1096
    %v1129 = vrsqrt.pop %v1097
    %v1130 = vrsqrt.pop %v1098
    %v1131 = vrsqrt.pop %v1099
    %v1132 = vrsqrt.pop %v1100
    %v1133 = vrsqrt.pop %v1101
    %v1134 = vrsqrt.pop %v1102
    %v1135 = vrsqrt.pop %v1103
    %v1136 = vrsqrt.pop %v1104
    %v1137 = vrsqrt.pop %v1105
    %v1138 = vrsqrt.pop %v1106
    %v1139 = vrsqrt.pop %v1107
    %v1140 = vrsqrt.pop %v1108
    %v1141 = vmul.f32 %v725, %v1109
    %v1142 = vmul.f32 %v726, %v1109
    %v1143 = vmul.f32 %v727, %v1109
    %v1144 = vmul.f32 %v728, %v1110
    %v1145 = vmul.f32 %v729, %v1110
    %v1146 = vmul.f32 %v730, %v1110
    %v1147 = vmul.f32 %v731, %v1111
    %v1148 = vmul.f32 %v732, %v1111
    %v1149 = vmul.f32 %v733, %v1111
    %v1150 = vmul.f32 %v734, %v1112
    %v1151 = vmul.f32 %v735, %v1112
    %v1152 = vmul.f32 %v736, %v1112
    %v1153 = vmul.f32 %v737, %v1113
    %v1154 = vmul.f32 %v738, %v1113
    %v1155 = vmul.f32 %v739, %v1113
    %v1156 = vmul.f32 %v740, %v1114
    %v1157 = vmul.f32 %v741, %v1114
    %v1158 = vmul.f32 %v742, %v1114
    %v1159 = vmul.f32 %v743, %v1115
    %v1160 = vmul.f32 %v744, %v1115
    %v1161 = vmul.f32 %v745, %v1115
    %v1162 = vmul.f32 %v746, %v1116
    %v1163 = vmul.f32 %v747, %v1116
    %v1164 = vmul.f32 %v748, %v1116
    %v1165 = vmul.f32 %v749, %v1117
    %v1166 = vmul.f32 %v750, %v1117
    %v1167 = vmul.f32 %v751, %v1117
    %v1168 = vmul.f32 %v752, %v1118
    %v1169 = vmul.f32 %v753, %v1118
    %v1170 = vmul.f32 %v754, %v1118
    %v1171 = vmul.f32 %v755, %v1119
    %v1172 = vmul.f32 %v756, %v1119
    %v1173 = vmul.f32 %v757, %v1119
    %v1174 = vmul.f32 %v758, %v1120
    %v1175 = vmul.f32 %v759, %v1120
    %v1176 = vmul.f32 %v760, %v1120
    %v1177 = vmul.f32 %v761, %v1121
    %v1178 = vmul.f32 %v762, %v1121
    %v1179 = vmul.f32 %v763, %v1121
    %v1180 = vmul.f32 %v764, %v1122
    %v1181 = vmul.f32 %v765, %v1122
    %v1182 = vmul.f32 %v766, %v1122
    %v1183 = vmul.f32 %v767, %v1123
    %v1184 = vmul.f32 %v768, %v1123
    %v1185 = vmul.f32 %v769, %v1123
    %v1186 = vmul.f32 %v770, %v1124
    %v1187 = vmul.f32 %v771, %v1124
    %v1188 = vmul.f32 %v772, %v1124
    %v1189 = vmul.f32 %v773, %v1125
    %v1190 = vmul.f32 %v774, %v1125
    %v1191 = vmul.f32 %v775, %v1125
    %v1192 = vmul.f32 %v776, %v1126
    %v1193 = vmul.f32 %v777, %v1126
    %v1194 = vmul.f32 %v778, %v1126
    %v1195 = vmul.f32 %v779, %v1127
    %v1196 = vmul.f32 %v780, %v1127
    %v1197 = vmul.f32 %v781, %v1127
    %v1198 = vmul.f32 %v782, %v1128
    %v1199 = vmul.f32 %v783, %v1128
    %v1200 = vmul.f32 %v784, %v1128
    %v1201 = vmul.f32 %v785, %v1129
    %v1202 = vmul.f32 %v786, %v1129
    %v1203 = vmul.f32 %v787, %v1129
    %v1204 = vmul.f32 %v788, %v1130
    %v1205 = vmul.f32 %v789, %v1130
    %v1206 = vmul.f32 %v790, %v1130
    %v1207 = vmul.f32 %v791, %v1131
    %v1208 = vmul.f32 %v792, %v1131
    %v1209 = vmul.f32 %v793, %v1131
    %v1210 = vmul.f32 %v794, %v1132
    %v1211 = vmul.f32 %v795, %v1132
    %v1212 = vmul.f32 %v796, %v1132
    %v1213 = vmul.f32 %v797, %v1133
    %v1214 = vmul.f32 %v798, %v1133
    %v1215 = vmul.f32 %v799, %v1133
    %v1216 = vmul.f32 %v800, %v1134
    %v1217 = vmul.f32 %v801, %v1134
    %v1218 = vmul.f32 %v802, %v1134
    %v1219 = vmul.f32 %v803, %v1135
    %v1220 = vmul.f32 %v804, %v1135
    %v1221 = vmul.f32 %v805, %v1135
    %v1222 = vmul.f32 %v806, %v1136
    %v1223 = vmul.f32 %v807, %v1136
    %v1224 = vmul.f32 %v808, %v1136
    %v1225 = vmul.f32 %v809, %v1137
    %v1226 = vmul.f32 %v810, %v1137
    %v1227 = vmul.f32 %v811, %v1137
    %v1228 = vmul.f32 %v812, %v1138
    %v1229 = vmul.f32 %v813, %v1138
    %v1230 = vmul.f32 %v814, %v1138
    %v1231 = vmul.f32 %v815, %v1139
    %v1232 = vmul.f32 %v816, %v1139
    %v1233 = vmul.f32 %v817, %v1139
    %v1234 = vmul.f32 %v818, %v1140
    %v1235 = vmul.f32 %v819, %v1140
    %v1236 = vmul.f32 %v820, %v1140
    %v1238 = vlaneseq
    %v1239 = vshrl.u32 %v1238, 7
    %v1240 = vsub.s32 0, %v1239
    %v1241 = vrot.slane %v106, %v1240
    %v1242 = vlaneseq
    %v1243 = vshrl.u32 %v1242, 7
    %v1244 = vsub.s32 1, %v1243
    %v1245 = vrot.slane %v106, %v1244
    %v1246 = vlaneseq
    %v1247 = vshrl.u32 %v1246, 7
    %v1248 = vsub.s32 2, %v1247
    %v1249 = vrot.slane %v106, %v1248
    %v1253 = vmul.f32 %v1141, %v1241
    %v1254 = vmul.f32 %v1142, %v1245
    %v1255 = vmul.f32 %v1143, %v1249
    %v1256 = vmul.f32 %v1144, %v1241
    %v1257 = vmul.f32 %v1145, %v1245
    %v1258 = vmul.f32 %v1146, %v1249
    %v1259 = vmul.f32 %v1147, %v1241
    %v1260 = vmul.f32 %v1148, %v1245
    %v1261 = vmul.f32 %v1149, %v1249
    %v1262 = vmul.f32 %v1150, %v1241
    %v1263 = vmul.f32 %v1151, %v1245
    %v1264 = vmul.f32 %v1152, %v1249
    %v1265 = vmul.f32 %v1153, %v1241
    %v1266 = vmul.f32 %v1154, %v1245
    %v1267 = vmul.f32 %v1155, %v1249
    %v1268 = vmul.f32 %v1156, %v1241
    %v1269 = vmul.f32 %v1157, %v1245
    %v1270 = vmul.f32 %v1158, %v1249
    %v1271 = vmul.f32 %v1159, %v1241
    %v1272 = vmul.f32 %v1160, %v1245
    %v1273 = vmul.f32 %v1161, %v1249
    %v1274 = vmul.f32 %v1162, %v1241
    %v1275 = vmul.f32 %v1163, %v1245
    %v1276 = vmul.f32 %v1164, %v1249
    %v1277 = vmul.f32 %v1165, %v1241
    %v1278 = vmul.f32 %v1166, %v1245
    %v1279 = vmul.f32 %v1167, %v1249
    %v1280 = vmul.f32 %v1168, %v1241
    %v1281 = vmul.f32 %v1169, %v1245
    %v1282 = vmul.f32 %v1170, %v1249
    %v1283 = vmul.f32 %v1171, %v1241
    %v1284 = vmul.f32 %v1172, %v1245
    %v1285 = vmul.f32 %v1173, %v1249
    %v1286 = vmul.f32 %v1174, %v1241
    %v1287 = vmul.f32 %v1175, %v1245
    %v1288 = vmul.f32 %v1176, %v1249
    %v1289 = vmul.f32 %v1177, %v1241
    %v1290 = vmul.f32 %v1178, %v1245
    %v1291 = vmul.f32 %v1179, %v1249
    %v1292 = vmul.f32 %v1180, %v1241
    %v1293 = vmul.f32 %v1181, %v1245
    %v1294 = vmul.f32 %v1182, %v1249
    %v1295 = vmul.f32 %v1183, %v1241
    %v1296 = vmul.f32 %v1184, %v1245
    %v1297 = vmul.f32 %v1185, %v1249
    %v1298 = vmul.f32 %v1186, %v1241
    %v1299 = vmul.f32 %v1187, %v1245
    %v1300 = vmul.f32 %v1188, %v1249
    %v1301 = vmul.f32 %v1189, %v1241
    %v1302 = vmul.f32 %v1190, %v1245
    %v1303 = vmul.f32 %v1191, %v1249
    %v1304 = vmul.f32 %v1192, %v1241
    %v1305 = vmul.f32 %v1193, %v1245
    %v1306 = vmul.f32 %v1194, %v1249
    %v1307 = vmul.f32 %v1195, %v1241
    %v1308 = vmul.f32 %v1196, %v1245
    %v1309 = vmul.f32 %v1197, %v1249
    %v1310 = vmul.f32 %v1198, %v1241
    %v1311 = vmul.f32 %v1199, %v1245
    %v1312 = vmul.f32 %v1200, %v1249
    %v1313 = vmul.f32 %v1201, %v1241
    %v1314 = vmul.f32 %v1202, %v1245
    %v1315 = vmul.f32 %v1203, %v1249
    %v1316 = vmul.f32 %v1204, %v1241
    %v1317 = vmul.f32 %v1205, %v1245
    %v1318 = vmul.f32 %v1206, %v1249
    %v1319 = vmul.f32 %v1207, %v1241
    %v1320 = vmul.f32 %v1208, %v1245
    %v1321 = vmul.f32 %v1209, %v1249
    %v1322 = vmul.f32 %v1210, %v1241
    %v1323 = vmul.f32 %v1211, %v1245
    %v1324 = vmul.f32 %v1212, %v1249
    %v1325 = vmul.f32 %v1213, %v1241
    %v1326 = vmul.f32 %v1214, %v1245
    %v1327 = vmul.f32 %v1215, %v1249
    %v1328 = vmul.f32 %v1216, %v1241
    %v1329 = vmul.f32 %v1217, %v1245
    %v1330 = vmul.f32 %v1218, %v1249
    %v1331 = vmul.f32 %v1219, %v1241
    %v1332 = vmul.f32 %v1220, %v1245
    %v1333 = vmul.f32 %v1221, %v1249
    %v1334 = vmul.f32 %v1222, %v1241
    %v1335 = vmul.f32 %v1223, %v1245
    %v1336 = vmul.f32 %v1224, %v1249
    %v1337 = vmul.f32 %v1225, %v1241
    %v1338 = vmul.f32 %v1226, %v1245
    %v1339 = vmul.f32 %v1227, %v1249
    %v1340 = vmul.f32 %v1228, %v1241
    %v1341 = vmul.f32 %v1229, %v1245
    %v1342 = vmul.f32 %v1230, %v1249
    %v1343 = vmul.f32 %v1231, %v1241
    %v1344 = vmul.f32 %v1232, %v1245
    %v1345 = vmul.f32 %v1233, %v1249
    %v1346 = vmul.f32 %v1234, %v1241
    %v1347 = vmul.f32 %v1235, %v1245
    %v1348 = vmul.f32 %v1236, %v1249
    %v1350 = vlaneseq
    %v1351 = vshrl.u32 %v1350, 7
    %v1352 = vsub.s32 0, %v1351
    %v1353 = vrot.slane %v108, %v1352
    %v1354 = vlaneseq
    %v1355 = vshrl.u32 %v1354, 7
    %v1356 = vsub.s32 1, %v1355
    %v1357 = vrot.slane %v108, %v1356
    %v1358 = vlaneseq
    %v1359 = vshrl.u32 %v1358, 7
    %v1360 = vsub.s32 2, %v1359
    %v1361 = vrot.slane %v108, %v1360
    %v1365 = vadd.f32 %v1253, %v1353
    %v1366 = vadd.f32 %v1254, %v1357
    %v1367 = vadd.f32 %v1255, %v1361
    %v1368 = vadd.f32 %v1256, %v1353
    %v1369 = vadd.f32 %v1257, %v1357
    %v1370 = vadd.f32 %v1258, %v1361
    %v1371 = vadd.f32 %v1259, %v1353
    %v1372 = vadd.f32 %v1260, %v1357
    %v1373 = vadd.f32 %v1261, %v1361
    %v1374 = vadd.f32 %v1262, %v1353
    %v1375 = vadd.f32 %v1263, %v1357
    %v1376 = vadd.f32 %v1264, %v1361
    %v1377 = vadd.f32 %v1265, %v1353
    %v1378 = vadd.f32 %v1266, %v1357
    %v1379 = vadd.f32 %v1267, %v1361
    %v1380 = vadd.f32 %v1268, %v1353
    %v1381 = vadd.f32 %v1269, %v1357
    %v1382 = vadd.f32 %v1270, %v1361
    %v1383 = vadd.f32 %v1271, %v1353
    %v1384 = vadd.f32 %v1272, %v1357
    %v1385 = vadd.f32 %v1273, %v1361
    %v1386 = vadd.f32 %v1274, %v1353
    %v1387 = vadd.f32 %v1275, %v1357
    %v1388 = vadd.f32 %v1276, %v1361
    %v1389 = vadd.f32 %v1277, %v1353
    %v1390 = vadd.f32 %v1278, %v1357
    %v1391 = vadd.f32 %v1279, %v1361
    %v1392 = vadd.f32 %v1280, %v1353
    %v1393 = vadd.f32 %v1281, %v1357
    %v1394 = vadd.f32 %v1282, %v1361
    %v1395 = vadd.f32 %v1283, %v1353
    %v1396 = vadd.f32 %v1284, %v1357
    %v1397 = vadd.f32 %v1285, %v1361
    %v1398 = vadd.f32 %v1286, %v1353
    %v1399 = vadd.f32 %v1287, %v1357
    %v1400 = vadd.f32 %v1288, %v1361
    %v1401 = vadd.f32 %v1289, %v1353
    %v1402 = vadd.f32 %v1290, %v1357
    %v1403 = vadd.f32 %v1291, %v1361
    %v1404 = vadd.f32 %v1292, %v1353
    %v1405 = vadd.f32 %v1293, %v1357
    %v1406 = vadd.f32 %v1294, %v1361
    %v1407 = vadd.f32 %v1295, %v1353
    %v1408 = vadd.f32 %v1296, %v1357
    %v1409 = vadd.f32 %v1297, %v1361
    %v1410 = vadd.f32 %v1298, %v1353
    %v1411 = vadd.f32 %v1299, %v1357
    %v1412 = vadd.f32 %v1300, %v1361
    %v1413 = vadd.f32 %v1301, %v1353
    %v1414 = vadd.f32 %v1302, %v1357
    %v1415 = vadd.f32 %v1303, %v1361
    %v1416 = vadd.f32 %v1304, %v1353
    %v1417 = vadd.f32 %v1305, %v1357
    %v1418 = vadd.f32 %v1306, %v1361
    %v1419 = vadd.f32 %v1307, %v1353
    %v1420 = vadd.f32 %v1308, %v1357
    %v1421 = vadd.f32 %v1309, %v1361
    %v1422 = vadd.f32 %v1310, %v1353
    %v1423 = vadd.f32 %v1311, %v1357
    %v1424 = vadd.f32 %v1312, %v1361
    %v1425 = vadd.f32 %v1313, %v1353
    %v1426 = vadd.f32 %v1314, %v1357
    %v1427 = vadd.f32 %v1315, %v1361
    %v1428 = vadd.f32 %v1316, %v1353
    %v1429 = vadd.f32 %v1317, %v1357
    %v1430 = vadd.f32 %v1318, %v1361
    %v1431 = vadd.f32 %v1319, %v1353
    %v1432 = vadd.f32 %v1320, %v1357
    %v1433 = vadd.f32 %v1321, %v1361
    %v1434 = vadd.f32 %v1322, %v1353
    %v1435 = vadd.f32 %v1323, %v1357
    %v1436 = vadd.f32 %v1324, %v1361
    %v1437 = vadd.f32 %v1325, %v1353
    %v1438 = vadd.f32 %v1326, %v1357
    %v1439 = vadd.f32 %v1327, %v1361
    %v1440 = vadd.f32 %v1328, %v1353
    %v1441 = vadd.f32 %v1329, %v1357
    %v1442 = vadd.f32 %v1330, %v1361
    %v1443 = vadd.f32 %v1331, %v1353
    %v1444 = vadd.f32 %v1332, %v1357
    %v1445 = vadd.f32 %v1333, %v1361
    %v1446 = vadd.f32 %v1334, %v1353
    %v1447 = vadd.f32 %v1335, %v1357
    %v1448 = vadd.f32 %v1336, %v1361
    %v1449 = vadd.f32 %v1337, %v1353
    %v1450 = vadd.f32 %v1338, %v1357
    %v1451 = vadd.f32 %v1339, %v1361
    %v1452 = vadd.f32 %v1340, %v1353
    %v1453 = vadd.f32 %v1341, %v1357
    %v1454 = vadd.f32 %v1342, %v1361
    %v1455 = vadd.f32 %v1343, %v1353
    %v1456 = vadd.f32 %v1344, %v1357
    %v1457 = vadd.f32 %v1345, %v1361
    %v1458 = vadd.f32 %v1346, %v1353
    %v1459 = vadd.f32 %v1347, %v1357
    %v1460 = vadd.f32 %v1348, %v1361
    %v1461 = vmul.f32 %v1365, 0.1
    %v1462 = vmul.f32 %v1366, 0.1
    %v1463 = vmul.f32 %v1367, 0.1
    %v1464 = vmul.f32 %v1368, 0.1
    %v1465 = vmul.f32 %v1369, 0.1
    %v1466 = vmul.f32 %v1370, 0.1
    %v1467 = vmul.f32 %v1371, 0.1
    %v1468 = vmul.f32 %v1372, 0.1
    %v1469 = vmul.f32 %v1373, 0.1
    %v1470 = vmul.f32 %v1374, 0.1
    %v1471 = vmul.f32 %v1375, 0.1
    %v1472 = vmul.f32 %v1376, 0.1
    %v1473 = vmul.f32 %v1377, 0.1
    %v1474 = vmul.f32 %v1378, 0.1
    %v1475 = vmul.f32 %v1379, 0.1
    %v1476 = vmul.f32 %v1380, 0.1
    %v1477 = vmul.f32 %v1381, 0.1
    %v1478 = vmul.f32 %v1382, 0.1
    %v1479 = vmul.f32 %v1383, 0.1
    %v1480 = vmul.f32 %v1384, 0.1
    %v1481 = vmul.f32 %v1385, 0.1
    %v1482 = vmul.f32 %v1386, 0.1
    %v1483 = vmul.f32 %v1387, 0.1
    %v1484 = vmul.f32 %v1388, 0.1
    %v1485 = vmul.f32 %v1389, 0.1
    %v1486 = vmul.f32 %v1390, 0.1
    %v1487 = vmul.f32 %v1391, 0.1
    %v1488 = vmul.f32 %v1392, 0.1
    %v1489 = vmul.f32 %v1393, 0.1
    %v1490 = vmul.f32 %v1394, 0.1
    %v1491 = vmul.f32 %v1395, 0.1
    %v1492 = vmul.f32 %v1396, 0.1
    %v1493 = vmul.f32 %v1397, 0.1
    %v1494 = vmul.f32 %v1398, 0.1
    %v1495 = vmul.f32 %v1399, 0.1
    %v1496 = vmul.f32 %v1400, 0.1
    %v1497 = vmul.f32 %v1401, 0.1
    %v1498 = vmul.f32 %v1402, 0.1
    %v1499 = vmul.f32 %v1403, 0.1
    %v1500 = vmul.f32 %v1404, 0.1
    %v1501 = vmul.f32 %v1405, 0.1
    %v1502 = vmul.f32 %v1406, 0.1
    %v1503 = vmul.f32 %v1407, 0.1
    %v1504 = vmul.f32 %v1408, 0.1
    %v1505 = vmul.f32 %v1409, 0.1
    %v1506 = vmul.f32 %v1410, 0.1
    %v1507 = vmul.f32 %v1411, 0.1
    %v1508 = vmul.f32 %v1412, 0.1
    %v1509 = vmul.f32 %v1413, 0.1
    %v1510 = vmul.f32 %v1414, 0.1
    %v1511 = vmul.f32 %v1415, 0.1
    %v1512 = vmul.f32 %v1416, 0.1
    %v1513 = vmul.f32 %v1417, 0.1
    %v1514 = vmul.f32 %v1418, 0.1
    %v1515 = vmul.f32 %v1419, 0.1
    %v1516 = vmul.f32 %v1420, 0.1
    %v1517 = vmul.f32 %v1421, 0.1
    %v1518 = vmul.f32 %v1422, 0.1
    %v1519 = vmul.f32 %v1423, 0.1
    %v1520 = vmul.f32 %v1424, 0.1
    %v1521 = vmul.f32 %v1425, 0.1
    %v1522 = vmul.f32 %v1426, 0.1
    %v1523 = vmul.f32 %v1427, 0.1
    %v1524 = vmul.f32 %v1428, 0.1
    %v1525 = vmul.f32 %v1429, 0.1
    %v1526 = vmul.f32 %v1430, 0.1
    %v1527 = vmul.f32 %v1431, 0.1
    %v1528 = vmul.f32 %v1432, 0.1
    %v1529 = vmul.f32 %v1433, 0.1
    %v1530 = vmul.f32 %v1434, 0.1
    %v1531 = vmul.f32 %v1435, 0.1
    %v1532 = vmul.f32 %v1436, 0.1
    %v1533 = vmul.f32 %v1437, 0.1
    %v1534 = vmul.f32 %v1438, 0.1
    %v1535 = vmul.f32 %v1439, 0.1
    %v1536 = vmul.f32 %v1440, 0.1
    %v1537 = vmul.f32 %v1441, 0.1
    %v1538 = vmul.f32 %v1442, 0.1
    %v1539 = vmul.f32 %v1443, 0.1
    %v1540 = vmul.f32 %v1444, 0.1
    %v1541 = vmul.f32 %v1445, 0.1
    %v1542 = vmul.f32 %v1446, 0.1
    %v1543 = vmul.f32 %v1447, 0.1
    %v1544 = vmul.f32 %v1448, 0.1
    %v1545 = vmul.f32 %v1449, 0.1
    %v1546 = vmul.f32 %v1450, 0.1
    %v1547 = vmul.f32 %v1451, 0.1
    %v1548 = vmul.f32 %v1452, 0.1
    %v1549 = vmul.f32 %v1453, 0.1
    %v1550 = vmul.f32 %v1454, 0.1
    %v1551 = vmul.f32 %v1455, 0.1
    %v1552 = vmul.f32 %v1456, 0.1
    %v1553 = vmul.f32 %v1457, 0.1
    %v1554 = vmul.f32 %v1458, 0.1
    %v1555 = vmul.f32 %v1459, 0.1
    %v1556 = vmul.f32 %v1460, 0.1
    %v1557 = vmax.f32 %v1365, %v1461
    %v1558 = vmax.f32 %v1366, %v1462
    %v1559 = vmax.f32 %v1367, %v1463
    %v1560 = vmax.f32 %v1368, %v1464
    %v1561 = vmax.f32 %v1369, %v1465
    %v1562 = vmax.f32 %v1370, %v1466
    %v1563 = vmax.f32 %v1371, %v1467
    %v1564 = vmax.f32 %v1372, %v1468
    %v1565 = vmax.f32 %v1373, %v1469
    %v1566 = vmax.f32 %v1374, %v1470
    %v1567 = vmax.f32 %v1375, %v1471
    %v1568 = vmax.f32 %v1376, %v1472
    %v1569 = vmax.f32 %v1377, %v1473
    %v1570 = vmax.f32 %v1378, %v1474
    %v1571 = vmax.f32 %v1379, %v1475
    %v1572 = vmax.f32 %v1380, %v1476
    %v1573 = vmax.f32 %v1381, %v1477
    %v1574 = vmax.f32 %v1382, %v1478
    %v1575 = vmax.f32 %v1383, %v1479
    %v1576 = vmax.f32 %v1384, %v1480
    %v1577 = vmax.f32 %v1385, %v1481
    %v1578 = vmax.f32 %v1386, %v1482
    %v1579 = vmax.f32 %v1387, %v1483
    %v1580 = vmax.f32 %v1388, %v1484
    %v1581 = vmax.f32 %v1389, %v1485
    %v1582 = vmax.f32 %v1390, %v1486
    %v1583 = vmax.f32 %v1391, %v1487
    %v1584 = vmax.f32 %v1392, %v1488
    %v1585 = vmax.f32 %v1393, %v1489
    %v1586 = vmax.f32 %v1394, %v1490
    %v1587 = vmax.f32 %v1395, %v1491
    %v1588 = vmax.f32 %v1396, %v1492
    %v1589 = vmax.f32 %v1397, %v1493
    %v1590 = vmax.f32 %v1398, %v1494
    %v1591 = vmax.f32 %v1399, %v1495
    %v1592 = vmax.f32 %v1400, %v1496
    %v1593 = vmax.f32 %v1401, %v1497
    %v1594 = vmax.f32 %v1402, %v1498
    %v1595 = vmax.f32 %v1403, %v1499
    %v1596 = vmax.f32 %v1404, %v1500
    %v1597 = vmax.f32 %v1405, %v1501
    %v1598 = vmax.f32 %v1406, %v1502
    %v1599 = vmax.f32 %v1407, %v1503
    %v1600 = vmax.f32 %v1408, %v1504
    %v1601 = vmax.f32 %v1409, %v1505
    %v1602 = vmax.f32 %v1410, %v1506
    %v1603 = vmax.f32 %v1411, %v1507
    %v1604 = vmax.f32 %v1412, %v1508
    %v1605 = vmax.f32 %v1413, %v1509
    %v1606 = vmax.f32 %v1414, %v1510
    %v1607 = vmax.f32 %v1415, %v1511
    %v1608 = vmax.f32 %v1416, %v1512
    %v1609 = vmax.f32 %v1417, %v1513
    %v1610 = vmax.f32 %v1418, %v1514
    %v1611 = vmax.f32 %v1419, %v1515
    %v1612 = vmax.f32 %v1420, %v1516
    %v1613 = vmax.f32 %v1421, %v1517
    %v1614 = vmax.f32 %v1422, %v1518
    %v1615 = vmax.f32 %v1423, %v1519
    %v1616 = vmax.f32 %v1424, %v1520
    %v1617 = vmax.f32 %v1425, %v1521
    %v1618 = vmax.f32 %v1426, %v1522
    %v1619 = vmax.f32 %v1427, %v1523
    %v1620 = vmax.f32 %v1428, %v1524
    %v1621 = vmax.f32 %v1429, %v1525
    %v1622 = vmax.f32 %v1430, %v1526
    %v1623 = vmax.f32 %v1431, %v1527
    %v1624 = vmax.f32 %v1432, %v1528
    %v1625 = vmax.f32 %v1433, %v1529
    %v1626 = vmax.f32 %v1434, %v1530
    %v1627 = vmax.f32 %v1435, %v1531
    %v1628 = vmax.f32 %v1436, %v1532
    %v1629 = vmax.f32 %v1437, %v1533
    %v1630 = vmax.f32 %v1438, %v1534
    %v1631 = vmax.f32 %v1439, %v1535
    %v1632 = vmax.f32 %v1440, %v1536
    %v1633 = vmax.f32 %v1441, %v1537
    %v1634 = vmax.f32 %v1442, %v1538
    %v1635 = vmax.f32 %v1443, %v1539
    %v1636 = vmax.f32 %v1444, %v1540
    %v1637 = vmax.f32 %v1445, %v1541
    %v1638 = vmax.f32 %v1446, %v1542
    %v1639 = vmax.f32 %v1447, %v1543
    %v1640 = vmax.f32 %v1448, %v1544
    %v1641 = vmax.f32 %v1449, %v1545
    %v1642 = vmax.f32 %v1450, %v1546
    %v1643 = vmax.f32 %v1451, %v1547
    %v1644 = vmax.f32 %v1452, %v1548
    %v1645 = vmax.f32 %v1453, %v1549
    %v1646 = vmax.f32 %v1454, %v1550
    %v1647 = vmax.f32 %v1455, %v1551
    %v1648 = vmax.f32 %v1456, %v1552
    %v1649 = vmax.f32 %v1457, %v1553
    %v1650 = vmax.f32 %v1458, %v1554
    %v1651 = vmax.f32 %v1459, %v1555
    %v1652 = vmax.f32 %v1460, %v1556
    %s1653 = scalar_lea.vmem [#allocation7], 3
    %v1654 = vld [vmem:[%s1653] ss:$8 sm:$0x3]
    %s1655 = scalar_lea.vmem [#allocation7], 4
    %v1656 = vld [vmem:[%s1655] ss:$8 sm:$0x3]
    %s1657 = scalar_lea.vmem [#allocation7], 5
    %v1658 = vld [vmem:[%s1657] ss:$8 sm:$0x3]
    %v1659 = vpack.c.bf16 %v1560, %v1557
    %v1660 = vpack.c.bf16 %v1561, %v1558
    %v1661 = vpack.c.bf16 %v1562, %v1559
    %v1662 = vpack.c.bf16 %v1566, %v1563
    %v1663 = vpack.c.bf16 %v1567, %v1564
    %v1664 = vpack.c.bf16 %v1568, %v1565
    %v1665 = vpack.c.bf16 %v1572, %v1569
    %v1666 = vpack.c.bf16 %v1573, %v1570
    %v1667 = vpack.c.bf16 %v1574, %v1571
    %v1668 = vpack.c.bf16 %v1578, %v1575
    %v1669 = vpack.c.bf16 %v1579, %v1576
    %v1670 = vpack.c.bf16 %v1580, %v1577
    %v1671 = vpack.c.bf16 %v1584, %v1581
    %v1672 = vpack.c.bf16 %v1585, %v1582
    %v1673 = vpack.c.bf16 %v1586, %v1583
    %v1674 = vpack.c.bf16 %v1590, %v1587
    %v1675 = vpack.c.bf16 %v1591, %v1588
    %v1676 = vpack.c.bf16 %v1592, %v1589
    %v1677 = vpack.c.bf16 %v1596, %v1593
    %v1678 = vpack.c.bf16 %v1597, %v1594
    %v1679 = vpack.c.bf16 %v1598, %v1595
    %v1680 = vpack.c.bf16 %v1602, %v1599
    %v1681 = vpack.c.bf16 %v1603, %v1600
    %v1682 = vpack.c.bf16 %v1604, %v1601
    %v1683 = vpack.c.bf16 %v1608, %v1605
    %v1684 = vpack.c.bf16 %v1609, %v1606
    %v1685 = vpack.c.bf16 %v1610, %v1607
    %v1686 = vpack.c.bf16 %v1614, %v1611
    %v1687 = vpack.c.bf16 %v1615, %v1612
    %v1688 = vpack.c.bf16 %v1616, %v1613
    %v1689 = vpack.c.bf16 %v1620, %v1617
    %v1690 = vpack.c.bf16 %v1621, %v1618
    %v1691 = vpack.c.bf16 %v1622, %v1619
    %v1692 = vpack.c.bf16 %v1626, %v1623
    %v1693 = vpack.c.bf16 %v1627, %v1624
    %v1694 = vpack.c.bf16 %v1628, %v1625
    %v1695 = vpack.c.bf16 %v1632, %v1629
    %v1696 = vpack.c.bf16 %v1633, %v1630
    %v1697 = vpack.c.bf16 %v1634, %v1631
    %v1698 = vpack.c.bf16 %v1638, %v1635
    %v1699 = vpack.c.bf16 %v1639, %v1636
    %v1700 = vpack.c.bf16 %v1640, %v1637
    %v1701 = vpack.c.bf16 %v1644, %v1641
    %v1702 = vpack.c.bf16 %v1645, %v1642
    %v1703 = vpack.c.bf16 %v1646, %v1643
    %v1704 = vpack.c.bf16 %v1650, %v1647
    %v1705 = vpack.c.bf16 %v1651, %v1648
    %v1706 = vpack.c.bf16 %v1652, %v1649
    %v1707 = vld [vmem:[#allocation2] sm:$0xff]
    %v1708 = vld [vmem:[#allocation2 + $0x8] sm:$0xff]
    %v1709 = vld [vmem:[#allocation2 + $0x10] sm:$0xff]
    %v1710 = vld [vmem:[#allocation2 + $0x18] sm:$0xff]
    %v1711 = vld [vmem:[#allocation2 + $0x20] sm:$0xff]
    %v1712 = vld [vmem:[#allocation2 + $0x28] sm:$0xff]
    %v1713 = vld [vmem:[#allocation2 + $0x30] sm:$0xff]
    %v1714 = vld [vmem:[#allocation2 + $0x38] sm:$0xff]
    %v1715 = vld [vmem:[#allocation2 + $0x40] sm:$0xff]
    %v1716 = vld [vmem:[#allocation2 + $0x48] sm:$0xff]
    %v1717 = vld [vmem:[#allocation2 + $0x50] sm:$0xff]
    %v1718 = vld [vmem:[#allocation2 + $0x58] sm:$0xff]
    %v1719 = vld [vmem:[#allocation2 + $0x60] sm:$0xff]
    %v1720 = vld [vmem:[#allocation2 + $0x68] sm:$0xff]
    %v1721 = vld [vmem:[#allocation2 + $0x70] sm:$0xff]
    %v1722 = vld [vmem:[#allocation2 + $0x78] sm:$0xff]
    %v1723 = vld [vmem:[#allocation2 + $0x80] sm:$0xff]
    %v1724 = vld [vmem:[#allocation2 + $0x88] sm:$0xff]
    %v1725 = vld [vmem:[#allocation2 + $0x90] sm:$0xff]
    %v1726 = vld [vmem:[#allocation2 + $0x98] sm:$0xff]
    %v1727 = vld [vmem:[#allocation2 + $0xa0] sm:$0xff]
    %v1728 = vld [vmem:[#allocation2 + $0xa8] sm:$0xff]
    %v1729 = vld [vmem:[#allocation2 + $0xb0] sm:$0xff]
    %v1730 = vld [vmem:[#allocation2 + $0xb8] sm:$0xff]
    %v1731 = vld [vmem:[#allocation2 + $0xc0] sm:$0xff]
    %v1732 = vld [vmem:[#allocation2 + $0xc8] sm:$0xff]
    %v1733 = vld [vmem:[#allocation2 + $0xd0] sm:$0xff]
    %v1734 = vld [vmem:[#allocation2 + $0xd8] sm:$0xff]
    %v1735 = vld [vmem:[#allocation2 + $0xe0] sm:$0xff]
    %v1736 = vld [vmem:[#allocation2 + $0xe8] sm:$0xff]
    %v1737 = vld [vmem:[#allocation2 + $0xf0] sm:$0xff]
    %v1738 = vld [vmem:[#allocation2 + $0xf8] sm:$0xff]
    %v1739 = vld [vmem:[#allocation2 + $0x100] sm:$0xff]
    %v1740 = vld [vmem:[#allocation2 + $0x108] sm:$0xff]
    %v1741 = vld [vmem:[#allocation2 + $0x110] sm:$0xff]
    %v1742 = vld [vmem:[#allocation2 + $0x118] sm:$0xff]
    %v1743 = vld [vmem:[#allocation2 + $0x120] sm:$0xff]
    %v1744 = vld [vmem:[#allocation2 + $0x128] sm:$0xff]
    %v1745 = vld [vmem:[#allocation2 + $0x130] sm:$0xff]
    %v1746 = vld [vmem:[#allocation2 + $0x138] sm:$0xff]
    %v1747 = vld [vmem:[#allocation2 + $0x140] sm:$0xff]
    %v1748 = vld [vmem:[#allocation2 + $0x148] sm:$0xff]
    %v1749 = vld [vmem:[#allocation2 + $0x150] sm:$0xff]
    %v1750 = vld [vmem:[#allocation2 + $0x158] sm:$0xff]
    %v1751 = vld [vmem:[#allocation2 + $0x160] sm:$0xff]
    %v1752 = vld [vmem:[#allocation2 + $0x168] sm:$0xff]
    %v1753 = vld [vmem:[#allocation2 + $0x170] sm:$0xff]
    %v1754 = vld [vmem:[#allocation2 + $0x178] sm:$0xff]
    %v1756 = vlaneseq
    %v1757 = vshrl.u32 %v1756, 7
    %v1758 = vsub.s32 0, %v1757
    %v1759 = vrot.slane %v1654, %v1758
    %v1760 = vlaneseq
    %v1761 = vshrl.u32 %v1760, 7
    %v1762 = vsub.s32 1, %v1761
    %v1763 = vrot.slane %v1654, %v1762
    %v1814 = vunpack.c.l.b16 %v1707
    %v1815 = vunpack.c.h.b16 %v1707
    %v1816 = vunpack.c.l.b16 %v1708
    %v1817 = vunpack.c.h.b16 %v1708
    %v1818 = vunpack.c.l.b16 %v1709
    %v1819 = vunpack.c.h.b16 %v1709
    %v1820 = vunpack.c.l.b16 %v1710
    %v1821 = vunpack.c.h.b16 %v1710
    %v1822 = vunpack.c.l.b16 %v1711
    %v1823 = vunpack.c.h.b16 %v1711
    %v1824 = vunpack.c.l.b16 %v1712
    %v1825 = vunpack.c.h.b16 %v1712
    %v1826 = vunpack.c.l.b16 %v1713
    %v1827 = vunpack.c.h.b16 %v1713
    %v1828 = vunpack.c.l.b16 %v1714
    %v1829 = vunpack.c.h.b16 %v1714
    %v1830 = vunpack.c.l.b16 %v1715
    %v1831 = vunpack.c.h.b16 %v1715
    %v1832 = vunpack.c.l.b16 %v1716
    %v1833 = vunpack.c.h.b16 %v1716
    %v1834 = vunpack.c.l.b16 %v1717
    %v1835 = vunpack.c.h.b16 %v1717
    %v1836 = vunpack.c.l.b16 %v1718
    %v1837 = vunpack.c.h.b16 %v1718
    %v1838 = vunpack.c.l.b16 %v1719
    %v1839 = vunpack.c.h.b16 %v1719
    %v1840 = vunpack.c.l.b16 %v1720
    %v1841 = vunpack.c.h.b16 %v1720
    %v1842 = vunpack.c.l.b16 %v1721
    %v1843 = vunpack.c.h.b16 %v1721
    %v1844 = vunpack.c.l.b16 %v1722
    %v1845 = vunpack.c.h.b16 %v1722
    %v1846 = vunpack.c.l.b16 %v1723
    %v1847 = vunpack.c.h.b16 %v1723
    %v1848 = vunpack.c.l.b16 %v1724
    %v1849 = vunpack.c.h.b16 %v1724
    %v1850 = vunpack.c.l.b16 %v1725
    %v1851 = vunpack.c.h.b16 %v1725
    %v1852 = vunpack.c.l.b16 %v1726
    %v1853 = vunpack.c.h.b16 %v1726
    %v1854 = vunpack.c.l.b16 %v1727
    %v1855 = vunpack.c.h.b16 %v1727
    %v1856 = vunpack.c.l.b16 %v1728
    %v1857 = vunpack.c.h.b16 %v1728
    %v1858 = vunpack.c.l.b16 %v1729
    %v1859 = vunpack.c.h.b16 %v1729
    %v1860 = vunpack.c.l.b16 %v1730
    %v1861 = vunpack.c.h.b16 %v1730
    %v1862 = vunpack.c.l.b16 %v1731
    %v1863 = vunpack.c.h.b16 %v1731
    %v1864 = vunpack.c.l.b16 %v1732
    %v1865 = vunpack.c.h.b16 %v1732
    %v1866 = vunpack.c.l.b16 %v1733
    %v1867 = vunpack.c.h.b16 %v1733
    %v1868 = vunpack.c.l.b16 %v1734
    %v1869 = vunpack.c.h.b16 %v1734
    %v1870 = vunpack.c.l.b16 %v1735
    %v1871 = vunpack.c.h.b16 %v1735
    %v1872 = vunpack.c.l.b16 %v1736
    %v1873 = vunpack.c.h.b16 %v1736
    %v1874 = vunpack.c.l.b16 %v1737
    %v1875 = vunpack.c.h.b16 %v1737
    %v1876 = vunpack.c.l.b16 %v1738
    %v1877 = vunpack.c.h.b16 %v1738
    %v1878 = vunpack.c.l.b16 %v1739
    %v1879 = vunpack.c.h.b16 %v1739
    %v1880 = vunpack.c.l.b16 %v1740
    %v1881 = vunpack.c.h.b16 %v1740
    %v1882 = vunpack.c.l.b16 %v1741
    %v1883 = vunpack.c.h.b16 %v1741
    %v1884 = vunpack.c.l.b16 %v1742
    %v1885 = vunpack.c.h.b16 %v1742
    %v1886 = vunpack.c.l.b16 %v1743
    %v1887 = vunpack.c.h.b16 %v1743
    %v1888 = vunpack.c.l.b16 %v1744
    %v1889 = vunpack.c.h.b16 %v1744
    %v1890 = vunpack.c.l.b16 %v1745
    %v1891 = vunpack.c.h.b16 %v1745
    %v1892 = vunpack.c.l.b16 %v1746
    %v1893 = vunpack.c.h.b16 %v1746
    %v1894 = vunpack.c.l.b16 %v1747
    %v1895 = vunpack.c.h.b16 %v1747
    %v1896 = vunpack.c.l.b16 %v1748
    %v1897 = vunpack.c.h.b16 %v1748
    %v1898 = vunpack.c.l.b16 %v1749
    %v1899 = vunpack.c.h.b16 %v1749
    %v1900 = vunpack.c.l.b16 %v1750
    %v1901 = vunpack.c.h.b16 %v1750
    %v1902 = vunpack.c.l.b16 %v1751
    %v1903 = vunpack.c.h.b16 %v1751
    %v1904 = vunpack.c.l.b16 %v1752
    %v1905 = vunpack.c.h.b16 %v1752
    %v1906 = vunpack.c.l.b16 %v1753
    %v1907 = vunpack.c.h.b16 %v1753
    %v1908 = vunpack.c.l.b16 %v1754
    %v1909 = vunpack.c.h.b16 %v1754
    %v1910 = vpack.c.b16 %v1816, %v1814
    %v1911 = vpack.c.b16 %v1817, %v1815
    %v1912 = vpack.c.b16 %v1820, %v1818
    %v1913 = vpack.c.b16 %v1821, %v1819
    %v1914 = vpack.c.b16 %v1824, %v1822
    %v1915 = vpack.c.b16 %v1825, %v1823
    %v1916 = vpack.c.b16 %v1828, %v1826
    %v1917 = vpack.c.b16 %v1829, %v1827
    %v1918 = vpack.c.b16 %v1832, %v1830
    %v1919 = vpack.c.b16 %v1833, %v1831
    %v1920 = vpack.c.b16 %v1836, %v1834
    %v1921 = vpack.c.b16 %v1837, %v1835
    %v1922 = vpack.c.b16 %v1840, %v1838
    %v1923 = vpack.c.b16 %v1841, %v1839
    %v1924 = vpack.c.b16 %v1844, %v1842
    %v1925 = vpack.c.b16 %v1845, %v1843
    %v1926 = vpack.c.b16 %v1848, %v1846
    %v1927 = vpack.c.b16 %v1849, %v1847
    %v1928 = vpack.c.b16 %v1852, %v1850
    %v1929 = vpack.c.b16 %v1853, %v1851
    %v1930 = vpack.c.b16 %v1856, %v1854
    %v1931 = vpack.c.b16 %v1857, %v1855
    %v1932 = vpack.c.b16 %v1860, %v1858
    %v1933 = vpack.c.b16 %v1861, %v1859
    %v1934 = vpack.c.b16 %v1864, %v1862
    %v1935 = vpack.c.b16 %v1865, %v1863
    %v1936 = vpack.c.b16 %v1868, %v1866
    %v1937 = vpack.c.b16 %v1869, %v1867
    %v1938 = vpack.c.b16 %v1872, %v1870
    %v1939 = vpack.c.b16 %v1873, %v1871
    %v1940 = vpack.c.b16 %v1876, %v1874
    %v1941 = vpack.c.b16 %v1877, %v1875
    %v1942 = vpack.c.b16 %v1880, %v1878
    %v1943 = vpack.c.b16 %v1881, %v1879
    %v1944 = vpack.c.b16 %v1884, %v1882
    %v1945 = vpack.c.b16 %v1885, %v1883
    %v1946 = vpack.c.b16 %v1888, %v1886
    %v1947 = vpack.c.b16 %v1889, %v1887
    %v1948 = vpack.c.b16 %v1892, %v1890
    %v1949 = vpack.c.b16 %v1893, %v1891
    %v1950 = vpack.c.b16 %v1896, %v1894
    %v1951 = vpack.c.b16 %v1897, %v1895
    %v1952 = vpack.c.b16 %v1900, %v1898
    %v1953 = vpack.c.b16 %v1901, %v1899
    %v1954 = vpack.c.b16 %v1904, %v1902
    %v1955 = vpack.c.b16 %v1905, %v1903
    %v1956 = vpack.c.b16 %v1908, %v1906
    %v1957 = vpack.c.b16 %v1909, %v1907
    %2006 = vmatprep.subr.bf16.mxu0 %v1911
    %2007 = vmatpush1.bf16.msra.mxu0 %v1910
    %2008 = vmatprep.subr.bf16.mxu0 %v1913
    %2009 = vmatpush1.bf16.msra.mxu0 %v1912
    %2010 = vmatprep.subr.bf16.mxu0 %v1915
    %2011 = vmatpush1.bf16.msra.mxu0 %v1914
    %2012 = vmatprep.subr.bf16.mxu0 %v1917
    %2013 = vmatpush1.bf16.msra.mxu0 %v1916
    %2014 = vmatprep.subr.bf16.mxu0 %v1919
    %2015 = vmatpush1.bf16.msra.mxu0 %v1918
    %2016 = vmatprep.subr.bf16.mxu0 %v1921
    %2017 = vmatpush1.bf16.msra.mxu0 %v1920
    %2018 = vmatprep.subr.bf16.mxu0 %v1923
    %2019 = vmatpush1.bf16.msra.mxu0 %v1922
    %2020 = vmatprep.subr.bf16.mxu0 %v1925
    %2021 = vmatpush1.bf16.msra.mxu0 %v1924
    %2022 = vmatprep.subr.bf16.mxu0 %v1927
    %2023 = vmatpush1.bf16.msra.mxu0 %v1926
    %2024 = vmatprep.subr.bf16.mxu0 %v1929
    %2025 = vmatpush1.bf16.msra.mxu0 %v1928
    %2026 = vmatprep.subr.bf16.mxu0 %v1931
    %2027 = vmatpush1.bf16.msra.mxu0 %v1930
    %2028 = vmatprep.subr.bf16.mxu0 %v1933
    %2029 = vmatpush1.bf16.msra.mxu0 %v1932
    %2030 = vmatprep.subr.bf16.mxu0 %v1935
    %2031 = vmatpush1.bf16.msra.mxu0 %v1934
    %2032 = vmatprep.subr.bf16.mxu0 %v1937
    %2033 = vmatpush1.bf16.msra.mxu0 %v1936
    %2034 = vmatprep.subr.bf16.mxu0 %v1939
    %2035 = vmatpush1.bf16.msra.mxu0 %v1938
    %2036 = vmatprep.subr.bf16.mxu0 %v1941
    %2037 = vmatpush1.bf16.msra.mxu0 %v1940
    %2038 = vmatprep.mubr.bf16.mxu0 %v1660
    %2039 = vmatmul.mubr.bf16.gmra.mrb[0].mxu0 %v1659
    %v2040 = vpop.f32.mrb[0].mxu0
    %v2041 = vadd.f32 %v1759, %v2040
    %v2042 = vpop.f32.mrb[0].mxu0
    %v2043 = vadd.f32 %v1763, %v2042
    %v2044 = vpop.f32.mrb[0].mxu0
    %v2045 = vadd.f32 %v1759, %v2044
    %v2046 = vpop.f32.mrb[0].mxu0
    %v2047 = vadd.f32 %v1763, %v2046
    %2048 = vmatprep.mubr.bf16.mxu0 %v1663
    %2049 = vmatmul.mubr.bf16.gmra.mrb[0].mxu0 %v1662
    %v2050 = vpop.f32.mrb[0].mxu0
    %v2051 = vadd.f32 %v1759, %v2050
    %v2052 = vpop.f32.mrb[0].mxu0
    %v2053 = vadd.f32 %v1763, %v2052
    %v2054 = vpop.f32.mrb[0].mxu0
    %v2055 = vadd.f32 %v1759, %v2054
    %v2056 = vpop.f32.mrb[0].mxu0
    %v2057 = vadd.f32 %v1763, %v2056
    %2058 = vmatprep.mubr.bf16.mxu0 %v1666
    %2059 = vmatmul.mubr.bf16.gmra.mrb[0].mxu0 %v1665
    %v2060 = vpop.f32.mrb[0].mxu0
    %v2061 = vadd.f32 %v1759, %v2060
    %v2062 = vpop.f32.mrb[0].mxu0
    %v2063 = vadd.f32 %v1763, %v2062
    %v2064 = vpop.f32.mrb[0].mxu0
    %v2065 = vadd.f32 %v1759, %v2064
    %v2066 = vpop.f32.mrb[0].mxu0
    %v2067 = vadd.f32 %v1763, %v2066
    %2068 = vmatprep.mubr.bf16.mxu0 %v1669
    %2069 = vmatmul.mubr.bf16.gmra.mrb[0].mxu0 %v1668
    %v2070 = vpop.f32.mrb[0].mxu0
    %v2071 = vadd.f32 %v1759, %v2070
    %v2072 = vpop.f32.mrb[0].mxu0
    %v2073 = vadd.f32 %v1763, %v2072
    %v2074 = vpop.f32.mrb[0].mxu0
    %v2075 = vadd.f32 %v1759, %v2074
    %v2076 = vpop.f32.mrb[0].mxu0
    %v2077 = vadd.f32 %v1763, %v2076
    %2078 = vmatprep.mubr.bf16.mxu0 %v1672
    %2079 = vmatmul.mubr.bf16.gmra.mrb[0].mxu0 %v1671
    %v2080 = vpop.f32.mrb[0].mxu0
    %v2081 = vadd.f32 %v1759, %v2080
    %v2082 = vpop.f32.mrb[0].mxu0
    %v2083 = vadd.f32 %v1763, %v2082
    %v2084 = vpop.f32.mrb[0].mxu0
    %v2085 = vadd.f32 %v1759, %v2084
    %v2086 = vpop.f32.mrb[0].mxu0
    %v2087 = vadd.f32 %v1763, %v2086
    %2088 = vmatprep.mubr.bf16.mxu0 %v1675
    %2089 = vmatmul.mubr.bf16.gmra.mrb[0].mxu0 %v1674
    %v2090 = vpop.f32.mrb[0].mxu0
    %v2091 = vadd.f32 %v1759, %v2090
    %v2092 = vpop.f32.mrb[0].mxu0
    %v2093 = vadd.f32 %v1763, %v2092
    %v2094 = vpop.f32.mrb[0].mxu0
    %v2095 = vadd.f32 %v1759, %v2094
    %v2096 = vpop.f32.mrb[0].mxu0
    %v2097 = vadd.f32 %v1763, %v2096
    %2098 = vmatprep.mubr.bf16.mxu0 %v1678
    %2099 = vmatmul.mubr.bf16.gmra.mrb[0].mxu0 %v1677
    %v2100 = vpop.f32.mrb[0].mxu0
    %v2101 = vadd.f32 %v1759, %v2100
    %v2102 = vpop.f32.mrb[0].mxu0
    %v2103 = vadd.f32 %v1763, %v2102
    %v2104 = vpop.f32.mrb[0].mxu0
    %v2105 = vadd.f32 %v1759, %v2104
    %v2106 = vpop.f32.mrb[0].mxu0
    %v2107 = vadd.f32 %v1763, %v2106
    %2108 = vmatprep.mubr.bf16.mxu0 %v1681
    %2109 = vmatmul.mubr.bf16.gmra.mrb[0].mxu0 %v1680
    %v2110 = vpop.f32.mrb[0].mxu0
    %v2111 = vadd.f32 %v1759, %v2110
    %v2112 = vpop.f32.mrb[0].mxu0
    %v2113 = vadd.f32 %v1763, %v2112
    %v2114 = vpop.f32.mrb[0].mxu0
    %v2115 = vadd.f32 %v1759, %v2114
    %v2116 = vpop.f32.mrb[0].mxu0
    %v2117 = vadd.f32 %v1763, %v2116
    %2118 = vmatprep.mubr.bf16.mxu0 %v1684
    %2119 = vmatmul.mubr.bf16.gmra.mrb[0].mxu0 %v1683
    %v2120 = vpop.f32.mrb[0].mxu0
    %v2121 = vadd.f32 %v1759, %v2120
    %v2122 = vpop.f32.mrb[0].mxu0
    %v2123 = vadd.f32 %v1763, %v2122
    %v2124 = vpop.f32.mrb[0].mxu0
    %v2125 = vadd.f32 %v1759, %v2124
    %v2126 = vpop.f32.mrb[0].mxu0
    %v2127 = vadd.f32 %v1763, %v2126
    %2128 = vmatprep.mubr.bf16.mxu0 %v1687
    %2129 = vmatmul.mubr.bf16.gmra.mrb[0].mxu0 %v1686
    %v2130 = vpop.f32.mrb[0].mxu0
    %v2131 = vadd.f32 %v1759, %v2130
    %v2132 = vpop.f32.mrb[0].mxu0
    %v2133 = vadd.f32 %v1763, %v2132
    %v2134 = vpop.f32.mrb[0].mxu0
    %v2135 = vadd.f32 %v1759, %v2134
    %v2136 = vpop.f32.mrb[0].mxu0
    %v2137 = vadd.f32 %v1763, %v2136
    %2138 = vmatprep.mubr.bf16.mxu0 %v1690
    %2139 = vmatmul.mubr.bf16.gmra.mrb[0].mxu0 %v1689
    %v2140 = vpop.f32.mrb[0].mxu0
    %v2141 = vadd.f32 %v1759, %v2140
    %v2142 = vpop.f32.mrb[0].mxu0
    %v2143 = vadd.f32 %v1763, %v2142
    %v2144 = vpop.f32.mrb[0].mxu0
    %v2145 = vadd.f32 %v1759, %v2144
    %v2146 = vpop.f32.mrb[0].mxu0
    %v2147 = vadd.f32 %v1763, %v2146
    %2148 = vmatprep.mubr.bf16.mxu0 %v1693
    %2149 = vmatmul.mubr.bf16.gmra.mrb[0].mxu0 %v1692
    %v2150 = vpop.f32.mrb[0].mxu0
    %v2151 = vadd.f32 %v1759, %v2150
    %v2152 = vpop.f32.mrb[0].mxu0
    %v2153 = vadd.f32 %v1763, %v2152
    %v2154 = vpop.f32.mrb[0].mxu0
    %v2155 = vadd.f32 %v1759, %v2154
    %v2156 = vpop.f32.mrb[0].mxu0
    %v2157 = vadd.f32 %v1763, %v2156
    %2158 = vmatprep.mubr.bf16.mxu0 %v1696
    %2159 = vmatmul.mubr.bf16.gmra.mrb[0].mxu0 %v1695
    %v2160 = vpop.f32.mrb[0].mxu0
    %v2161 = vadd.f32 %v1759, %v2160
    %v2162 = vpop.f32.mrb[0].mxu0
    %v2163 = vadd.f32 %v1763, %v2162
    %v2164 = vpop.f32.mrb[0].mxu0
    %v2165 = vadd.f32 %v1759, %v2164
    %v2166 = vpop.f32.mrb[0].mxu0
    %v2167 = vadd.f32 %v1763, %v2166
    %2168 = vmatprep.mubr.bf16.mxu0 %v1699
    %2169 = vmatmul.mubr.bf16.gmra.mrb[0].mxu0 %v1698
    %v2170 = vpop.f32.mrb[0].mxu0
    %v2171 = vadd.f32 %v1759, %v2170
    %v2172 = vpop.f32.mrb[0].mxu0
    %v2173 = vadd.f32 %v1763, %v2172
    %v2174 = vpop.f32.mrb[0].mxu0
    %v2175 = vadd.f32 %v1759, %v2174
    %v2176 = vpop.f32.mrb[0].mxu0
    %v2177 = vadd.f32 %v1763, %v2176
    %2178 = vmatprep.mubr.bf16.mxu0 %v1702
    %2179 = vmatmul.mubr.bf16.gmra.mrb[0].mxu0 %v1701
    %v2180 = vpop.f32.mrb[0].mxu0
    %v2181 = vadd.f32 %v1759, %v2180
    %v2182 = vpop.f32.mrb[0].mxu0
    %v2183 = vadd.f32 %v1763, %v2182
    %v2184 = vpop.f32.mrb[0].mxu0
    %v2185 = vadd.f32 %v1759, %v2184
    %v2186 = vpop.f32.mrb[0].mxu0
    %v2187 = vadd.f32 %v1763, %v2186
    %2188 = vmatprep.mubr.bf16.mxu0 %v1705
    %2189 = vmatmul.mubr.bf16.gmra.mrb[0].mxu0 %v1704
    %v2190 = vpop.f32.mrb[0].mxu0
    %v2191 = vadd.f32 %v1759, %v2190
    %v2192 = vpop.f32.mrb[0].mxu0
    %v2193 = vadd.f32 %v1763, %v2192
    %v2194 = vpop.f32.mrb[0].mxu0
    %v2195 = vadd.f32 %v1759, %v2194
    %v2196 = vpop.f32.mrb[0].mxu0
    %v2197 = vadd.f32 %v1763, %v2196
    %2198 = vdwg.mxu0
    %2199 = vmatprep.subr.bf16.mxu0 %v1943
    %2200 = vmatpush1.bf16.msra.mxu0 %v1942
    %2201 = vmatprep.subr.bf16.mxu0 %v1945
    %2202 = vmatpush1.bf16.msra.mxu0 %v1944
    %2203 = vmatprep.subr.bf16.mxu0 %v1947
    %2204 = vmatpush1.bf16.msra.mxu0 %v1946
    %2205 = vmatprep.subr.bf16.mxu0 %v1949
    %2206 = vmatpush1.bf16.msra.mxu0 %v1948
    %2207 = vmatprep.subr.bf16.mxu0 %v1951
    %2208 = vmatpush1.bf16.msra.mxu0 %v1950
    %2209 = vmatprep.subr.bf16.mxu0 %v1953
    %2210 = vmatpush1.bf16.msra.mxu0 %v1952
    %2211 = vmatprep.subr.bf16.mxu0 %v1955
    %2212 = vmatpush1.bf16.msra.mxu0 %v1954
    %2213 = vmatprep.subr.bf16.mxu0 %v1957
    %2214 = vmatpush1.bf16.msra.mxu0 %v1956
    %2215 = vmatprep.subr.bf16.mxu0 0
    %2216 = vmatpush1.bf16.msra.mxu0 0
    %2217 = vmatprep.subr.bf16.mxu0 0
    %2218 = vmatpush1.bf16.msra.mxu0 0
    %2219 = vmatprep.subr.bf16.mxu0 0
    %2220 = vmatpush1.bf16.msra.mxu0 0
    %2221 = vmatprep.subr.bf16.mxu0 0
    %2222 = vmatpush1.bf16.msra.mxu0 0
    %2223 = vmatprep.subr.bf16.mxu0 0
    %2224 = vmatpush1.bf16.msra.mxu0 0
    %2225 = vmatprep.subr.bf16.mxu0 0
    %2226 = vmatpush1.bf16.msra.mxu0 0
    %2227 = vmatprep.subr.bf16.mxu0 0
    %2228 = vmatpush1.bf16.msra.mxu0 0
    %2229 = vmatprep.subr.bf16.mxu0 0
    %2230 = vmatpush1.bf16.msra.mxu0 0
    %2231 = vmatprep.mubr.bf16.mxu0 0
    %2232 = vmatmul.mubr.bf16.gmra.mrb[0].mxu0 %v1661
    %v2233 = vpop.f32.mrb[0].mxu0
    %v2234 = vadd.f32 %v2041, %v2233
    %v2235 = vpop.f32.mrb[0].mxu0
    %v2236 = vadd.f32 %v2043, %v2235
    %v2237 = vpop.f32.mrb[0].mxu0
    %v2238 = vadd.f32 %v2045, %v2237
    %v2239 = vpop.f32.mrb[0].mxu0
    %v2240 = vadd.f32 %v2047, %v2239
    %2241 = vmatprep.mubr.bf16.mxu0 0
    %2242 = vmatmul.mubr.bf16.gmra.mrb[0].mxu0 %v1664
    %v2243 = vpop.f32.mrb[0].mxu0
    %v2244 = vadd.f32 %v2051, %v2243
    %v2245 = vpop.f32.mrb[0].mxu0
    %v2246 = vadd.f32 %v2053, %v2245
    %v2247 = vpop.f32.mrb[0].mxu0
    %v2248 = vadd.f32 %v2055, %v2247
    %v2249 = vpop.f32.mrb[0].mxu0
    %v2250 = vadd.f32 %v2057, %v2249
    %2251 = vmatprep.mubr.bf16.mxu0 0
    %2252 = vmatmul.mubr.bf16.gmra.mrb[0].mxu0 %v1667
    %v2253 = vpop.f32.mrb[0].mxu0
    %v2254 = vadd.f32 %v2061, %v2253
    %v2255 = vpop.f32.mrb[0].mxu0
    %v2256 = vadd.f32 %v2063, %v2255
    %v2257 = vpop.f32.mrb[0].mxu0
    %v2258 = vadd.f32 %v2065, %v2257
    %v2259 = vpop.f32.mrb[0].mxu0
    %v2260 = vadd.f32 %v2067, %v2259
    %2261 = vmatprep.mubr.bf16.mxu0 0
    %2262 = vmatmul.mubr.bf16.gmra.mrb[0].mxu0 %v1670
    %v2263 = vpop.f32.mrb[0].mxu0
    %v2264 = vadd.f32 %v2071, %v2263
    %v2265 = vpop.f32.mrb[0].mxu0
    %v2266 = vadd.f32 %v2073, %v2265
    %v2267 = vpop.f32.mrb[0].mxu0
    %v2268 = vadd.f32 %v2075, %v2267
    %v2269 = vpop.f32.mrb[0].mxu0
    %v2270 = vadd.f32 %v2077, %v2269
    %2271 = vmatprep.mubr.bf16.mxu0 0
    %2272 = vmatmul.mubr.bf16.gmra.mrb[0].mxu0 %v1673
    %v2273 = vpop.f32.mrb[0].mxu0
    %v2274 = vadd.f32 %v2081, %v2273
    %v2275 = vpop.f32.mrb[0].mxu0
    %v2276 = vadd.f32 %v2083, %v2275
    %v2277 = vpop.f32.mrb[0].mxu0
    %v2278 = vadd.f32 %v2085, %v2277
    %v2279 = vpop.f32.mrb[0].mxu0
    %v2280 = vadd.f32 %v2087, %v2279
    %2281 = vmatprep.mubr.bf16.mxu0 0
    %2282 = vmatmul.mubr.bf16.gmra.mrb[0].mxu0 %v1676
    %v2283 = vpop.f32.mrb[0].mxu0
    %v2284 = vadd.f32 %v2091, %v2283
    %v2285 = vpop.f32.mrb[0].mxu0
    %v2286 = vadd.f32 %v2093, %v2285
    %v2287 = vpop.f32.mrb[0].mxu0
    %v2288 = vadd.f32 %v2095, %v2287
    %v2289 = vpop.f32.mrb[0].mxu0
    %v2290 = vadd.f32 %v2097, %v2289
    %2291 = vmatprep.mubr.bf16.mxu0 0
    %2292 = vmatmul.mubr.bf16.gmra.mrb[0].mxu0 %v1679
    %v2293 = vpop.f32.mrb[0].mxu0
    %v2294 = vadd.f32 %v2101, %v2293
    %v2295 = vpop.f32.mrb[0].mxu0
    %v2296 = vadd.f32 %v2103, %v2295
    %v2297 = vpop.f32.mrb[0].mxu0
    %v2298 = vadd.f32 %v2105, %v2297
    %v2299 = vpop.f32.mrb[0].mxu0
    %v2300 = vadd.f32 %v2107, %v2299
    %2301 = vmatprep.mubr.bf16.mxu0 0
    %2302 = vmatmul.mubr.bf16.gmra.mrb[0].mxu0 %v1682
    %v2303 = vpop.f32.mrb[0].mxu0
    %v2304 = vadd.f32 %v2111, %v2303
    %v2305 = vpop.f32.mrb[0].mxu0
    %v2306 = vadd.f32 %v2113, %v2305
    %v2307 = vpop.f32.mrb[0].mxu0
    %v2308 = vadd.f32 %v2115, %v2307
    %v2309 = vpop.f32.mrb[0].mxu0
    %v2310 = vadd.f32 %v2117, %v2309
    %2311 = vmatprep.mubr.bf16.mxu0 0
    %2312 = vmatmul.mubr.bf16.gmra.mrb[0].mxu0 %v1685
    %v2313 = vpop.f32.mrb[0].mxu0
    %v2314 = vadd.f32 %v2121, %v2313
    %v2315 = vpop.f32.mrb[0].mxu0
    %v2316 = vadd.f32 %v2123, %v2315
    %v2317 = vpop.f32.mrb[0].mxu0
    %v2318 = vadd.f32 %v2125, %v2317
    %v2319 = vpop.f32.mrb[0].mxu0
    %v2320 = vadd.f32 %v2127, %v2319
    %2321 = vmatprep.mubr.bf16.mxu0 0
    %2322 = vmatmul.mubr.bf16.gmra.mrb[0].mxu0 %v1688
    %v2323 = vpop.f32.mrb[0].mxu0
    %v2324 = vadd.f32 %v2131, %v2323
    %v2325 = vpop.f32.mrb[0].mxu0
    %v2326 = vadd.f32 %v2133, %v2325
    %v2327 = vpop.f32.mrb[0].mxu0
    %v2328 = vadd.f32 %v2135, %v2327
    %v2329 = vpop.f32.mrb[0].mxu0
    %v2330 = vadd.f32 %v2137, %v2329
    %2331 = vmatprep.mubr.bf16.mxu0 0
    %2332 = vmatmul.mubr.bf16.gmra.mrb[0].mxu0 %v1691
    %v2333 = vpop.f32.mrb[0].mxu0
    %v2334 = vadd.f32 %v2141, %v2333
    %v2335 = vpop.f32.mrb[0].mxu0
    %v2336 = vadd.f32 %v2143, %v2335
    %v2337 = vpop.f32.mrb[0].mxu0
    %v2338 = vadd.f32 %v2145, %v2337
    %v2339 = vpop.f32.mrb[0].mxu0
    %v2340 = vadd.f32 %v2147, %v2339
    %2341 = vmatprep.mubr.bf16.mxu0 0
    %2342 = vmatmul.mubr.bf16.gmra.mrb[0].mxu0 %v1694
    %v2343 = vpop.f32.mrb[0].mxu0
    %v2344 = vadd.f32 %v2151, %v2343
    %v2345 = vpop.f32.mrb[0].mxu0
    %v2346 = vadd.f32 %v2153, %v2345
    %v2347 = vpop.f32.mrb[0].mxu0
    %v2348 = vadd.f32 %v2155, %v2347
    %v2349 = vpop.f32.mrb[0].mxu0
    %v2350 = vadd.f32 %v2157, %v2349
    %2351 = vmatprep.mubr.bf16.mxu0 0
    %2352 = vmatmul.mubr.bf16.gmra.mrb[0].mxu0 %v1697
    %v2353 = vpop.f32.mrb[0].mxu0
    %v2354 = vadd.f32 %v2161, %v2353
    %v2355 = vpop.f32.mrb[0].mxu0
    %v2356 = vadd.f32 %v2163, %v2355
    %v2357 = vpop.f32.mrb[0].mxu0
    %v2358 = vadd.f32 %v2165, %v2357
    %v2359 = vpop.f32.mrb[0].mxu0
    %v2360 = vadd.f32 %v2167, %v2359
    %2361 = vmatprep.mubr.bf16.mxu0 0
    %2362 = vmatmul.mubr.bf16.gmra.mrb[0].mxu0 %v1700
    %v2363 = vpop.f32.mrb[0].mxu0
    %v2364 = vadd.f32 %v2171, %v2363
    %v2365 = vpop.f32.mrb[0].mxu0
    %v2366 = vadd.f32 %v2173, %v2365
    %v2367 = vpop.f32.mrb[0].mxu0
    %v2368 = vadd.f32 %v2175, %v2367
    %v2369 = vpop.f32.mrb[0].mxu0
    %v2370 = vadd.f32 %v2177, %v2369
    %2371 = vmatprep.mubr.bf16.mxu0 0
    %2372 = vmatmul.mubr.bf16.gmra.mrb[0].mxu0 %v1703
    %v2373 = vpop.f32.mrb[0].mxu0
    %v2374 = vadd.f32 %v2181, %v2373
    %v2375 = vpop.f32.mrb[0].mxu0
    %v2376 = vadd.f32 %v2183, %v2375
    %v2377 = vpop.f32.mrb[0].mxu0
    %v2378 = vadd.f32 %v2185, %v2377
    %v2379 = vpop.f32.mrb[0].mxu0
    %v2380 = vadd.f32 %v2187, %v2379
    %2381 = vmatprep.mubr.bf16.mxu0 0
    %2382 = vmatmul.mubr.bf16.gmra.mrb[0].mxu0 %v1706
    %v2383 = vpop.f32.mrb[0].mxu0
    %v2384 = vadd.f32 %v2191, %v2383
    %v2385 = vpop.f32.mrb[0].mxu0
    %v2386 = vadd.f32 %v2193, %v2385
    %v2387 = vpop.f32.mrb[0].mxu0
    %v2388 = vadd.f32 %v2195, %v2387
    %v2389 = vpop.f32.mrb[0].mxu0
    %v2390 = vadd.f32 %v2197, %v2389
    %2391 = vdwg.mxu0
    %v2392 = vadd.f32 %v2234, %v2236
    %2393 = vadd.xlane.f32.xlu0 %v2392
    %v2394 = vpop.xlane.xlu0 %2393
    %v2395 = vadd.f32 %v2238, %v2240
    %2396 = vadd.xlane.f32.xlu0 %v2395
    %v2397 = vpop.xlane.xlu0 %2396
    %v2398 = vadd.f32 %v2244, %v2246
    %2399 = vadd.xlane.f32.xlu0 %v2398
    %v2400 = vpop.xlane.xlu0 %2399
    %v2401 = vadd.f32 %v2248, %v2250
    %2402 = vadd.xlane.f32.xlu0 %v2401
    %v2403 = vpop.xlane.xlu0 %2402
    %v2404 = vadd.f32 %v2254, %v2256
    %2405 = vadd.xlane.f32.xlu0 %v2404
    %v2406 = vpop.xlane.xlu0 %2405
    %v2407 = vadd.f32 %v2258, %v2260
    %2408 = vadd.xlane.f32.xlu0 %v2407
    %v2409 = vpop.xlane.xlu0 %2408
    %v2410 = vadd.f32 %v2264, %v2266
    %2411 = vadd.xlane.f32.xlu0 %v2410
    %v2412 = vpop.xlane.xlu0 %2411
    %v2413 = vadd.f32 %v2268, %v2270
    %2414 = vadd.xlane.f32.xlu0 %v2413
    %v2415 = vpop.xlane.xlu0 %2414
    %v2416 = vadd.f32 %v2274, %v2276
    %2417 = vadd.xlane.f32.xlu0 %v2416
    %v2418 = vpop.xlane.xlu0 %2417
    %v2419 = vadd.f32 %v2278, %v2280
    %2420 = vadd.xlane.f32.xlu0 %v2419
    %v2421 = vpop.xlane.xlu0 %2420
    %v2422 = vadd.f32 %v2284, %v2286
    %2423 = vadd.xlane.f32.xlu0 %v2422
    %v2424 = vpop.xlane.xlu0 %2423
    %v2425 = vadd.f32 %v2288, %v2290
    %2426 = vadd.xlane.f32.xlu0 %v2425
    %v2427 = vpop.xlane.xlu0 %2426
    %v2428 = vadd.f32 %v2294, %v2296
    %2429 = vadd.xlane.f32.xlu0 %v2428
    %v2430 = vpop.xlane.xlu0 %2429
    %v2431 = vadd.f32 %v2298, %v2300
    %2432 = vadd.xlane.f32.xlu0 %v2431
    %v2433 = vpop.xlane.xlu0 %2432
    %v2434 = vadd.f32 %v2304, %v2306
    %2435 = vadd.xlane.f32.xlu0 %v2434
    %v2436 = vpop.xlane.xlu0 %2435
    %v2437 = vadd.f32 %v2308, %v2310
    %2438 = vadd.xlane.f32.xlu0 %v2437
    %v2439 = vpop.xlane.xlu0 %2438
    %v2440 = vadd.f32 %v2314, %v2316
    %2441 = vadd.xlane.f32.xlu0 %v2440
    %v2442 = vpop.xlane.xlu0 %2441
    %v2443 = vadd.f32 %v2318, %v2320
    %2444 = vadd.xlane.f32.xlu0 %v2443
    %v2445 = vpop.xlane.xlu0 %2444
    %v2446 = vadd.f32 %v2324, %v2326
    %2447 = vadd.xlane.f32.xlu0 %v2446
    %v2448 = vpop.xlane.xlu0 %2447
    %v2449 = vadd.f32 %v2328, %v2330
    %2450 = vadd.xlane.f32.xlu0 %v2449
    %v2451 = vpop.xlane.xlu0 %2450
    %v2452 = vadd.f32 %v2334, %v2336
    %2453 = vadd.xlane.f32.xlu0 %v2452
    %v2454 = vpop.xlane.xlu0 %2453
    %v2455 = vadd.f32 %v2338, %v2340
    %2456 = vadd.xlane.f32.xlu0 %v2455
    %v2457 = vpop.xlane.xlu0 %2456
    %v2458 = vadd.f32 %v2344, %v2346
    %2459 = vadd.xlane.f32.xlu0 %v2458
    %v2460 = vpop.xlane.xlu0 %2459
    %v2461 = vadd.f32 %v2348, %v2350
    %2462 = vadd.xlane.f32.xlu0 %v2461
    %v2463 = vpop.xlane.xlu0 %2462
    %v2464 = vadd.f32 %v2354, %v2356
    %2465 = vadd.xlane.f32.xlu0 %v2464
    %v2466 = vpop.xlane.xlu0 %2465
    %v2467 = vadd.f32 %v2358, %v2360
    %2468 = vadd.xlane.f32.xlu0 %v2467
    %v2469 = vpop.xlane.xlu0 %2468
    %v2470 = vadd.f32 %v2364, %v2366
    %2471 = vadd.xlane.f32.xlu0 %v2470
    %v2472 = vpop.xlane.xlu0 %2471
    %v2473 = vadd.f32 %v2368, %v2370
    %2474 = vadd.xlane.f32.xlu0 %v2473
    %v2475 = vpop.xlane.xlu0 %2474
    %v2476 = vadd.f32 %v2374, %v2376
    %2477 = vadd.xlane.f32.xlu0 %v2476
    %v2478 = vpop.xlane.xlu0 %2477
    %v2479 = vadd.f32 %v2378, %v2380
    %2480 = vadd.xlane.f32.xlu0 %v2479
    %v2481 = vpop.xlane.xlu0 %2480
    %v2482 = vadd.f32 %v2384, %v2386
    %2483 = vadd.xlane.f32.xlu0 %v2482
    %v2484 = vpop.xlane.xlu0 %2483
    %v2485 = vadd.f32 %v2388, %v2390
    %2486 = vadd.xlane.f32.xlu0 %v2485
    %v2487 = vpop.xlane.xlu0 %2486
    %v2488 = vrcp.pop 256.0
    %v2489 = vmul.f32 %v2394, %v2488
    %v2490 = vmul.f32 %v2397, %v2488
    %v2491 = vmul.f32 %v2400, %v2488
    %v2492 = vmul.f32 %v2403, %v2488
    %v2493 = vmul.f32 %v2406, %v2488
    %v2494 = vmul.f32 %v2409, %v2488
    %v2495 = vmul.f32 %v2412, %v2488
    %v2496 = vmul.f32 %v2415, %v2488
    %v2497 = vmul.f32 %v2418, %v2488
    %v2498 = vmul.f32 %v2421, %v2488
    %v2499 = vmul.f32 %v2424, %v2488
    %v2500 = vmul.f32 %v2427, %v2488
    %v2501 = vmul.f32 %v2430, %v2488
    %v2502 = vmul.f32 %v2433, %v2488
    %v2503 = vmul.f32 %v2436, %v2488
    %v2504 = vmul.f32 %v2439, %v2488
    %v2505 = vmul.f32 %v2442, %v2488
    %v2506 = vmul.f32 %v2445, %v2488
    %v2507 = vmul.f32 %v2448, %v2488
    %v2508 = vmul.f32 %v2451, %v2488
    %v2509 = vmul.f32 %v2454, %v2488
    %v2510 = vmul.f32 %v2457, %v2488
    %v2511 = vmul.f32 %v2460, %v2488
    %v2512 = vmul.f32 %v2463, %v2488
    %v2513 = vmul.f32 %v2466, %v2488
    %v2514 = vmul.f32 %v2469, %v2488
    %v2515 = vmul.f32 %v2472, %v2488
    %v2516 = vmul.f32 %v2475, %v2488
    %v2517 = vmul.f32 %v2478, %v2488
    %v2518 = vmul.f32 %v2481, %v2488
    %v2519 = vmul.f32 %v2484, %v2488
    %v2520 = vmul.f32 %v2487, %v2488
    %v2521 = vsub.f32 %v2234, %v2489
    %v2522 = vsub.f32 %v2236, %v2489
    %v2523 = vsub.f32 %v2238, %v2490
    %v2524 = vsub.f32 %v2240, %v2490
    %v2525 = vsub.f32 %v2244, %v2491
    %v2526 = vsub.f32 %v2246, %v2491
    %v2527 = vsub.f32 %v2248, %v2492
    %v2528 = vsub.f32 %v2250, %v2492
    %v2529 = vsub.f32 %v2254, %v2493
    %v2530 = vsub.f32 %v2256, %v2493
    %v2531 = vsub.f32 %v2258, %v2494
    %v2532 = vsub.f32 %v2260, %v2494
    %v2533 = vsub.f32 %v2264, %v2495
    %v2534 = vsub.f32 %v2266, %v2495
    %v2535 = vsub.f32 %v2268, %v2496
    %v2536 = vsub.f32 %v2270, %v2496
    %v2537 = vsub.f32 %v2274, %v2497
    %v2538 = vsub.f32 %v2276, %v2497
    %v2539 = vsub.f32 %v2278, %v2498
    %v2540 = vsub.f32 %v2280, %v2498
    %v2541 = vsub.f32 %v2284, %v2499
    %v2542 = vsub.f32 %v2286, %v2499
    %v2543 = vsub.f32 %v2288, %v2500
    %v2544 = vsub.f32 %v2290, %v2500
    %v2545 = vsub.f32 %v2294, %v2501
    %v2546 = vsub.f32 %v2296, %v2501
    %v2547 = vsub.f32 %v2298, %v2502
    %v2548 = vsub.f32 %v2300, %v2502
    %v2549 = vsub.f32 %v2304, %v2503
    %v2550 = vsub.f32 %v2306, %v2503
    %v2551 = vsub.f32 %v2308, %v2504
    %v2552 = vsub.f32 %v2310, %v2504
    %v2553 = vsub.f32 %v2314, %v2505
    %v2554 = vsub.f32 %v2316, %v2505
    %v2555 = vsub.f32 %v2318, %v2506
    %v2556 = vsub.f32 %v2320, %v2506
    %v2557 = vsub.f32 %v2324, %v2507
    %v2558 = vsub.f32 %v2326, %v2507
    %v2559 = vsub.f32 %v2328, %v2508
    %v2560 = vsub.f32 %v2330, %v2508
    %v2561 = vsub.f32 %v2334, %v2509
    %v2562 = vsub.f32 %v2336, %v2509
    %v2563 = vsub.f32 %v2338, %v2510
    %v2564 = vsub.f32 %v2340, %v2510
    %v2565 = vsub.f32 %v2344, %v2511
    %v2566 = vsub.f32 %v2346, %v2511
    %v2567 = vsub.f32 %v2348, %v2512
    %v2568 = vsub.f32 %v2350, %v2512
    %v2569 = vsub.f32 %v2354, %v2513
    %v2570 = vsub.f32 %v2356, %v2513
    %v2571 = vsub.f32 %v2358, %v2514
    %v2572 = vsub.f32 %v2360, %v2514
    %v2573 = vsub.f32 %v2364, %v2515
    %v2574 = vsub.f32 %v2366, %v2515
    %v2575 = vsub.f32 %v2368, %v2516
    %v2576 = vsub.f32 %v2370, %v2516
    %v2577 = vsub.f32 %v2374, %v2517
    %v2578 = vsub.f32 %v2376, %v2517
    %v2579 = vsub.f32 %v2378, %v2518
    %v2580 = vsub.f32 %v2380, %v2518
    %v2581 = vsub.f32 %v2384, %v2519
    %v2582 = vsub.f32 %v2386, %v2519
    %v2583 = vsub.f32 %v2388, %v2520
    %v2584 = vsub.f32 %v2390, %v2520
    %v2585 = vmul.f32 %v2521, %v2521
    %v2586 = vmul.f32 %v2522, %v2522
    %v2587 = vmul.f32 %v2523, %v2523
    %v2588 = vmul.f32 %v2524, %v2524
    %v2589 = vmul.f32 %v2525, %v2525
    %v2590 = vmul.f32 %v2526, %v2526
    %v2591 = vmul.f32 %v2527, %v2527
    %v2592 = vmul.f32 %v2528, %v2528
    %v2593 = vmul.f32 %v2529, %v2529
    %v2594 = vmul.f32 %v2530, %v2530
    %v2595 = vmul.f32 %v2531, %v2531
    %v2596 = vmul.f32 %v2532, %v2532
    %v2597 = vmul.f32 %v2533, %v2533
    %v2598 = vmul.f32 %v2534, %v2534
    %v2599 = vmul.f32 %v2535, %v2535
    %v2600 = vmul.f32 %v2536, %v2536
    %v2601 = vmul.f32 %v2537, %v2537
    %v2602 = vmul.f32 %v2538, %v2538
    %v2603 = vmul.f32 %v2539, %v2539
    %v2604 = vmul.f32 %v2540, %v2540
    %v2605 = vmul.f32 %v2541, %v2541
    %v2606 = vmul.f32 %v2542, %v2542
    %v2607 = vmul.f32 %v2543, %v2543
    %v2608 = vmul.f32 %v2544, %v2544
    %v2609 = vmul.f32 %v2545, %v2545
    %v2610 = vmul.f32 %v2546, %v2546
    %v2611 = vmul.f32 %v2547, %v2547
    %v2612 = vmul.f32 %v2548, %v2548
    %v2613 = vmul.f32 %v2549, %v2549
    %v2614 = vmul.f32 %v2550, %v2550
    %v2615 = vmul.f32 %v2551, %v2551
    %v2616 = vmul.f32 %v2552, %v2552
    %v2617 = vmul.f32 %v2553, %v2553
    %v2618 = vmul.f32 %v2554, %v2554
    %v2619 = vmul.f32 %v2555, %v2555
    %v2620 = vmul.f32 %v2556, %v2556
    %v2621 = vmul.f32 %v2557, %v2557
    %v2622 = vmul.f32 %v2558, %v2558
    %v2623 = vmul.f32 %v2559, %v2559
    %v2624 = vmul.f32 %v2560, %v2560
    %v2625 = vmul.f32 %v2561, %v2561
    %v2626 = vmul.f32 %v2562, %v2562
    %v2627 = vmul.f32 %v2563, %v2563
    %v2628 = vmul.f32 %v2564, %v2564
    %v2629 = vmul.f32 %v2565, %v2565
    %v2630 = vmul.f32 %v2566, %v2566
    %v2631 = vmul.f32 %v2567, %v2567
    %v2632 = vmul.f32 %v2568, %v2568
    %v2633 = vmul.f32 %v2569, %v2569
    %v2634 = vmul.f32 %v2570, %v2570
    %v2635 = vmul.f32 %v2571, %v2571
    %v2636 = vmul.f32 %v2572, %v2572
    %v2637 = vmul.f32 %v2573, %v2573
    %v2638 = vmul.f32 %v2574, %v2574
    %v2639 = vmul.f32 %v2575, %v2575
    %v2640 = vmul.f32 %v2576, %v2576
    %v2641 = vmul.f32 %v2577, %v2577
    %v2642 = vmul.f32 %v2578, %v2578
    %v2643 = vmul.f32 %v2579, %v2579
    %v2644 = vmul.f32 %v2580, %v2580
    %v2645 = vmul.f32 %v2581, %v2581
    %v2646 = vmul.f32 %v2582, %v2582
    %v2647 = vmul.f32 %v2583, %v2583
    %v2648 = vmul.f32 %v2584, %v2584
    %v2649 = vadd.f32 %v2585, %v2586
    %2650 = vadd.xlane.f32.xlu0 %v2649
    %v2651 = vpop.xlane.xlu0 %2650
    %v2652 = vadd.f32 %v2587, %v2588
    %2653 = vadd.xlane.f32.xlu0 %v2652
    %v2654 = vpop.xlane.xlu0 %2653
    %v2655 = vadd.f32 %v2589, %v2590
    %2656 = vadd.xlane.f32.xlu0 %v2655
    %v2657 = vpop.xlane.xlu0 %2656
    %v2658 = vadd.f32 %v2591, %v2592
    %2659 = vadd.xlane.f32.xlu0 %v2658
    %v2660 = vpop.xlane.xlu0 %2659
    %v2661 = vadd.f32 %v2593, %v2594
    %2662 = vadd.xlane.f32.xlu0 %v2661
    %v2663 = vpop.xlane.xlu0 %2662
    %v2664 = vadd.f32 %v2595, %v2596
    %2665 = vadd.xlane.f32.xlu0 %v2664
    %v2666 = vpop.xlane.xlu0 %2665
    %v2667 = vadd.f32 %v2597, %v2598
    %2668 = vadd.xlane.f32.xlu0 %v2667
    %v2669 = vpop.xlane.xlu0 %2668
    %v2670 = vadd.f32 %v2599, %v2600
    %2671 = vadd.xlane.f32.xlu0 %v2670
    %v2672 = vpop.xlane.xlu0 %2671
    %v2673 = vadd.f32 %v2601, %v2602
    %2674 = vadd.xlane.f32.xlu0 %v2673
    %v2675 = vpop.xlane.xlu0 %2674
    %v2676 = vadd.f32 %v2603, %v2604
    %2677 = vadd.xlane.f32.xlu0 %v2676
    %v2678 = vpop.xlane.xlu0 %2677
    %v2679 = vadd.f32 %v2605, %v2606
    %2680 = vadd.xlane.f32.xlu0 %v2679
    %v2681 = vpop.xlane.xlu0 %2680
    %v2682 = vadd.f32 %v2607, %v2608
    %2683 = vadd.xlane.f32.xlu0 %v2682
    %v2684 = vpop.xlane.xlu0 %2683
    %v2685 = vadd.f32 %v2609, %v2610
    %2686 = vadd.xlane.f32.xlu0 %v2685
    %v2687 = vpop.xlane.xlu0 %2686
    %v2688 = vadd.f32 %v2611, %v2612
    %2689 = vadd.xlane.f32.xlu0 %v2688
    %v2690 = vpop.xlane.xlu0 %2689
    %v2691 = vadd.f32 %v2613, %v2614
    %2692 = vadd.xlane.f32.xlu0 %v2691
    %v2693 = vpop.xlane.xlu0 %2692
    %v2694 = vadd.f32 %v2615, %v2616
    %2695 = vadd.xlane.f32.xlu0 %v2694
    %v2696 = vpop.xlane.xlu0 %2695
    %v2697 = vadd.f32 %v2617, %v2618
    %2698 = vadd.xlane.f32.xlu0 %v2697
    %v2699 = vpop.xlane.xlu0 %2698
    %v2700 = vadd.f32 %v2619, %v2620
    %2701 = vadd.xlane.f32.xlu0 %v2700
    %v2702 = vpop.xlane.xlu0 %2701
    %v2703 = vadd.f32 %v2621, %v2622
    %2704 = vadd.xlane.f32.xlu0 %v2703
    %v2705 = vpop.xlane.xlu0 %2704
    %v2706 = vadd.f32 %v2623, %v2624
    %2707 = vadd.xlane.f32.xlu0 %v2706
    %v2708 = vpop.xlane.xlu0 %2707
    %v2709 = vadd.f32 %v2625, %v2626
    %2710 = vadd.xlane.f32.xlu0 %v2709
    %v2711 = vpop.xlane.xlu0 %2710
    %v2712 = vadd.f32 %v2627, %v2628
    %2713 = vadd.xlane.f32.xlu0 %v2712
    %v2714 = vpop.xlane.xlu0 %2713
    %v2715 = vadd.f32 %v2629, %v2630
    %2716 = vadd.xlane.f32.xlu0 %v2715
    %v2717 = vpop.xlane.xlu0 %2716
    %v2718 = vadd.f32 %v2631, %v2632
    %2719 = vadd.xlane.f32.xlu0 %v2718
    %v2720 = vpop.xlane.xlu0 %2719
    %v2721 = vadd.f32 %v2633, %v2634
    %2722 = vadd.xlane.f32.xlu0 %v2721
    %v2723 = vpop.xlane.xlu0 %2722
    %v2724 = vadd.f32 %v2635, %v2636
    %2725 = vadd.xlane.f32.xlu0 %v2724
    %v2726 = vpop.xlane.xlu0 %2725
    %v2727 = vadd.f32 %v2637, %v2638
    %2728 = vadd.xlane.f32.xlu0 %v2727
    %v2729 = vpop.xlane.xlu0 %2728
    %v2730 = vadd.f32 %v2639, %v2640
    %2731 = vadd.xlane.f32.xlu0 %v2730
    %v2732 = vpop.xlane.xlu0 %2731
    %v2733 = vadd.f32 %v2641, %v2642
    %2734 = vadd.xlane.f32.xlu0 %v2733
    %v2735 = vpop.xlane.xlu0 %2734
    %v2736 = vadd.f32 %v2643, %v2644
    %2737 = vadd.xlane.f32.xlu0 %v2736
    %v2738 = vpop.xlane.xlu0 %2737
    %v2739 = vadd.f32 %v2645, %v2646
    %2740 = vadd.xlane.f32.xlu0 %v2739
    %v2741 = vpop.xlane.xlu0 %2740
    %v2742 = vadd.f32 %v2647, %v2648
    %2743 = vadd.xlane.f32.xlu0 %v2742
    %v2744 = vpop.xlane.xlu0 %2743
    %v2745 = vmul.f32 %v2651, %v2488
    %v2746 = vmul.f32 %v2654, %v2488
    %v2747 = vmul.f32 %v2657, %v2488
    %v2748 = vmul.f32 %v2660, %v2488
    %v2749 = vmul.f32 %v2663, %v2488
    %v2750 = vmul.f32 %v2666, %v2488
    %v2751 = vmul.f32 %v2669, %v2488
    %v2752 = vmul.f32 %v2672, %v2488
    %v2753 = vmul.f32 %v2675, %v2488
    %v2754 = vmul.f32 %v2678, %v2488
    %v2755 = vmul.f32 %v2681, %v2488
    %v2756 = vmul.f32 %v2684, %v2488
    %v2757 = vmul.f32 %v2687, %v2488
    %v2758 = vmul.f32 %v2690, %v2488
    %v2759 = vmul.f32 %v2693, %v2488
    %v2760 = vmul.f32 %v2696, %v2488
    %v2761 = vmul.f32 %v2699, %v2488
    %v2762 = vmul.f32 %v2702, %v2488
    %v2763 = vmul.f32 %v2705, %v2488
    %v2764 = vmul.f32 %v2708, %v2488
    %v2765 = vmul.f32 %v2711, %v2488
    %v2766 = vmul.f32 %v2714, %v2488
    %v2767 = vmul.f32 %v2717, %v2488
    %v2768 = vmul.f32 %v2720, %v2488
    %v2769 = vmul.f32 %v2723, %v2488
    %v2770 = vmul.f32 %v2726, %v2488
    %v2771 = vmul.f32 %v2729, %v2488
    %v2772 = vmul.f32 %v2732, %v2488
    %v2773 = vmul.f32 %v2735, %v2488
    %v2774 = vmul.f32 %v2738, %v2488
    %v2775 = vmul.f32 %v2741, %v2488
    %v2776 = vmul.f32 %v2744, %v2488
    %v2777 = vadd.f32 %v2745, 1e-05
    %v2778 = vadd.f32 %v2746, 1e-05
    %v2779 = vadd.f32 %v2747, 1e-05
    %v2780 = vadd.f32 %v2748, 1e-05
    %v2781 = vadd.f32 %v2749, 1e-05
    %v2782 = vadd.f32 %v2750, 1e-05
    %v2783 = vadd.f32 %v2751, 1e-05
    %v2784 = vadd.f32 %v2752, 1e-05
    %v2785 = vadd.f32 %v2753, 1e-05
    %v2786 = vadd.f32 %v2754, 1e-05
    %v2787 = vadd.f32 %v2755, 1e-05
    %v2788 = vadd.f32 %v2756, 1e-05
    %v2789 = vadd.f32 %v2757, 1e-05
    %v2790 = vadd.f32 %v2758, 1e-05
    %v2791 = vadd.f32 %v2759, 1e-05
    %v2792 = vadd.f32 %v2760, 1e-05
    %v2793 = vadd.f32 %v2761, 1e-05
    %v2794 = vadd.f32 %v2762, 1e-05
    %v2795 = vadd.f32 %v2763, 1e-05
    %v2796 = vadd.f32 %v2764, 1e-05
    %v2797 = vadd.f32 %v2765, 1e-05
    %v2798 = vadd.f32 %v2766, 1e-05
    %v2799 = vadd.f32 %v2767, 1e-05
    %v2800 = vadd.f32 %v2768, 1e-05
    %v2801 = vadd.f32 %v2769, 1e-05
    %v2802 = vadd.f32 %v2770, 1e-05
    %v2803 = vadd.f32 %v2771, 1e-05
    %v2804 = vadd.f32 %v2772, 1e-05
    %v2805 = vadd.f32 %v2773, 1e-05
    %v2806 = vadd.f32 %v2774, 1e-05
    %v2807 = vadd.f32 %v2775, 1e-05
    %v2808 = vadd.f32 %v2776, 1e-05
    %v2809 = vrsqrt.pop %v2777
    %v2810 = vrsqrt.pop %v2778
    %v2811 = vrsqrt.pop %v2779
    %v2812 = vrsqrt.pop %v2780
    %v2813 = vrsqrt.pop %v2781
    %v2814 = vrsqrt.pop %v2782
    %v2815 = vrsqrt.pop %v2783
    %v2816 = vrsqrt.pop %v2784
    %v2817 = vrsqrt.pop %v2785
    %v2818 = vrsqrt.pop %v2786
    %v2819 = vrsqrt.pop %v2787
    %v2820 = vrsqrt.pop %v2788
    %v2821 = vrsqrt.pop %v2789
    %v2822 = vrsqrt.pop %v2790
    %v2823 = vrsqrt.pop %v2791
    %v2824 = vrsqrt.pop %v2792
    %v2825 = vrsqrt.pop %v2793
    %v2826 = vrsqrt.pop %v2794
    %v2827 = vrsqrt.pop %v2795
    %v2828 = vrsqrt.pop %v2796
    %v2829 = vrsqrt.pop %v2797
    %v2830 = vrsqrt.pop %v2798
    %v2831 = vrsqrt.pop %v2799
    %v2832 = vrsqrt.pop %v2800
    %v2833 = vrsqrt.pop %v2801
    %v2834 = vrsqrt.pop %v2802
    %v2835 = vrsqrt.pop %v2803
    %v2836 = vrsqrt.pop %v2804
    %v2837 = vrsqrt.pop %v2805
    %v2838 = vrsqrt.pop %v2806
    %v2839 = vrsqrt.pop %v2807
    %v2840 = vrsqrt.pop %v2808
    %v2841 = vmul.f32 %v2521, %v2809
    %v2842 = vmul.f32 %v2522, %v2809
    %v2843 = vmul.f32 %v2523, %v2810
    %v2844 = vmul.f32 %v2524, %v2810
    %v2845 = vmul.f32 %v2525, %v2811
    %v2846 = vmul.f32 %v2526, %v2811
    %v2847 = vmul.f32 %v2527, %v2812
    %v2848 = vmul.f32 %v2528, %v2812
    %v2849 = vmul.f32 %v2529, %v2813
    %v2850 = vmul.f32 %v2530, %v2813
    %v2851 = vmul.f32 %v2531, %v2814
    %v2852 = vmul.f32 %v2532, %v2814
    %v2853 = vmul.f32 %v2533, %v2815
    %v2854 = vmul.f32 %v2534, %v2815
    %v2855 = vmul.f32 %v2535, %v2816
    %v2856 = vmul.f32 %v2536, %v2816
    %v2857 = vmul.f32 %v2537, %v2817
    %v2858 = vmul.f32 %v2538, %v2817
    %v2859 = vmul.f32 %v2539, %v2818
    %v2860 = vmul.f32 %v2540, %v2818
    %v2861 = vmul.f32 %v2541, %v2819
    %v2862 = vmul.f32 %v2542, %v2819
    %v2863 = vmul.f32 %v2543, %v2820
    %v2864 = vmul.f32 %v2544, %v2820
    %v2865 = vmul.f32 %v2545, %v2821
    %v2866 = vmul.f32 %v2546, %v2821
    %v2867 = vmul.f32 %v2547, %v2822
    %v2868 = vmul.f32 %v2548, %v2822
    %v2869 = vmul.f32 %v2549, %v2823
    %v2870 = vmul.f32 %v2550, %v2823
    %v2871 = vmul.f32 %v2551, %v2824
    %v2872 = vmul.f32 %v2552, %v2824
    %v2873 = vmul.f32 %v2553, %v2825
    %v2874 = vmul.f32 %v2554, %v2825
    %v2875 = vmul.f32 %v2555, %v2826
    %v2876 = vmul.f32 %v2556, %v2826
    %v2877 = vmul.f32 %v2557, %v2827
    %v2878 = vmul.f32 %v2558, %v2827
    %v2879 = vmul.f32 %v2559, %v2828
    %v2880 = vmul.f32 %v2560, %v2828
    %v2881 = vmul.f32 %v2561, %v2829
    %v2882 = vmul.f32 %v2562, %v2829
    %v2883 = vmul.f32 %v2563, %v2830
    %v2884 = vmul.f32 %v2564, %v2830
    %v2885 = vmul.f32 %v2565, %v2831
    %v2886 = vmul.f32 %v2566, %v2831
    %v2887 = vmul.f32 %v2567, %v2832
    %v2888 = vmul.f32 %v2568, %v2832
    %v2889 = vmul.f32 %v2569, %v2833
    %v2890 = vmul.f32 %v2570, %v2833
    %v2891 = vmul.f32 %v2571, %v2834
    %v2892 = vmul.f32 %v2572, %v2834
    %v2893 = vmul.f32 %v2573, %v2835
    %v2894 = vmul.f32 %v2574, %v2835
    %v2895 = vmul.f32 %v2575, %v2836
    %v2896 = vmul.f32 %v2576, %v2836
    %v2897 = vmul.f32 %v2577, %v2837
    %v2898 = vmul.f32 %v2578, %v2837
    %v2899 = vmul.f32 %v2579, %v2838
    %v2900 = vmul.f32 %v2580, %v2838
    %v2901 = vmul.f32 %v2581, %v2839
    %v2902 = vmul.f32 %v2582, %v2839
    %v2903 = vmul.f32 %v2583, %v2840
    %v2904 = vmul.f32 %v2584, %v2840
    %v2906 = vlaneseq
    %v2907 = vshrl.u32 %v2906, 7
    %v2908 = vsub.s32 0, %v2907
    %v2909 = vrot.slane %v1656, %v2908
    %v2910 = vlaneseq
    %v2911 = vshrl.u32 %v2910, 7
    %v2912 = vsub.s32 1, %v2911
    %v2913 = vrot.slane %v1656, %v2912
    %v2916 = vmul.f32 %v2841, %v2909
    %v2917 = vmul.f32 %v2842, %v2913
    %v2918 = vmul.f32 %v2843, %v2909
    %v2919 = vmul.f32 %v2844, %v2913
    %v2920 = vmul.f32 %v2845, %v2909
    %v2921 = vmul.f32 %v2846, %v2913
    %v2922 = vmul.f32 %v2847, %v2909
    %v2923 = vmul.f32 %v2848, %v2913
    %v2924 = vmul.f32 %v2849, %v2909
    %v2925 = vmul.f32 %v2850, %v2913
    %v2926 = vmul.f32 %v2851, %v2909
    %v2927 = vmul.f32 %v2852, %v2913
    %v2928 = vmul.f32 %v2853, %v2909
    %v2929 = vmul.f32 %v2854, %v2913
    %v2930 = vmul.f32 %v2855, %v2909
    %v2931 = vmul.f32 %v2856, %v2913
    %v2932 = vmul.f32 %v2857, %v2909
    %v2933 = vmul.f32 %v2858, %v2913
    %v2934 = vmul.f32 %v2859, %v2909
    %v2935 = vmul.f32 %v2860, %v2913
    %v2936 = vmul.f32 %v2861, %v2909
    %v2937 = vmul.f32 %v2862, %v2913
    %v2938 = vmul.f32 %v2863, %v2909
    %v2939 = vmul.f32 %v2864, %v2913
    %v2940 = vmul.f32 %v2865, %v2909
    %v2941 = vmul.f32 %v2866, %v2913
    %v2942 = vmul.f32 %v2867, %v2909
    %v2943 = vmul.f32 %v2868, %v2913
    %v2944 = vmul.f32 %v2869, %v2909
    %v2945 = vmul.f32 %v2870, %v2913
    %v2946 = vmul.f32 %v2871, %v2909
    %v2947 = vmul.f32 %v2872, %v2913
    %v2948 = vmul.f32 %v2873, %v2909
    %v2949 = vmul.f32 %v2874, %v2913
    %v2950 = vmul.f32 %v2875, %v2909
    %v2951 = vmul.f32 %v2876, %v2913
    %v2952 = vmul.f32 %v2877, %v2909
    %v2953 = vmul.f32 %v2878, %v2913
    %v2954 = vmul.f32 %v2879, %v2909
    %v2955 = vmul.f32 %v2880, %v2913
    %v2956 = vmul.f32 %v2881, %v2909
    %v2957 = vmul.f32 %v2882, %v2913
    %v2958 = vmul.f32 %v2883, %v2909
    %v2959 = vmul.f32 %v2884, %v2913
    %v2960 = vmul.f32 %v2885, %v2909
    %v2961 = vmul.f32 %v2886, %v2913
    %v2962 = vmul.f32 %v2887, %v2909
    %v2963 = vmul.f32 %v2888, %v2913
    %v2964 = vmul.f32 %v2889, %v2909
    %v2965 = vmul.f32 %v2890, %v2913
    %v2966 = vmul.f32 %v2891, %v2909
    %v2967 = vmul.f32 %v2892, %v2913
    %v2968 = vmul.f32 %v2893, %v2909
    %v2969 = vmul.f32 %v2894, %v2913
    %v2970 = vmul.f32 %v2895, %v2909
    %v2971 = vmul.f32 %v2896, %v2913
    %v2972 = vmul.f32 %v2897, %v2909
    %v2973 = vmul.f32 %v2898, %v2913
    %v2974 = vmul.f32 %v2899, %v2909
    %v2975 = vmul.f32 %v2900, %v2913
    %v2976 = vmul.f32 %v2901, %v2909
    %v2977 = vmul.f32 %v2902, %v2913
    %v2978 = vmul.f32 %v2903, %v2909
    %v2979 = vmul.f32 %v2904, %v2913
    %v2981 = vlaneseq
    %v2982 = vshrl.u32 %v2981, 7
    %v2983 = vsub.s32 0, %v2982
    %v2984 = vrot.slane %v1658, %v2983
    %v2985 = vlaneseq
    %v2986 = vshrl.u32 %v2985, 7
    %v2987 = vsub.s32 1, %v2986
    %v2988 = vrot.slane %v1658, %v2987
    %v2991 = vadd.f32 %v2916, %v2984
    %v2992 = vadd.f32 %v2917, %v2988
    %v2993 = vadd.f32 %v2918, %v2984
    %v2994 = vadd.f32 %v2919, %v2988
    %v2995 = vadd.f32 %v2920, %v2984
    %v2996 = vadd.f32 %v2921, %v2988
    %v2997 = vadd.f32 %v2922, %v2984
    %v2998 = vadd.f32 %v2923, %v2988
    %v2999 = vadd.f32 %v2924, %v2984
    %v3000 = vadd.f32 %v2925, %v2988
    %v3001 = vadd.f32 %v2926, %v2984
    %v3002 = vadd.f32 %v2927, %v2988
    %v3003 = vadd.f32 %v2928, %v2984
    %v3004 = vadd.f32 %v2929, %v2988
    %v3005 = vadd.f32 %v2930, %v2984
    %v3006 = vadd.f32 %v2931, %v2988
    %v3007 = vadd.f32 %v2932, %v2984
    %v3008 = vadd.f32 %v2933, %v2988
    %v3009 = vadd.f32 %v2934, %v2984
    %v3010 = vadd.f32 %v2935, %v2988
    %v3011 = vadd.f32 %v2936, %v2984
    %v3012 = vadd.f32 %v2937, %v2988
    %v3013 = vadd.f32 %v2938, %v2984
    %v3014 = vadd.f32 %v2939, %v2988
    %v3015 = vadd.f32 %v2940, %v2984
    %v3016 = vadd.f32 %v2941, %v2988
    %v3017 = vadd.f32 %v2942, %v2984
    %v3018 = vadd.f32 %v2943, %v2988
    %v3019 = vadd.f32 %v2944, %v2984
    %v3020 = vadd.f32 %v2945, %v2988
    %v3021 = vadd.f32 %v2946, %v2984
    %v3022 = vadd.f32 %v2947, %v2988
    %v3023 = vadd.f32 %v2948, %v2984
    %v3024 = vadd.f32 %v2949, %v2988
    %v3025 = vadd.f32 %v2950, %v2984
    %v3026 = vadd.f32 %v2951, %v2988
    %v3027 = vadd.f32 %v2952, %v2984
    %v3028 = vadd.f32 %v2953, %v2988
    %v3029 = vadd.f32 %v2954, %v2984
    %v3030 = vadd.f32 %v2955, %v2988
    %v3031 = vadd.f32 %v2956, %v2984
    %v3032 = vadd.f32 %v2957, %v2988
    %v3033 = vadd.f32 %v2958, %v2984
    %v3034 = vadd.f32 %v2959, %v2988
    %v3035 = vadd.f32 %v2960, %v2984
    %v3036 = vadd.f32 %v2961, %v2988
    %v3037 = vadd.f32 %v2962, %v2984
    %v3038 = vadd.f32 %v2963, %v2988
    %v3039 = vadd.f32 %v2964, %v2984
    %v3040 = vadd.f32 %v2965, %v2988
    %v3041 = vadd.f32 %v2966, %v2984
    %v3042 = vadd.f32 %v2967, %v2988
    %v3043 = vadd.f32 %v2968, %v2984
    %v3044 = vadd.f32 %v2969, %v2988
    %v3045 = vadd.f32 %v2970, %v2984
    %v3046 = vadd.f32 %v2971, %v2988
    %v3047 = vadd.f32 %v2972, %v2984
    %v3048 = vadd.f32 %v2973, %v2988
    %v3049 = vadd.f32 %v2974, %v2984
    %v3050 = vadd.f32 %v2975, %v2988
    %v3051 = vadd.f32 %v2976, %v2984
    %v3052 = vadd.f32 %v2977, %v2988
    %v3053 = vadd.f32 %v2978, %v2984
    %v3054 = vadd.f32 %v2979, %v2988
    %v3055 = vmul.f32 %v2991, 0.1
    %v3056 = vmul.f32 %v2992, 0.1
    %v3057 = vmul.f32 %v2993, 0.1
    %v3058 = vmul.f32 %v2994, 0.1
    %v3059 = vmul.f32 %v2995, 0.1
    %v3060 = vmul.f32 %v2996, 0.1
    %v3061 = vmul.f32 %v2997, 0.1
    %v3062 = vmul.f32 %v2998, 0.1
    %v3063 = vmul.f32 %v2999, 0.1
    %v3064 = vmul.f32 %v3000, 0.1
    %v3065 = vmul.f32 %v3001, 0.1
    %v3066 = vmul.f32 %v3002, 0.1
    %v3067 = vmul.f32 %v3003, 0.1
    %v3068 = vmul.f32 %v3004, 0.1
    %v3069 = vmul.f32 %v3005, 0.1
    %v3070 = vmul.f32 %v3006, 0.1
    %v3071 = vmul.f32 %v3007, 0.1
    %v3072 = vmul.f32 %v3008, 0.1
    %v3073 = vmul.f32 %v3009, 0.1
    %v3074 = vmul.f32 %v3010, 0.1
    %v3075 = vmul.f32 %v3011, 0.1
    %v3076 = vmul.f32 %v3012, 0.1
    %v3077 = vmul.f32 %v3013, 0.1
    %v3078 = vmul.f32 %v3014, 0.1
    %v3079 = vmul.f32 %v3015, 0.1
    %v3080 = vmul.f32 %v3016, 0.1
    %v3081 = vmul.f32 %v3017, 0.1
    %v3082 = vmul.f32 %v3018, 0.1
    %v3083 = vmul.f32 %v3019, 0.1
    %v3084 = vmul.f32 %v3020, 0.1
    %v3085 = vmul.f32 %v3021, 0.1
    %v3086 = vmul.f32 %v3022, 0.1
    %v3087 = vmul.f32 %v3023, 0.1
    %v3088 = vmul.f32 %v3024, 0.1
    %v3089 = vmul.f32 %v3025, 0.1
    %v3090 = vmul.f32 %v3026, 0.1
    %v3091 = vmul.f32 %v3027, 0.1
    %v3092 = vmul.f32 %v3028, 0.1
    %v3093 = vmul.f32 %v3029, 0.1
    %v3094 = vmul.f32 %v3030, 0.1
    %v3095 = vmul.f32 %v3031, 0.1
    %v3096 = vmul.f32 %v3032, 0.1
    %v3097 = vmul.f32 %v3033, 0.1
    %v3098 = vmul.f32 %v3034, 0.1
    %v3099 = vmul.f32 %v3035, 0.1
    %v3100 = vmul.f32 %v3036, 0.1
    %v3101 = vmul.f32 %v3037, 0.1
    %v3102 = vmul.f32 %v3038, 0.1
    %v3103 = vmul.f32 %v3039, 0.1
    %v3104 = vmul.f32 %v3040, 0.1
    %v3105 = vmul.f32 %v3041, 0.1
    %v3106 = vmul.f32 %v3042, 0.1
    %v3107 = vmul.f32 %v3043, 0.1
    %v3108 = vmul.f32 %v3044, 0.1
    %v3109 = vmul.f32 %v3045, 0.1
    %v3110 = vmul.f32 %v3046, 0.1
    %v3111 = vmul.f32 %v3047, 0.1
    %v3112 = vmul.f32 %v3048, 0.1
    %v3113 = vmul.f32 %v3049, 0.1
    %v3114 = vmul.f32 %v3050, 0.1
    %v3115 = vmul.f32 %v3051, 0.1
    %v3116 = vmul.f32 %v3052, 0.1
    %v3117 = vmul.f32 %v3053, 0.1
    %v3118 = vmul.f32 %v3054, 0.1
    %v3119 = vmax.f32 %v2991, %v3055
    %v3120 = vmax.f32 %v2992, %v3056
    %v3121 = vmax.f32 %v2993, %v3057
    %v3122 = vmax.f32 %v2994, %v3058
    %v3123 = vmax.f32 %v2995, %v3059
    %v3124 = vmax.f32 %v2996, %v3060
    %v3125 = vmax.f32 %v2997, %v3061
    %v3126 = vmax.f32 %v2998, %v3062
    %v3127 = vmax.f32 %v2999, %v3063
    %v3128 = vmax.f32 %v3000, %v3064
    %v3129 = vmax.f32 %v3001, %v3065
    %v3130 = vmax.f32 %v3002, %v3066
    %v3131 = vmax.f32 %v3003, %v3067
    %v3132 = vmax.f32 %v3004, %v3068
    %v3133 = vmax.f32 %v3005, %v3069
    %v3134 = vmax.f32 %v3006, %v3070
    %v3135 = vmax.f32 %v3007, %v3071
    %v3136 = vmax.f32 %v3008, %v3072
    %v3137 = vmax.f32 %v3009, %v3073
    %v3138 = vmax.f32 %v3010, %v3074
    %v3139 = vmax.f32 %v3011, %v3075
    %v3140 = vmax.f32 %v3012, %v3076
    %v3141 = vmax.f32 %v3013, %v3077
    %v3142 = vmax.f32 %v3014, %v3078
    %v3143 = vmax.f32 %v3015, %v3079
    %v3144 = vmax.f32 %v3016, %v3080
    %v3145 = vmax.f32 %v3017, %v3081
    %v3146 = vmax.f32 %v3018, %v3082
    %v3147 = vmax.f32 %v3019, %v3083
    %v3148 = vmax.f32 %v3020, %v3084
    %v3149 = vmax.f32 %v3021, %v3085
    %v3150 = vmax.f32 %v3022, %v3086
    %v3151 = vmax.f32 %v3023, %v3087
    %v3152 = vmax.f32 %v3024, %v3088
    %v3153 = vmax.f32 %v3025, %v3089
    %v3154 = vmax.f32 %v3026, %v3090
    %v3155 = vmax.f32 %v3027, %v3091
    %v3156 = vmax.f32 %v3028, %v3092
    %v3157 = vmax.f32 %v3029, %v3093
    %v3158 = vmax.f32 %v3030, %v3094
    %v3159 = vmax.f32 %v3031, %v3095
    %v3160 = vmax.f32 %v3032, %v3096
    %v3161 = vmax.f32 %v3033, %v3097
    %v3162 = vmax.f32 %v3034, %v3098
    %v3163 = vmax.f32 %v3035, %v3099
    %v3164 = vmax.f32 %v3036, %v3100
    %v3165 = vmax.f32 %v3037, %v3101
    %v3166 = vmax.f32 %v3038, %v3102
    %v3167 = vmax.f32 %v3039, %v3103
    %v3168 = vmax.f32 %v3040, %v3104
    %v3169 = vmax.f32 %v3041, %v3105
    %v3170 = vmax.f32 %v3042, %v3106
    %v3171 = vmax.f32 %v3043, %v3107
    %v3172 = vmax.f32 %v3044, %v3108
    %v3173 = vmax.f32 %v3045, %v3109
    %v3174 = vmax.f32 %v3046, %v3110
    %v3175 = vmax.f32 %v3047, %v3111
    %v3176 = vmax.f32 %v3048, %v3112
    %v3177 = vmax.f32 %v3049, %v3113
    %v3178 = vmax.f32 %v3050, %v3114
    %v3179 = vmax.f32 %v3051, %v3115
    %v3180 = vmax.f32 %v3052, %v3116
    %v3181 = vmax.f32 %v3053, %v3117
    %v3182 = vmax.f32 %v3054, %v3118
    %s3183 = scalar_lea.vmem [#allocation7], 6
    %v3184 = vld [vmem:[%s3183] ss:$8 sm:$0x3]
    %s3185 = scalar_lea.vmem [#allocation7], 7
    %v3186 = vld [vmem:[%s3185] ss:$8 sm:$0x3]
    %s3187 = scalar_lea.vmem [#allocation7], 24
    %v3188 = vld [vmem:[%s3187] ss:$8 sm:$0x3]
    %v3189 = vpack.c.bf16 %v3121, %v3119
    %v3190 = vpack.c.bf16 %v3122, %v3120
    %v3191 = vpack.c.bf16 %v3125, %v3123
    %v3192 = vpack.c.bf16 %v3126, %v3124
    %v3193 = vpack.c.bf16 %v3129, %v3127
    %v3194 = vpack.c.bf16 %v3130, %v3128
    %v3195 = vpack.c.bf16 %v3133, %v3131
    %v3196 = vpack.c.bf16 %v3134, %v3132
    %v3197 = vpack.c.bf16 %v3137, %v3135
    %v3198 = vpack.c.bf16 %v3138, %v3136
    %v3199 = vpack.c.bf16 %v3141, %v3139
    %v3200 = vpack.c.bf16 %v3142, %v3140
    %v3201 = vpack.c.bf16 %v3145, %v3143
    %v3202 = vpack.c.bf16 %v3146, %v3144
    %v3203 = vpack.c.bf16 %v3149, %v3147
    %v3204 = vpack.c.bf16 %v3150, %v3148
    %v3205 = vpack.c.bf16 %v3153, %v3151
    %v3206 = vpack.c.bf16 %v3154, %v3152
    %v3207 = vpack.c.bf16 %v3157, %v3155
    %v3208 = vpack.c.bf16 %v3158, %v3156
    %v3209 = vpack.c.bf16 %v3161, %v3159
    %v3210 = vpack.c.bf16 %v3162, %v3160
    %v3211 = vpack.c.bf16 %v3165, %v3163
    %v3212 = vpack.c.bf16 %v3166, %v3164
    %v3213 = vpack.c.bf16 %v3169, %v3167
    %v3214 = vpack.c.bf16 %v3170, %v3168
    %v3215 = vpack.c.bf16 %v3173, %v3171
    %v3216 = vpack.c.bf16 %v3174, %v3172
    %v3217 = vpack.c.bf16 %v3177, %v3175
    %v3218 = vpack.c.bf16 %v3178, %v3176
    %v3219 = vpack.c.bf16 %v3181, %v3179
    %v3220 = vpack.c.bf16 %v3182, %v3180
    %v3221 = vld [vmem:[%s3] sm:$0xff]
    %v3222 = vld [vmem:[%s3 + $0x8] sm:$0xff]
    %v3223 = vld [vmem:[%s3 + $0x10] sm:$0xff]
    %v3224 = vld [vmem:[%s3 + $0x18] sm:$0xff]
    %v3225 = vld [vmem:[%s3 + $0x20] sm:$0xff]
    %v3226 = vld [vmem:[%s3 + $0x28] sm:$0xff]
    %v3227 = vld [vmem:[%s3 + $0x30] sm:$0xff]
    %v3228 = vld [vmem:[%s3 + $0x38] sm:$0xff]
    %v3229 = vld [vmem:[%s3 + $0x40] sm:$0xff]
    %v3230 = vld [vmem:[%s3 + $0x48] sm:$0xff]
    %v3231 = vld [vmem:[%s3 + $0x50] sm:$0xff]
    %v3232 = vld [vmem:[%s3 + $0x58] sm:$0xff]
    %v3233 = vld [vmem:[%s3 + $0x60] sm:$0xff]
    %v3234 = vld [vmem:[%s3 + $0x68] sm:$0xff]
    %v3235 = vld [vmem:[%s3 + $0x70] sm:$0xff]
    %v3236 = vld [vmem:[%s3 + $0x78] sm:$0xff]
    %v3237 = vld [vmem:[%s3 + $0x80] sm:$0xff]
    %v3238 = vld [vmem:[%s3 + $0x88] sm:$0xff]
    %v3239 = vld [vmem:[%s3 + $0x90] sm:$0xff]
    %v3240 = vld [vmem:[%s3 + $0x98] sm:$0xff]
    %v3241 = vld [vmem:[%s3 + $0xa0] sm:$0xff]
    %v3242 = vld [vmem:[%s3 + $0xa8] sm:$0xff]
    %v3243 = vld [vmem:[%s3 + $0xb0] sm:$0xff]
    %v3244 = vld [vmem:[%s3 + $0xb8] sm:$0xff]
    %v3245 = vld [vmem:[%s3 + $0xc0] sm:$0xff]
    %v3246 = vld [vmem:[%s3 + $0xc8] sm:$0xff]
    %v3247 = vld [vmem:[%s3 + $0xd0] sm:$0xff]
    %v3248 = vld [vmem:[%s3 + $0xd8] sm:$0xff]
    %v3249 = vld [vmem:[%s3 + $0xe0] sm:$0xff]
    %v3250 = vld [vmem:[%s3 + $0xe8] sm:$0xff]
    %v3251 = vld [vmem:[%s3 + $0xf0] sm:$0xff]
    %v3252 = vld [vmem:[%s3 + $0xf8] sm:$0xff]
    %v3254 = vlaneseq
    %v3255 = vshrl.u32 %v3254, 7
    %v3256 = vsub.s32 0, %v3255
    %v3257 = vrot.slane %v3184, %v3256
    %v3258 = vlaneseq
    %v3259 = vshrl.u32 %v3258, 7
    %v3260 = vsub.s32 1, %v3259
    %v3261 = vrot.slane %v3184, %v3260
    %v3296 = vunpack.c.l.b16 %v3221
    %v3297 = vunpack.c.h.b16 %v3221
    %v3298 = vunpack.c.l.b16 %v3222
    %v3299 = vunpack.c.h.b16 %v3222
    %v3300 = vunpack.c.l.b16 %v3223
    %v3301 = vunpack.c.h.b16 %v3223
    %v3302 = vunpack.c.l.b16 %v3224
    %v3303 = vunpack.c.h.b16 %v3224
    %v3304 = vunpack.c.l.b16 %v3225
    %v3305 = vunpack.c.h.b16 %v3225
    %v3306 = vunpack.c.l.b16 %v3226
    %v3307 = vunpack.c.h.b16 %v3226
    %v3308 = vunpack.c.l.b16 %v3227
    %v3309 = vunpack.c.h.b16 %v3227
    %v3310 = vunpack.c.l.b16 %v3228
    %v3311 = vunpack.c.h.b16 %v3228
    %v3312 = vunpack.c.l.b16 %v3229
    %v3313 = vunpack.c.h.b16 %v3229
    %v3314 = vunpack.c.l.b16 %v3230
    %v3315 = vunpack.c.h.b16 %v3230
    %v3316 = vunpack.c.l.b16 %v3231
    %v3317 = vunpack.c.h.b16 %v3231
    %v3318 = vunpack.c.l.b16 %v3232
    %v3319 = vunpack.c.h.b16 %v3232
    %v3320 = vunpack.c.l.b16 %v3233
    %v3321 = vunpack.c.h.b16 %v3233
    %v3322 = vunpack.c.l.b16 %v3234
    %v3323 = vunpack.c.h.b16 %v3234
    %v3324 = vunpack.c.l.b16 %v3235
    %v3325 = vunpack.c.h.b16 %v3235
    %v3326 = vunpack.c.l.b16 %v3236
    %v3327 = vunpack.c.h.b16 %v3236
    %v3328 = vunpack.c.l.b16 %v3237
    %v3329 = vunpack.c.h.b16 %v3237
    %v3330 = vunpack.c.l.b16 %v3238
    %v3331 = vunpack.c.h.b16 %v3238
    %v3332 = vunpack.c.l.b16 %v3239
    %v3333 = vunpack.c.h.b16 %v3239
    %v3334 = vunpack.c.l.b16 %v3240
    %v3335 = vunpack.c.h.b16 %v3240
    %v3336 = vunpack.c.l.b16 %v3241
    %v3337 = vunpack.c.h.b16 %v3241
    %v3338 = vunpack.c.l.b16 %v3242
    %v3339 = vunpack.c.h.b16 %v3242
    %v3340 = vunpack.c.l.b16 %v3243
    %v3341 = vunpack.c.h.b16 %v3243
    %v3342 = vunpack.c.l.b16 %v3244
    %v3343 = vunpack.c.h.b16 %v3244
    %v3344 = vunpack.c.l.b16 %v3245
    %v3345 = vunpack.c.h.b16 %v3245
    %v3346 = vunpack.c.l.b16 %v3246
    %v3347 = vunpack.c.h.b16 %v3246
    %v3348 = vunpack.c.l.b16 %v3247
    %v3349 = vunpack.c.h.b16 %v3247
    %v3350 = vunpack.c.l.b16 %v3248
    %v3351 = vunpack.c.h.b16 %v3248
    %v3352 = vunpack.c.l.b16 %v3249
    %v3353 = vunpack.c.h.b16 %v3249
    %v3354 = vunpack.c.l.b16 %v3250
    %v3355 = vunpack.c.h.b16 %v3250
    %v3356 = vunpack.c.l.b16 %v3251
    %v3357 = vunpack.c.h.b16 %v3251
    %v3358 = vunpack.c.l.b16 %v3252
    %v3359 = vunpack.c.h.b16 %v3252
    %v3360 = vpack.c.b16 %v3298, %v3296
    %v3361 = vpack.c.b16 %v3299, %v3297
    %v3362 = vpack.c.b16 %v3302, %v3300
    %v3363 = vpack.c.b16 %v3303, %v3301
    %v3364 = vpack.c.b16 %v3306, %v3304
    %v3365 = vpack.c.b16 %v3307, %v3305
    %v3366 = vpack.c.b16 %v3310, %v3308
    %v3367 = vpack.c.b16 %v3311, %v3309
    %v3368 = vpack.c.b16 %v3314, %v3312
    %v3369 = vpack.c.b16 %v3315, %v3313
    %v3370 = vpack.c.b16 %v3318, %v3316
    %v3371 = vpack.c.b16 %v3319, %v3317
    %v3372 = vpack.c.b16 %v3322, %v3320
    %v3373 = vpack.c.b16 %v3323, %v3321
    %v3374 = vpack.c.b16 %v3326, %v3324
    %v3375 = vpack.c.b16 %v3327, %v3325
    %v3376 = vpack.c.b16 %v3330, %v3328
    %v3377 = vpack.c.b16 %v3331, %v3329
    %v3378 = vpack.c.b16 %v3334, %v3332
    %v3379 = vpack.c.b16 %v3335, %v3333
    %v3380 = vpack.c.b16 %v3338, %v3336
    %v3381 = vpack.c.b16 %v3339, %v3337
    %v3382 = vpack.c.b16 %v3342, %v3340
    %v3383 = vpack.c.b16 %v3343, %v3341
    %v3384 = vpack.c.b16 %v3346, %v3344
    %v3385 = vpack.c.b16 %v3347, %v3345
    %v3386 = vpack.c.b16 %v3350, %v3348
    %v3387 = vpack.c.b16 %v3351, %v3349
    %v3388 = vpack.c.b16 %v3354, %v3352
    %v3389 = vpack.c.b16 %v3355, %v3353
    %v3390 = vpack.c.b16 %v3358, %v3356
    %v3391 = vpack.c.b16 %v3359, %v3357
    %3424 = vmatprep.subr.bf16.mxu0 %v3361
    %3425 = vmatpush1.bf16.msra.mxu0 %v3360
    %3426 = vmatprep.subr.bf16.mxu0 %v3363
    %3427 = vmatpush1.bf16.msra.mxu0 %v3362
    %3428 = vmatprep.subr.bf16.mxu0 %v3365
    %3429 = vmatpush1.bf16.msra.mxu0 %v3364
    %3430 = vmatprep.subr.bf16.mxu0 %v3367
    %3431 = vmatpush1.bf16.msra.mxu0 %v3366
    %3432 = vmatprep.subr.bf16.mxu0 %v3369
    %3433 = vmatpush1.bf16.msra.mxu0 %v3368
    %3434 = vmatprep.subr.bf16.mxu0 %v3371
    %3435 = vmatpush1.bf16.msra.mxu0 %v3370
    %3436 = vmatprep.subr.bf16.mxu0 %v3373
    %3437 = vmatpush1.bf16.msra.mxu0 %v3372
    %3438 = vmatprep.subr.bf16.mxu0 %v3375
    %3439 = vmatpush1.bf16.msra.mxu0 %v3374
    %3440 = vmatprep.subr.bf16.mxu0 %v3377
    %3441 = vmatpush1.bf16.msra.mxu0 %v3376
    %3442 = vmatprep.subr.bf16.mxu0 %v3379
    %3443 = vmatpush1.bf16.msra.mxu0 %v3378
    %3444 = vmatprep.subr.bf16.mxu0 %v3381
    %3445 = vmatpush1.bf16.msra.mxu0 %v3380
    %3446 = vmatprep.subr.bf16.mxu0 %v3383
    %3447 = vmatpush1.bf16.msra.mxu0 %v3382
    %3448 = vmatprep.subr.bf16.mxu0 %v3385
    %3449 = vmatpush1.bf16.msra.mxu0 %v3384
    %3450 = vmatprep.subr.bf16.mxu0 %v3387
    %3451 = vmatpush1.bf16.msra.mxu0 %v3386
    %3452 = vmatprep.subr.bf16.mxu0 %v3389
    %3453 = vmatpush1.bf16.msra.mxu0 %v3388
    %3454 = vmatprep.subr.bf16.mxu0 %v3391
    %3455 = vmatpush1.bf16.msra.mxu0 %v3390
    %3456 = vmatprep.mubr.bf16.mxu0 %v3190
    %3457 = vmatmul.mubr.bf16.gmra.mrb[0].mxu0 %v3189
    %v3458 = vpop.f32.mrb[0].mxu0
    %v3459 = vadd.f32 %v3257, %v3458
    %v3460 = vpop.f32.mrb[0].mxu0
    %v3461 = vadd.f32 %v3261, %v3460
    %v3462 = vpop.f32.mrb[0].mxu0
    %v3463 = vadd.f32 %v3257, %v3462
    %v3464 = vpop.f32.mrb[0].mxu0
    %v3465 = vadd.f32 %v3261, %v3464
    %3466 = vmatprep.mubr.bf16.mxu0 %v3192
    %3467 = vmatmul.mubr.bf16.gmra.mrb[0].mxu0 %v3191
    %v3468 = vpop.f32.mrb[0].mxu0
    %v3469 = vadd.f32 %v3257, %v3468
    %v3470 = vpop.f32.mrb[0].mxu0
    %v3471 = vadd.f32 %v3261, %v3470
    %v3472 = vpop.f32.mrb[0].mxu0
    %v3473 = vadd.f32 %v3257, %v3472
    %v3474 = vpop.f32.mrb[0].mxu0
    %v3475 = vadd.f32 %v3261, %v3474
    %3476 = vmatprep.mubr.bf16.mxu0 %v3194
    %3477 = vmatmul.mubr.bf16.gmra.mrb[0].mxu0 %v3193
    %v3478 = vpop.f32.mrb[0].mxu0
    %v3479 = vadd.f32 %v3257, %v3478
    %v3480 = vpop.f32.mrb[0].mxu0
    %v3481 = vadd.f32 %v3261, %v3480
    %v3482 = vpop.f32.mrb[0].mxu0
    %v3483 = vadd.f32 %v3257, %v3482
    %v3484 = vpop.f32.mrb[0].mxu0
    %v3485 = vadd.f32 %v3261, %v3484
    %3486 = vmatprep.mubr.bf16.mxu0 %v3196
    %3487 = vmatmul.mubr.bf16.gmra.mrb[0].mxu0 %v3195
    %v3488 = vpop.f32.mrb[0].mxu0
    %v3489 = vadd.f32 %v3257, %v3488
    %v3490 = vpop.f32.mrb[0].mxu0
    %v3491 = vadd.f32 %v3261, %v3490
    %v3492 = vpop.f32.mrb[0].mxu0
    %v3493 = vadd.f32 %v3257, %v3492
    %v3494 = vpop.f32.mrb[0].mxu0
    %v3495 = vadd.f32 %v3261, %v3494
    %3496 = vmatprep.mubr.bf16.mxu0 %v3198
    %3497 = vmatmul.mubr.bf16.gmra.mrb[0].mxu0 %v3197
    %v3498 = vpop.f32.mrb[0].mxu0
    %v3499 = vadd.f32 %v3257, %v3498
    %v3500 = vpop.f32.mrb[0].mxu0
    %v3501 = vadd.f32 %v3261, %v3500
    %v3502 = vpop.f32.mrb[0].mxu0
    %v3503 = vadd.f32 %v3257, %v3502
    %v3504 = vpop.f32.mrb[0].mxu0
    %v3505 = vadd.f32 %v3261, %v3504
    %3506 = vmatprep.mubr.bf16.mxu0 %v3200
    %3507 = vmatmul.mubr.bf16.gmra.mrb[0].mxu0 %v3199
    %v3508 = vpop.f32.mrb[0].mxu0
    %v3509 = vadd.f32 %v3257, %v3508
    %v3510 = vpop.f32.mrb[0].mxu0
    %v3511 = vadd.f32 %v3261, %v3510
    %v3512 = vpop.f32.mrb[0].mxu0
    %v3513 = vadd.f32 %v3257, %v3512
    %v3514 = vpop.f32.mrb[0].mxu0
    %v3515 = vadd.f32 %v3261, %v3514
    %3516 = vmatprep.mubr.bf16.mxu0 %v3202
    %3517 = vmatmul.mubr.bf16.gmra.mrb[0].mxu0 %v3201
    %v3518 = vpop.f32.mrb[0].mxu0
    %v3519 = vadd.f32 %v3257, %v3518
    %v3520 = vpop.f32.mrb[0].mxu0
    %v3521 = vadd.f32 %v3261, %v3520
    %v3522 = vpop.f32.mrb[0].mxu0
    %v3523 = vadd.f32 %v3257, %v3522
    %v3524 = vpop.f32.mrb[0].mxu0
    %v3525 = vadd.f32 %v3261, %v3524
    %3526 = vmatprep.mubr.bf16.mxu0 %v3204
    %3527 = vmatmul.mubr.bf16.gmra.mrb[0].mxu0 %v3203
    %v3528 = vpop.f32.mrb[0].mxu0
    %v3529 = vadd.f32 %v3257, %v3528
    %v3530 = vpop.f32.mrb[0].mxu0
    %v3531 = vadd.f32 %v3261, %v3530
    %v3532 = vpop.f32.mrb[0].mxu0
    %v3533 = vadd.f32 %v3257, %v3532
    %v3534 = vpop.f32.mrb[0].mxu0
    %v3535 = vadd.f32 %v3261, %v3534
    %3536 = vmatprep.mubr.bf16.mxu0 %v3206
    %3537 = vmatmul.mubr.bf16.gmra.mrb[0].mxu0 %v3205
    %v3538 = vpop.f32.mrb[0].mxu0
    %v3539 = vadd.f32 %v3257, %v3538
    %v3540 = vpop.f32.mrb[0].mxu0
    %v3541 = vadd.f32 %v3261, %v3540
    %v3542 = vpop.f32.mrb[0].mxu0
    %v3543 = vadd.f32 %v3257, %v3542
    %v3544 = vpop.f32.mrb[0].mxu0
    %v3545 = vadd.f32 %v3261, %v3544
    %3546 = vmatprep.mubr.bf16.mxu0 %v3208
    %3547 = vmatmul.mubr.bf16.gmra.mrb[0].mxu0 %v3207
    %v3548 = vpop.f32.mrb[0].mxu0
    %v3549 = vadd.f32 %v3257, %v3548
    %v3550 = vpop.f32.mrb[0].mxu0
    %v3551 = vadd.f32 %v3261, %v3550
    %v3552 = vpop.f32.mrb[0].mxu0
    %v3553 = vadd.f32 %v3257, %v3552
    %v3554 = vpop.f32.mrb[0].mxu0
    %v3555 = vadd.f32 %v3261, %v3554
    %3556 = vmatprep.mubr.bf16.mxu0 %v3210
    %3557 = vmatmul.mubr.bf16.gmra.mrb[0].mxu0 %v3209
    %v3558 = vpop.f32.mrb[0].mxu0
    %v3559 = vadd.f32 %v3257, %v3558
    %v3560 = vpop.f32.mrb[0].mxu0
    %v3561 = vadd.f32 %v3261, %v3560
    %v3562 = vpop.f32.mrb[0].mxu0
    %v3563 = vadd.f32 %v3257, %v3562
    %v3564 = vpop.f32.mrb[0].mxu0
    %v3565 = vadd.f32 %v3261, %v3564
    %3566 = vmatprep.mubr.bf16.mxu0 %v3212
    %3567 = vmatmul.mubr.bf16.gmra.mrb[0].mxu0 %v3211
    %v3568 = vpop.f32.mrb[0].mxu0
    %v3569 = vadd.f32 %v3257, %v3568
    %v3570 = vpop.f32.mrb[0].mxu0
    %v3571 = vadd.f32 %v3261, %v3570
    %v3572 = vpop.f32.mrb[0].mxu0
    %v3573 = vadd.f32 %v3257, %v3572
    %v3574 = vpop.f32.mrb[0].mxu0
    %v3575 = vadd.f32 %v3261, %v3574
    %3576 = vmatprep.mubr.bf16.mxu0 %v3214
    %3577 = vmatmul.mubr.bf16.gmra.mrb[0].mxu0 %v3213
    %v3578 = vpop.f32.mrb[0].mxu0
    %v3579 = vadd.f32 %v3257, %v3578
    %v3580 = vpop.f32.mrb[0].mxu0
    %v3581 = vadd.f32 %v3261, %v3580
    %v3582 = vpop.f32.mrb[0].mxu0
    %v3583 = vadd.f32 %v3257, %v3582
    %v3584 = vpop.f32.mrb[0].mxu0
    %v3585 = vadd.f32 %v3261, %v3584
    %3586 = vmatprep.mubr.bf16.mxu0 %v3216
    %3587 = vmatmul.mubr.bf16.gmra.mrb[0].mxu0 %v3215
    %v3588 = vpop.f32.mrb[0].mxu0
    %v3589 = vadd.f32 %v3257, %v3588
    %v3590 = vpop.f32.mrb[0].mxu0
    %v3591 = vadd.f32 %v3261, %v3590
    %v3592 = vpop.f32.mrb[0].mxu0
    %v3593 = vadd.f32 %v3257, %v3592
    %v3594 = vpop.f32.mrb[0].mxu0
    %v3595 = vadd.f32 %v3261, %v3594
    %3596 = vmatprep.mubr.bf16.mxu0 %v3218
    %3597 = vmatmul.mubr.bf16.gmra.mrb[0].mxu0 %v3217
    %v3598 = vpop.f32.mrb[0].mxu0
    %v3599 = vadd.f32 %v3257, %v3598
    %v3600 = vpop.f32.mrb[0].mxu0
    %v3601 = vadd.f32 %v3261, %v3600
    %v3602 = vpop.f32.mrb[0].mxu0
    %v3603 = vadd.f32 %v3257, %v3602
    %v3604 = vpop.f32.mrb[0].mxu0
    %v3605 = vadd.f32 %v3261, %v3604
    %3606 = vmatprep.mubr.bf16.mxu0 %v3220
    %3607 = vmatmul.mubr.bf16.gmra.mrb[0].mxu0 %v3219
    %v3608 = vpop.f32.mrb[0].mxu0
    %v3609 = vadd.f32 %v3257, %v3608
    %v3610 = vpop.f32.mrb[0].mxu0
    %v3611 = vadd.f32 %v3261, %v3610
    %v3612 = vpop.f32.mrb[0].mxu0
    %v3613 = vadd.f32 %v3257, %v3612
    %v3614 = vpop.f32.mrb[0].mxu0
    %v3615 = vadd.f32 %v3261, %v3614
    %3616 = vdwg.mxu0
    %v3617 = vadd.f32 %v3459, %v3461
    %3618 = vadd.xlane.f32.xlu0 %v3617
    %v3619 = vpop.xlane.xlu0 %3618
    %v3620 = vadd.f32 %v3463, %v3465
    %3621 = vadd.xlane.f32.xlu0 %v3620
    %v3622 = vpop.xlane.xlu0 %3621
    %v3623 = vadd.f32 %v3469, %v3471
    %3624 = vadd.xlane.f32.xlu0 %v3623
    %v3625 = vpop.xlane.xlu0 %3624
    %v3626 = vadd.f32 %v3473, %v3475
    %3627 = vadd.xlane.f32.xlu0 %v3626
    %v3628 = vpop.xlane.xlu0 %3627
    %v3629 = vadd.f32 %v3479, %v3481
    %3630 = vadd.xlane.f32.xlu0 %v3629
    %v3631 = vpop.xlane.xlu0 %3630
    %v3632 = vadd.f32 %v3483, %v3485
    %3633 = vadd.xlane.f32.xlu0 %v3632
    %v3634 = vpop.xlane.xlu0 %3633
    %v3635 = vadd.f32 %v3489, %v3491
    %3636 = vadd.xlane.f32.xlu0 %v3635
    %v3637 = vpop.xlane.xlu0 %3636
    %v3638 = vadd.f32 %v3493, %v3495
    %3639 = vadd.xlane.f32.xlu0 %v3638
    %v3640 = vpop.xlane.xlu0 %3639
    %v3641 = vadd.f32 %v3499, %v3501
    %3642 = vadd.xlane.f32.xlu0 %v3641
    %v3643 = vpop.xlane.xlu0 %3642
    %v3644 = vadd.f32 %v3503, %v3505
    %3645 = vadd.xlane.f32.xlu0 %v3644
    %v3646 = vpop.xlane.xlu0 %3645
    %v3647 = vadd.f32 %v3509, %v3511
    %3648 = vadd.xlane.f32.xlu0 %v3647
    %v3649 = vpop.xlane.xlu0 %3648
    %v3650 = vadd.f32 %v3513, %v3515
    %3651 = vadd.xlane.f32.xlu0 %v3650
    %v3652 = vpop.xlane.xlu0 %3651
    %v3653 = vadd.f32 %v3519, %v3521
    %3654 = vadd.xlane.f32.xlu0 %v3653
    %v3655 = vpop.xlane.xlu0 %3654
    %v3656 = vadd.f32 %v3523, %v3525
    %3657 = vadd.xlane.f32.xlu0 %v3656
    %v3658 = vpop.xlane.xlu0 %3657
    %v3659 = vadd.f32 %v3529, %v3531
    %3660 = vadd.xlane.f32.xlu0 %v3659
    %v3661 = vpop.xlane.xlu0 %3660
    %v3662 = vadd.f32 %v3533, %v3535
    %3663 = vadd.xlane.f32.xlu0 %v3662
    %v3664 = vpop.xlane.xlu0 %3663
    %v3665 = vadd.f32 %v3539, %v3541
    %3666 = vadd.xlane.f32.xlu0 %v3665
    %v3667 = vpop.xlane.xlu0 %3666
    %v3668 = vadd.f32 %v3543, %v3545
    %3669 = vadd.xlane.f32.xlu0 %v3668
    %v3670 = vpop.xlane.xlu0 %3669
    %v3671 = vadd.f32 %v3549, %v3551
    %3672 = vadd.xlane.f32.xlu0 %v3671
    %v3673 = vpop.xlane.xlu0 %3672
    %v3674 = vadd.f32 %v3553, %v3555
    %3675 = vadd.xlane.f32.xlu0 %v3674
    %v3676 = vpop.xlane.xlu0 %3675
    %v3677 = vadd.f32 %v3559, %v3561
    %3678 = vadd.xlane.f32.xlu0 %v3677
    %v3679 = vpop.xlane.xlu0 %3678
    %v3680 = vadd.f32 %v3563, %v3565
    %3681 = vadd.xlane.f32.xlu0 %v3680
    %v3682 = vpop.xlane.xlu0 %3681
    %v3683 = vadd.f32 %v3569, %v3571
    %3684 = vadd.xlane.f32.xlu0 %v3683
    %v3685 = vpop.xlane.xlu0 %3684
    %v3686 = vadd.f32 %v3573, %v3575
    %3687 = vadd.xlane.f32.xlu0 %v3686
    %v3688 = vpop.xlane.xlu0 %3687
    %v3689 = vadd.f32 %v3579, %v3581
    %3690 = vadd.xlane.f32.xlu0 %v3689
    %v3691 = vpop.xlane.xlu0 %3690
    %v3692 = vadd.f32 %v3583, %v3585
    %3693 = vadd.xlane.f32.xlu0 %v3692
    %v3694 = vpop.xlane.xlu0 %3693
    %v3695 = vadd.f32 %v3589, %v3591
    %3696 = vadd.xlane.f32.xlu0 %v3695
    %v3697 = vpop.xlane.xlu0 %3696
    %v3698 = vadd.f32 %v3593, %v3595
    %3699 = vadd.xlane.f32.xlu0 %v3698
    %v3700 = vpop.xlane.xlu0 %3699
    %v3701 = vadd.f32 %v3599, %v3601
    %3702 = vadd.xlane.f32.xlu0 %v3701
    %v3703 = vpop.xlane.xlu0 %3702
    %v3704 = vadd.f32 %v3603, %v3605
    %3705 = vadd.xlane.f32.xlu0 %v3704
    %v3706 = vpop.xlane.xlu0 %3705
    %v3707 = vadd.f32 %v3609, %v3611
    %3708 = vadd.xlane.f32.xlu0 %v3707
    %v3709 = vpop.xlane.xlu0 %3708
    %v3710 = vadd.f32 %v3613, %v3615
    %3711 = vadd.xlane.f32.xlu0 %v3710
    %v3712 = vpop.xlane.xlu0 %3711
    %v3713 = vmul.f32 %v3619, %v2488
    %v3714 = vmul.f32 %v3622, %v2488
    %v3715 = vmul.f32 %v3625, %v2488
    %v3716 = vmul.f32 %v3628, %v2488
    %v3717 = vmul.f32 %v3631, %v2488
    %v3718 = vmul.f32 %v3634, %v2488
    %v3719 = vmul.f32 %v3637, %v2488
    %v3720 = vmul.f32 %v3640, %v2488
    %v3721 = vmul.f32 %v3643, %v2488
    %v3722 = vmul.f32 %v3646, %v2488
    %v3723 = vmul.f32 %v3649, %v2488
    %v3724 = vmul.f32 %v3652, %v2488
    %v3725 = vmul.f32 %v3655, %v2488
    %v3726 = vmul.f32 %v3658, %v2488
    %v3727 = vmul.f32 %v3661, %v2488
    %v3728 = vmul.f32 %v3664, %v2488
    %v3729 = vmul.f32 %v3667, %v2488
    %v3730 = vmul.f32 %v3670, %v2488
    %v3731 = vmul.f32 %v3673, %v2488
    %v3732 = vmul.f32 %v3676, %v2488
    %v3733 = vmul.f32 %v3679, %v2488
    %v3734 = vmul.f32 %v3682, %v2488
    %v3735 = vmul.f32 %v3685, %v2488
    %v3736 = vmul.f32 %v3688, %v2488
    %v3737 = vmul.f32 %v3691, %v2488
    %v3738 = vmul.f32 %v3694, %v2488
    %v3739 = vmul.f32 %v3697, %v2488
    %v3740 = vmul.f32 %v3700, %v2488
    %v3741 = vmul.f32 %v3703, %v2488
    %v3742 = vmul.f32 %v3706, %v2488
    %v3743 = vmul.f32 %v3709, %v2488
    %v3744 = vmul.f32 %v3712, %v2488
    %v3745 = vsub.f32 %v3459, %v3713
    %v3746 = vsub.f32 %v3461, %v3713
    %v3747 = vsub.f32 %v3463, %v3714
    %v3748 = vsub.f32 %v3465, %v3714
    %v3749 = vsub.f32 %v3469, %v3715
    %v3750 = vsub.f32 %v3471, %v3715
    %v3751 = vsub.f32 %v3473, %v3716
    %v3752 = vsub.f32 %v3475, %v3716
    %v3753 = vsub.f32 %v3479, %v3717
    %v3754 = vsub.f32 %v3481, %v3717
    %v3755 = vsub.f32 %v3483, %v3718
    %v3756 = vsub.f32 %v3485, %v3718
    %v3757 = vsub.f32 %v3489, %v3719
    %v3758 = vsub.f32 %v3491, %v3719
    %v3759 = vsub.f32 %v3493, %v3720
    %v3760 = vsub.f32 %v3495, %v3720
    %v3761 = vsub.f32 %v3499, %v3721
    %v3762 = vsub.f32 %v3501, %v3721
    %v3763 = vsub.f32 %v3503, %v3722
    %v3764 = vsub.f32 %v3505, %v3722
    %v3765 = vsub.f32 %v3509, %v3723
    %v3766 = vsub.f32 %v3511, %v3723
    %v3767 = vsub.f32 %v3513, %v3724
    %v3768 = vsub.f32 %v3515, %v3724
    %v3769 = vsub.f32 %v3519, %v3725
    %v3770 = vsub.f32 %v3521, %v3725
    %v3771 = vsub.f32 %v3523, %v3726
    %v3772 = vsub.f32 %v3525, %v3726
    %v3773 = vsub.f32 %v3529, %v3727
    %v3774 = vsub.f32 %v3531, %v3727
    %v3775 = vsub.f32 %v3533, %v3728
    %v3776 = vsub.f32 %v3535, %v3728
    %v3777 = vsub.f32 %v3539, %v3729
    %v3778 = vsub.f32 %v3541, %v3729
    %v3779 = vsub.f32 %v3543, %v3730
    %v3780 = vsub.f32 %v3545, %v3730
    %v3781 = vsub.f32 %v3549, %v3731
    %v3782 = vsub.f32 %v3551, %v3731
    %v3783 = vsub.f32 %v3553, %v3732
    %v3784 = vsub.f32 %v3555, %v3732
    %v3785 = vsub.f32 %v3559, %v3733
    %v3786 = vsub.f32 %v3561, %v3733
    %v3787 = vsub.f32 %v3563, %v3734
    %v3788 = vsub.f32 %v3565, %v3734
    %v3789 = vsub.f32 %v3569, %v3735
    %v3790 = vsub.f32 %v3571, %v3735
    %v3791 = vsub.f32 %v3573, %v3736
    %v3792 = vsub.f32 %v3575, %v3736
    %v3793 = vsub.f32 %v3579, %v3737
    %v3794 = vsub.f32 %v3581, %v3737
    %v3795 = vsub.f32 %v3583, %v3738
    %v3796 = vsub.f32 %v3585, %v3738
    %v3797 = vsub.f32 %v3589, %v3739
    %v3798 = vsub.f32 %v3591, %v3739
    %v3799 = vsub.f32 %v3593, %v3740
    %v3800 = vsub.f32 %v3595, %v3740
    %v3801 = vsub.f32 %v3599, %v3741
    %v3802 = vsub.f32 %v3601, %v3741
    %v3803 = vsub.f32 %v3603, %v3742
    %v3804 = vsub.f32 %v3605, %v3742
    %v3805 = vsub.f32 %v3609, %v3743
    %v3806 = vsub.f32 %v3611, %v3743
    %v3807 = vsub.f32 %v3613, %v3744
    %v3808 = vsub.f32 %v3615, %v3744
    %v3809 = vmul.f32 %v3745, %v3745
    %v3810 = vmul.f32 %v3746, %v3746
    %v3811 = vmul.f32 %v3747, %v3747
    %v3812 = vmul.f32 %v3748, %v3748
    %v3813 = vmul.f32 %v3749, %v3749
    %v3814 = vmul.f32 %v3750, %v3750
    %v3815 = vmul.f32 %v3751, %v3751
    %v3816 = vmul.f32 %v3752, %v3752
    %v3817 = vmul.f32 %v3753, %v3753
    %v3818 = vmul.f32 %v3754, %v3754
    %v3819 = vmul.f32 %v3755, %v3755
    %v3820 = vmul.f32 %v3756, %v3756
    %v3821 = vmul.f32 %v3757, %v3757
    %v3822 = vmul.f32 %v3758, %v3758
    %v3823 = vmul.f32 %v3759, %v3759
    %v3824 = vmul.f32 %v3760, %v3760
    %v3825 = vmul.f32 %v3761, %v3761
    %v3826 = vmul.f32 %v3762, %v3762
    %v3827 = vmul.f32 %v3763, %v3763
    %v3828 = vmul.f32 %v3764, %v3764
    %v3829 = vmul.f32 %v3765, %v3765
    %v3830 = vmul.f32 %v3766, %v3766
    %v3831 = vmul.f32 %v3767, %v3767
    %v3832 = vmul.f32 %v3768, %v3768
    %v3833 = vmul.f32 %v3769, %v3769
    %v3834 = vmul.f32 %v3770, %v3770
    %v3835 = vmul.f32 %v3771, %v3771
    %v3836 = vmul.f32 %v3772, %v3772
    %v3837 = vmul.f32 %v3773, %v3773
    %v3838 = vmul.f32 %v3774, %v3774
    %v3839 = vmul.f32 %v3775, %v3775
    %v3840 = vmul.f32 %v3776, %v3776
    %v3841 = vmul.f32 %v3777, %v3777
    %v3842 = vmul.f32 %v3778, %v3778
    %v3843 = vmul.f32 %v3779, %v3779
    %v3844 = vmul.f32 %v3780, %v3780
    %v3845 = vmul.f32 %v3781, %v3781
    %v3846 = vmul.f32 %v3782, %v3782
    %v3847 = vmul.f32 %v3783, %v3783
    %v3848 = vmul.f32 %v3784, %v3784
    %v3849 = vmul.f32 %v3785, %v3785
    %v3850 = vmul.f32 %v3786, %v3786
    %v3851 = vmul.f32 %v3787, %v3787
    %v3852 = vmul.f32 %v3788, %v3788
    %v3853 = vmul.f32 %v3789, %v3789
    %v3854 = vmul.f32 %v3790, %v3790
    %v3855 = vmul.f32 %v3791, %v3791
    %v3856 = vmul.f32 %v3792, %v3792
    %v3857 = vmul.f32 %v3793, %v3793
    %v3858 = vmul.f32 %v3794, %v3794
    %v3859 = vmul.f32 %v3795, %v3795
    %v3860 = vmul.f32 %v3796, %v3796
    %v3861 = vmul.f32 %v3797, %v3797
    %v3862 = vmul.f32 %v3798, %v3798
    %v3863 = vmul.f32 %v3799, %v3799
    %v3864 = vmul.f32 %v3800, %v3800
    %v3865 = vmul.f32 %v3801, %v3801
    %v3866 = vmul.f32 %v3802, %v3802
    %v3867 = vmul.f32 %v3803, %v3803
    %v3868 = vmul.f32 %v3804, %v3804
    %v3869 = vmul.f32 %v3805, %v3805
    %v3870 = vmul.f32 %v3806, %v3806
    %v3871 = vmul.f32 %v3807, %v3807
    %v3872 = vmul.f32 %v3808, %v3808
    %v3873 = vadd.f32 %v3809, %v3810
    %3874 = vadd.xlane.f32.xlu0 %v3873
    %v3875 = vpop.xlane.xlu0 %3874
    %v3876 = vadd.f32 %v3811, %v3812
    %3877 = vadd.xlane.f32.xlu0 %v3876
    %v3878 = vpop.xlane.xlu0 %3877
    %v3879 = vadd.f32 %v3813, %v3814
    %3880 = vadd.xlane.f32.xlu0 %v3879
    %v3881 = vpop.xlane.xlu0 %3880
    %v3882 = vadd.f32 %v3815, %v3816
    %3883 = vadd.xlane.f32.xlu0 %v3882
    %v3884 = vpop.xlane.xlu0 %3883
    %v3885 = vadd.f32 %v3817, %v3818
    %3886 = vadd.xlane.f32.xlu0 %v3885
    %v3887 = vpop.xlane.xlu0 %3886
    %v3888 = vadd.f32 %v3819, %v3820
    %3889 = vadd.xlane.f32.xlu0 %v3888
    %v3890 = vpop.xlane.xlu0 %3889
    %v3891 = vadd.f32 %v3821, %v3822
    %3892 = vadd.xlane.f32.xlu0 %v3891
    %v3893 = vpop.xlane.xlu0 %3892
    %v3894 = vadd.f32 %v3823, %v3824
    %3895 = vadd.xlane.f32.xlu0 %v3894
    %v3896 = vpop.xlane.xlu0 %3895
    %v3897 = vadd.f32 %v3825, %v3826
    %3898 = vadd.xlane.f32.xlu0 %v3897
    %v3899 = vpop.xlane.xlu0 %3898
    %v3900 = vadd.f32 %v3827, %v3828
    %3901 = vadd.xlane.f32.xlu0 %v3900
    %v3902 = vpop.xlane.xlu0 %3901
    %v3903 = vadd.f32 %v3829, %v3830
    %3904 = vadd.xlane.f32.xlu0 %v3903
    %v3905 = vpop.xlane.xlu0 %3904
    %v3906 = vadd.f32 %v3831, %v3832
    %3907 = vadd.xlane.f32.xlu0 %v3906
    %v3908 = vpop.xlane.xlu0 %3907
    %v3909 = vadd.f32 %v3833, %v3834
    %3910 = vadd.xlane.f32.xlu0 %v3909
    %v3911 = vpop.xlane.xlu0 %3910
    %v3912 = vadd.f32 %v3835, %v3836
    %3913 = vadd.xlane.f32.xlu0 %v3912
    %v3914 = vpop.xlane.xlu0 %3913
    %v3915 = vadd.f32 %v3837, %v3838
    %3916 = vadd.xlane.f32.xlu0 %v3915
    %v3917 = vpop.xlane.xlu0 %3916
    %v3918 = vadd.f32 %v3839, %v3840
    %3919 = vadd.xlane.f32.xlu0 %v3918
    %v3920 = vpop.xlane.xlu0 %3919
    %v3921 = vadd.f32 %v3841, %v3842
    %3922 = vadd.xlane.f32.xlu0 %v3921
    %v3923 = vpop.xlane.xlu0 %3922
    %v3924 = vadd.f32 %v3843, %v3844
    %3925 = vadd.xlane.f32.xlu0 %v3924
    %v3926 = vpop.xlane.xlu0 %3925
    %v3927 = vadd.f32 %v3845, %v3846
    %3928 = vadd.xlane.f32.xlu0 %v3927
    %v3929 = vpop.xlane.xlu0 %3928
    %v3930 = vadd.f32 %v3847, %v3848
    %3931 = vadd.xlane.f32.xlu0 %v3930
    %v3932 = vpop.xlane.xlu0 %3931
    %v3933 = vadd.f32 %v3849, %v3850
    %3934 = vadd.xlane.f32.xlu0 %v3933
    %v3935 = vpop.xlane.xlu0 %3934
    %v3936 = vadd.f32 %v3851, %v3852
    %3937 = vadd.xlane.f32.xlu0 %v3936
    %v3938 = vpop.xlane.xlu0 %3937
    %v3939 = vadd.f32 %v3853, %v3854
    %3940 = vadd.xlane.f32.xlu0 %v3939
    %v3941 = vpop.xlane.xlu0 %3940
    %v3942 = vadd.f32 %v3855, %v3856
    %3943 = vadd.xlane.f32.xlu0 %v3942
    %v3944 = vpop.xlane.xlu0 %3943
    %v3945 = vadd.f32 %v3857, %v3858
    %3946 = vadd.xlane.f32.xlu0 %v3945
    %v3947 = vpop.xlane.xlu0 %3946
    %v3948 = vadd.f32 %v3859, %v3860
    %3949 = vadd.xlane.f32.xlu0 %v3948
    %v3950 = vpop.xlane.xlu0 %3949
    %v3951 = vadd.f32 %v3861, %v3862
    %3952 = vadd.xlane.f32.xlu0 %v3951
    %v3953 = vpop.xlane.xlu0 %3952
    %v3954 = vadd.f32 %v3863, %v3864
    %3955 = vadd.xlane.f32.xlu0 %v3954
    %v3956 = vpop.xlane.xlu0 %3955
    %v3957 = vadd.f32 %v3865, %v3866
    %3958 = vadd.xlane.f32.xlu0 %v3957
    %v3959 = vpop.xlane.xlu0 %3958
    %v3960 = vadd.f32 %v3867, %v3868
    %3961 = vadd.xlane.f32.xlu0 %v3960
    %v3962 = vpop.xlane.xlu0 %3961
    %v3963 = vadd.f32 %v3869, %v3870
    %3964 = vadd.xlane.f32.xlu0 %v3963
    %v3965 = vpop.xlane.xlu0 %3964
    %v3966 = vadd.f32 %v3871, %v3872
    %3967 = vadd.xlane.f32.xlu0 %v3966
    %v3968 = vpop.xlane.xlu0 %3967
    %v3969 = vmul.f32 %v3875, %v2488
    %v3970 = vmul.f32 %v3878, %v2488
    %v3971 = vmul.f32 %v3881, %v2488
    %v3972 = vmul.f32 %v3884, %v2488
    %v3973 = vmul.f32 %v3887, %v2488
    %v3974 = vmul.f32 %v3890, %v2488
    %v3975 = vmul.f32 %v3893, %v2488
    %v3976 = vmul.f32 %v3896, %v2488
    %v3977 = vmul.f32 %v3899, %v2488
    %v3978 = vmul.f32 %v3902, %v2488
    %v3979 = vmul.f32 %v3905, %v2488
    %v3980 = vmul.f32 %v3908, %v2488
    %v3981 = vmul.f32 %v3911, %v2488
    %v3982 = vmul.f32 %v3914, %v2488
    %v3983 = vmul.f32 %v3917, %v2488
    %v3984 = vmul.f32 %v3920, %v2488
    %v3985 = vmul.f32 %v3923, %v2488
    %v3986 = vmul.f32 %v3926, %v2488
    %v3987 = vmul.f32 %v3929, %v2488
    %v3988 = vmul.f32 %v3932, %v2488
    %v3989 = vmul.f32 %v3935, %v2488
    %v3990 = vmul.f32 %v3938, %v2488
    %v3991 = vmul.f32 %v3941, %v2488
    %v3992 = vmul.f32 %v3944, %v2488
    %v3993 = vmul.f32 %v3947, %v2488
    %v3994 = vmul.f32 %v3950, %v2488
    %v3995 = vmul.f32 %v3953, %v2488
    %v3996 = vmul.f32 %v3956, %v2488
    %v3997 = vmul.f32 %v3959, %v2488
    %v3998 = vmul.f32 %v3962, %v2488
    %v3999 = vmul.f32 %v3965, %v2488
    %v4000 = vmul.f32 %v3968, %v2488
    %v4001 = vadd.f32 %v3969, 1e-05
    %v4002 = vadd.f32 %v3970, 1e-05
    %v4003 = vadd.f32 %v3971, 1e-05
    %v4004 = vadd.f32 %v3972, 1e-05
    %v4005 = vadd.f32 %v3973, 1e-05
    %v4006 = vadd.f32 %v3974, 1e-05
    %v4007 = vadd.f32 %v3975, 1e-05
    %v4008 = vadd.f32 %v3976, 1e-05
    %v4009 = vadd.f32 %v3977, 1e-05
    %v4010 = vadd.f32 %v3978, 1e-05
    %v4011 = vadd.f32 %v3979, 1e-05
    %v4012 = vadd.f32 %v3980, 1e-05
    %v4013 = vadd.f32 %v3981, 1e-05
    %v4014 = vadd.f32 %v3982, 1e-05
    %v4015 = vadd.f32 %v3983, 1e-05
    %v4016 = vadd.f32 %v3984, 1e-05
    %v4017 = vadd.f32 %v3985, 1e-05
    %v4018 = vadd.f32 %v3986, 1e-05
    %v4019 = vadd.f32 %v3987, 1e-05
    %v4020 = vadd.f32 %v3988, 1e-05
    %v4021 = vadd.f32 %v3989, 1e-05
    %v4022 = vadd.f32 %v3990, 1e-05
    %v4023 = vadd.f32 %v3991, 1e-05
    %v4024 = vadd.f32 %v3992, 1e-05
    %v4025 = vadd.f32 %v3993, 1e-05
    %v4026 = vadd.f32 %v3994, 1e-05
    %v4027 = vadd.f32 %v3995, 1e-05
    %v4028 = vadd.f32 %v3996, 1e-05
    %v4029 = vadd.f32 %v3997, 1e-05
    %v4030 = vadd.f32 %v3998, 1e-05
    %v4031 = vadd.f32 %v3999, 1e-05
    %v4032 = vadd.f32 %v4000, 1e-05
    %v4033 = vrsqrt.pop %v4001
    %v4034 = vrsqrt.pop %v4002
    %v4035 = vrsqrt.pop %v4003
    %v4036 = vrsqrt.pop %v4004
    %v4037 = vrsqrt.pop %v4005
    %v4038 = vrsqrt.pop %v4006
    %v4039 = vrsqrt.pop %v4007
    %v4040 = vrsqrt.pop %v4008
    %v4041 = vrsqrt.pop %v4009
    %v4042 = vrsqrt.pop %v4010
    %v4043 = vrsqrt.pop %v4011
    %v4044 = vrsqrt.pop %v4012
    %v4045 = vrsqrt.pop %v4013
    %v4046 = vrsqrt.pop %v4014
    %v4047 = vrsqrt.pop %v4015
    %v4048 = vrsqrt.pop %v4016
    %v4049 = vrsqrt.pop %v4017
    %v4050 = vrsqrt.pop %v4018
    %v4051 = vrsqrt.pop %v4019
    %v4052 = vrsqrt.pop %v4020
    %v4053 = vrsqrt.pop %v4021
    %v4054 = vrsqrt.pop %v4022
    %v4055 = vrsqrt.pop %v4023
    %v4056 = vrsqrt.pop %v4024
    %v4057 = vrsqrt.pop %v4025
    %v4058 = vrsqrt.pop %v4026
    %v4059 = vrsqrt.pop %v4027
    %v4060 = vrsqrt.pop %v4028
    %v4061 = vrsqrt.pop %v4029
    %v4062 = vrsqrt.pop %v4030
    %v4063 = vrsqrt.pop %v4031
    %v4064 = vrsqrt.pop %v4032
    %v4065 = vmul.f32 %v3745, %v4033
    %v4066 = vmul.f32 %v3746, %v4033
    %v4067 = vmul.f32 %v3747, %v4034
    %v4068 = vmul.f32 %v3748, %v4034
    %v4069 = vmul.f32 %v3749, %v4035
    %v4070 = vmul.f32 %v3750, %v4035
    %v4071 = vmul.f32 %v3751, %v4036
    %v4072 = vmul.f32 %v3752, %v4036
    %v4073 = vmul.f32 %v3753, %v4037
    %v4074 = vmul.f32 %v3754, %v4037
    %v4075 = vmul.f32 %v3755, %v4038
    %v4076 = vmul.f32 %v3756, %v4038
    %v4077 = vmul.f32 %v3757, %v4039
    %v4078 = vmul.f32 %v3758, %v4039
    %v4079 = vmul.f32 %v3759, %v4040
    %v4080 = vmul.f32 %v3760, %v4040
    %v4081 = vmul.f32 %v3761, %v4041
    %v4082 = vmul.f32 %v3762, %v4041
    %v4083 = vmul.f32 %v3763, %v4042
    %v4084 = vmul.f32 %v3764, %v4042
    %v4085 = vmul.f32 %v3765, %v4043
    %v4086 = vmul.f32 %v3766, %v4043
    %v4087 = vmul.f32 %v3767, %v4044
    %v4088 = vmul.f32 %v3768, %v4044
    %v4089 = vmul.f32 %v3769, %v4045
    %v4090 = vmul.f32 %v3770, %v4045
    %v4091 = vmul.f32 %v3771, %v4046
    %v4092 = vmul.f32 %v3772, %v4046
    %v4093 = vmul.f32 %v3773, %v4047
    %v4094 = vmul.f32 %v3774, %v4047
    %v4095 = vmul.f32 %v3775, %v4048
    %v4096 = vmul.f32 %v3776, %v4048
    %v4097 = vmul.f32 %v3777, %v4049
    %v4098 = vmul.f32 %v3778, %v4049
    %v4099 = vmul.f32 %v3779, %v4050
    %v4100 = vmul.f32 %v3780, %v4050
    %v4101 = vmul.f32 %v3781, %v4051
    %v4102 = vmul.f32 %v3782, %v4051
    %v4103 = vmul.f32 %v3783, %v4052
    %v4104 = vmul.f32 %v3784, %v4052
    %v4105 = vmul.f32 %v3785, %v4053
    %v4106 = vmul.f32 %v3786, %v4053
    %v4107 = vmul.f32 %v3787, %v4054
    %v4108 = vmul.f32 %v3788, %v4054
    %v4109 = vmul.f32 %v3789, %v4055
    %v4110 = vmul.f32 %v3790, %v4055
    %v4111 = vmul.f32 %v3791, %v4056
    %v4112 = vmul.f32 %v3792, %v4056
    %v4113 = vmul.f32 %v3793, %v4057
    %v4114 = vmul.f32 %v3794, %v4057
    %v4115 = vmul.f32 %v3795, %v4058
    %v4116 = vmul.f32 %v3796, %v4058
    %v4117 = vmul.f32 %v3797, %v4059
    %v4118 = vmul.f32 %v3798, %v4059
    %v4119 = vmul.f32 %v3799, %v4060
    %v4120 = vmul.f32 %v3800, %v4060
    %v4121 = vmul.f32 %v3801, %v4061
    %v4122 = vmul.f32 %v3802, %v4061
    %v4123 = vmul.f32 %v3803, %v4062
    %v4124 = vmul.f32 %v3804, %v4062
    %v4125 = vmul.f32 %v3805, %v4063
    %v4126 = vmul.f32 %v3806, %v4063
    %v4127 = vmul.f32 %v3807, %v4064
    %v4128 = vmul.f32 %v3808, %v4064
    %v4130 = vlaneseq
    %v4131 = vshrl.u32 %v4130, 7
    %v4132 = vsub.s32 0, %v4131
    %v4133 = vrot.slane %v3186, %v4132
    %v4134 = vlaneseq
    %v4135 = vshrl.u32 %v4134, 7
    %v4136 = vsub.s32 1, %v4135
    %v4137 = vrot.slane %v3186, %v4136
    %v4140 = vmul.f32 %v4065, %v4133
    %v4141 = vmul.f32 %v4066, %v4137
    %v4142 = vmul.f32 %v4067, %v4133
    %v4143 = vmul.f32 %v4068, %v4137
    %v4144 = vmul.f32 %v4069, %v4133
    %v4145 = vmul.f32 %v4070, %v4137
    %v4146 = vmul.f32 %v4071, %v4133
    %v4147 = vmul.f32 %v4072, %v4137
    %v4148 = vmul.f32 %v4073, %v4133
    %v4149 = vmul.f32 %v4074, %v4137
    %v4150 = vmul.f32 %v4075, %v4133
    %v4151 = vmul.f32 %v4076, %v4137
    %v4152 = vmul.f32 %v4077, %v4133
    %v4153 = vmul.f32 %v4078, %v4137
    %v4154 = vmul.f32 %v4079, %v4133
    %v4155 = vmul.f32 %v4080, %v4137
    %v4156 = vmul.f32 %v4081, %v4133
    %v4157 = vmul.f32 %v4082, %v4137
    %v4158 = vmul.f32 %v4083, %v4133
    %v4159 = vmul.f32 %v4084, %v4137
    %v4160 = vmul.f32 %v4085, %v4133
    %v4161 = vmul.f32 %v4086, %v4137
    %v4162 = vmul.f32 %v4087, %v4133
    %v4163 = vmul.f32 %v4088, %v4137
    %v4164 = vmul.f32 %v4089, %v4133
    %v4165 = vmul.f32 %v4090, %v4137
    %v4166 = vmul.f32 %v4091, %v4133
    %v4167 = vmul.f32 %v4092, %v4137
    %v4168 = vmul.f32 %v4093, %v4133
    %v4169 = vmul.f32 %v4094, %v4137
    %v4170 = vmul.f32 %v4095, %v4133
    %v4171 = vmul.f32 %v4096, %v4137
    %v4172 = vmul.f32 %v4097, %v4133
    %v4173 = vmul.f32 %v4098, %v4137
    %v4174 = vmul.f32 %v4099, %v4133
    %v4175 = vmul.f32 %v4100, %v4137
    %v4176 = vmul.f32 %v4101, %v4133
    %v4177 = vmul.f32 %v4102, %v4137
    %v4178 = vmul.f32 %v4103, %v4133
    %v4179 = vmul.f32 %v4104, %v4137
    %v4180 = vmul.f32 %v4105, %v4133
    %v4181 = vmul.f32 %v4106, %v4137
    %v4182 = vmul.f32 %v4107, %v4133
    %v4183 = vmul.f32 %v4108, %v4137
    %v4184 = vmul.f32 %v4109, %v4133
    %v4185 = vmul.f32 %v4110, %v4137
    %v4186 = vmul.f32 %v4111, %v4133
    %v4187 = vmul.f32 %v4112, %v4137
    %v4188 = vmul.f32 %v4113, %v4133
    %v4189 = vmul.f32 %v4114, %v4137
    %v4190 = vmul.f32 %v4115, %v4133
    %v4191 = vmul.f32 %v4116, %v4137
    %v4192 = vmul.f32 %v4117, %v4133
    %v4193 = vmul.f32 %v4118, %v4137
    %v4194 = vmul.f32 %v4119, %v4133
    %v4195 = vmul.f32 %v4120, %v4137
    %v4196 = vmul.f32 %v4121, %v4133
    %v4197 = vmul.f32 %v4122, %v4137
    %v4198 = vmul.f32 %v4123, %v4133
    %v4199 = vmul.f32 %v4124, %v4137
    %v4200 = vmul.f32 %v4125, %v4133
    %v4201 = vmul.f32 %v4126, %v4137
    %v4202 = vmul.f32 %v4127, %v4133
    %v4203 = vmul.f32 %v4128, %v4137
    %v4205 = vlaneseq
    %v4206 = vshrl.u32 %v4205, 7
    %v4207 = vsub.s32 0, %v4206
    %v4208 = vrot.slane %v3188, %v4207
    %v4209 = vlaneseq
    %v4210 = vshrl.u32 %v4209, 7
    %v4211 = vsub.s32 1, %v4210
    %v4212 = vrot.slane %v3188, %v4211
    %v4215 = vadd.f32 %v4140, %v4208
    %v4216 = vadd.f32 %v4141, %v4212
    %v4217 = vadd.f32 %v4142, %v4208
    %v4218 = vadd.f32 %v4143, %v4212
    %v4219 = vadd.f32 %v4144, %v4208
    %v4220 = vadd.f32 %v4145, %v4212
    %v4221 = vadd.f32 %v4146, %v4208
    %v4222 = vadd.f32 %v4147, %v4212
    %v4223 = vadd.f32 %v4148, %v4208
    %v4224 = vadd.f32 %v4149, %v4212
    %v4225 = vadd.f32 %v4150, %v4208
    %v4226 = vadd.f32 %v4151, %v4212
    %v4227 = vadd.f32 %v4152, %v4208
    %v4228 = vadd.f32 %v4153, %v4212
    %v4229 = vadd.f32 %v4154, %v4208
    %v4230 = vadd.f32 %v4155, %v4212
    %v4231 = vadd.f32 %v4156, %v4208
    %v4232 = vadd.f32 %v4157, %v4212
    %v4233 = vadd.f32 %v4158, %v4208
    %v4234 = vadd.f32 %v4159, %v4212
    %v4235 = vadd.f32 %v4160, %v4208
    %v4236 = vadd.f32 %v4161, %v4212
    %v4237 = vadd.f32 %v4162, %v4208
    %v4238 = vadd.f32 %v4163, %v4212
    %v4239 = vadd.f32 %v4164, %v4208
    %v4240 = vadd.f32 %v4165, %v4212
    %v4241 = vadd.f32 %v4166, %v4208
    %v4242 = vadd.f32 %v4167, %v4212
    %v4243 = vadd.f32 %v4168, %v4208
    %v4244 = vadd.f32 %v4169, %v4212
    %v4245 = vadd.f32 %v4170, %v4208
    %v4246 = vadd.f32 %v4171, %v4212
    %v4247 = vadd.f32 %v4172, %v4208
    %v4248 = vadd.f32 %v4173, %v4212
    %v4249 = vadd.f32 %v4174, %v4208
    %v4250 = vadd.f32 %v4175, %v4212
    %v4251 = vadd.f32 %v4176, %v4208
    %v4252 = vadd.f32 %v4177, %v4212
    %v4253 = vadd.f32 %v4178, %v4208
    %v4254 = vadd.f32 %v4179, %v4212
    %v4255 = vadd.f32 %v4180, %v4208
    %v4256 = vadd.f32 %v4181, %v4212
    %v4257 = vadd.f32 %v4182, %v4208
    %v4258 = vadd.f32 %v4183, %v4212
    %v4259 = vadd.f32 %v4184, %v4208
    %v4260 = vadd.f32 %v4185, %v4212
    %v4261 = vadd.f32 %v4186, %v4208
    %v4262 = vadd.f32 %v4187, %v4212
    %v4263 = vadd.f32 %v4188, %v4208
    %v4264 = vadd.f32 %v4189, %v4212
    %v4265 = vadd.f32 %v4190, %v4208
    %v4266 = vadd.f32 %v4191, %v4212
    %v4267 = vadd.f32 %v4192, %v4208
    %v4268 = vadd.f32 %v4193, %v4212
    %v4269 = vadd.f32 %v4194, %v4208
    %v4270 = vadd.f32 %v4195, %v4212
    %v4271 = vadd.f32 %v4196, %v4208
    %v4272 = vadd.f32 %v4197, %v4212
    %v4273 = vadd.f32 %v4198, %v4208
    %v4274 = vadd.f32 %v4199, %v4212
    %v4275 = vadd.f32 %v4200, %v4208
    %v4276 = vadd.f32 %v4201, %v4212
    %v4277 = vadd.f32 %v4202, %v4208
    %v4278 = vadd.f32 %v4203, %v4212
    %v4279 = vmul.f32 %v4215, 0.1
    %v4280 = vmul.f32 %v4216, 0.1
    %v4281 = vmul.f32 %v4217, 0.1
    %v4282 = vmul.f32 %v4218, 0.1
    %v4283 = vmul.f32 %v4219, 0.1
    %v4284 = vmul.f32 %v4220, 0.1
    %v4285 = vmul.f32 %v4221, 0.1
    %v4286 = vmul.f32 %v4222, 0.1
    %v4287 = vmul.f32 %v4223, 0.1
    %v4288 = vmul.f32 %v4224, 0.1
    %v4289 = vmul.f32 %v4225, 0.1
    %v4290 = vmul.f32 %v4226, 0.1
    %v4291 = vmul.f32 %v4227, 0.1
    %v4292 = vmul.f32 %v4228, 0.1
    %v4293 = vmul.f32 %v4229, 0.1
    %v4294 = vmul.f32 %v4230, 0.1
    %v4295 = vmul.f32 %v4231, 0.1
    %v4296 = vmul.f32 %v4232, 0.1
    %v4297 = vmul.f32 %v4233, 0.1
    %v4298 = vmul.f32 %v4234, 0.1
    %v4299 = vmul.f32 %v4235, 0.1
    %v4300 = vmul.f32 %v4236, 0.1
    %v4301 = vmul.f32 %v4237, 0.1
    %v4302 = vmul.f32 %v4238, 0.1
    %v4303 = vmul.f32 %v4239, 0.1
    %v4304 = vmul.f32 %v4240, 0.1
    %v4305 = vmul.f32 %v4241, 0.1
    %v4306 = vmul.f32 %v4242, 0.1
    %v4307 = vmul.f32 %v4243, 0.1
    %v4308 = vmul.f32 %v4244, 0.1
    %v4309 = vmul.f32 %v4245, 0.1
    %v4310 = vmul.f32 %v4246, 0.1
    %v4311 = vmul.f32 %v4247, 0.1
    %v4312 = vmul.f32 %v4248, 0.1
    %v4313 = vmul.f32 %v4249, 0.1
    %v4314 = vmul.f32 %v4250, 0.1
    %v4315 = vmul.f32 %v4251, 0.1
    %v4316 = vmul.f32 %v4252, 0.1
    %v4317 = vmul.f32 %v4253, 0.1
    %v4318 = vmul.f32 %v4254, 0.1
    %v4319 = vmul.f32 %v4255, 0.1
    %v4320 = vmul.f32 %v4256, 0.1
    %v4321 = vmul.f32 %v4257, 0.1
    %v4322 = vmul.f32 %v4258, 0.1
    %v4323 = vmul.f32 %v4259, 0.1
    %v4324 = vmul.f32 %v4260, 0.1
    %v4325 = vmul.f32 %v4261, 0.1
    %v4326 = vmul.f32 %v4262, 0.1
    %v4327 = vmul.f32 %v4263, 0.1
    %v4328 = vmul.f32 %v4264, 0.1
    %v4329 = vmul.f32 %v4265, 0.1
    %v4330 = vmul.f32 %v4266, 0.1
    %v4331 = vmul.f32 %v4267, 0.1
    %v4332 = vmul.f32 %v4268, 0.1
    %v4333 = vmul.f32 %v4269, 0.1
    %v4334 = vmul.f32 %v4270, 0.1
    %v4335 = vmul.f32 %v4271, 0.1
    %v4336 = vmul.f32 %v4272, 0.1
    %v4337 = vmul.f32 %v4273, 0.1
    %v4338 = vmul.f32 %v4274, 0.1
    %v4339 = vmul.f32 %v4275, 0.1
    %v4340 = vmul.f32 %v4276, 0.1
    %v4341 = vmul.f32 %v4277, 0.1
    %v4342 = vmul.f32 %v4278, 0.1
    %v4343 = vmax.f32 %v4215, %v4279
    %v4344 = vmax.f32 %v4216, %v4280
    %v4345 = vmax.f32 %v4217, %v4281
    %v4346 = vmax.f32 %v4218, %v4282
    %v4347 = vmax.f32 %v4219, %v4283
    %v4348 = vmax.f32 %v4220, %v4284
    %v4349 = vmax.f32 %v4221, %v4285
    %v4350 = vmax.f32 %v4222, %v4286
    %v4351 = vmax.f32 %v4223, %v4287
    %v4352 = vmax.f32 %v4224, %v4288
    %v4353 = vmax.f32 %v4225, %v4289
    %v4354 = vmax.f32 %v4226, %v4290
    %v4355 = vmax.f32 %v4227, %v4291
    %v4356 = vmax.f32 %v4228, %v4292
    %v4357 = vmax.f32 %v4229, %v4293
    %v4358 = vmax.f32 %v4230, %v4294
    %v4359 = vmax.f32 %v4231, %v4295
    %v4360 = vmax.f32 %v4232, %v4296
    %v4361 = vmax.f32 %v4233, %v4297
    %v4362 = vmax.f32 %v4234, %v4298
    %v4363 = vmax.f32 %v4235, %v4299
    %v4364 = vmax.f32 %v4236, %v4300
    %v4365 = vmax.f32 %v4237, %v4301
    %v4366 = vmax.f32 %v4238, %v4302
    %v4367 = vmax.f32 %v4239, %v4303
    %v4368 = vmax.f32 %v4240, %v4304
    %v4369 = vmax.f32 %v4241, %v4305
    %v4370 = vmax.f32 %v4242, %v4306
    %v4371 = vmax.f32 %v4243, %v4307
    %v4372 = vmax.f32 %v4244, %v4308
    %v4373 = vmax.f32 %v4245, %v4309
    %v4374 = vmax.f32 %v4246, %v4310
    %v4375 = vmax.f32 %v4247, %v4311
    %v4376 = vmax.f32 %v4248, %v4312
    %v4377 = vmax.f32 %v4249, %v4313
    %v4378 = vmax.f32 %v4250, %v4314
    %v4379 = vmax.f32 %v4251, %v4315
    %v4380 = vmax.f32 %v4252, %v4316
    %v4381 = vmax.f32 %v4253, %v4317
    %v4382 = vmax.f32 %v4254, %v4318
    %v4383 = vmax.f32 %v4255, %v4319
    %v4384 = vmax.f32 %v4256, %v4320
    %v4385 = vmax.f32 %v4257, %v4321
    %v4386 = vmax.f32 %v4258, %v4322
    %v4387 = vmax.f32 %v4259, %v4323
    %v4388 = vmax.f32 %v4260, %v4324
    %v4389 = vmax.f32 %v4261, %v4325
    %v4390 = vmax.f32 %v4262, %v4326
    %v4391 = vmax.f32 %v4263, %v4327
    %v4392 = vmax.f32 %v4264, %v4328
    %v4393 = vmax.f32 %v4265, %v4329
    %v4394 = vmax.f32 %v4266, %v4330
    %v4395 = vmax.f32 %v4267, %v4331
    %v4396 = vmax.f32 %v4268, %v4332
    %v4397 = vmax.f32 %v4269, %v4333
    %v4398 = vmax.f32 %v4270, %v4334
    %v4399 = vmax.f32 %v4271, %v4335
    %v4400 = vmax.f32 %v4272, %v4336
    %v4401 = vmax.f32 %v4273, %v4337
    %v4402 = vmax.f32 %v4274, %v4338
    %v4403 = vmax.f32 %v4275, %v4339
    %v4404 = vmax.f32 %v4276, %v4340
    %v4405 = vmax.f32 %v4277, %v4341
    %v4406 = vmax.f32 %v4278, %v4342
    %v4407 = vld [vmem:[#allocation7 + $0x19] ss:$0 sm:$0xff]
    %v4408 = vld [vmem:[#allocation7 + $0x1a] ss:$0 sm:$0xff]
    %v4409 = vld [vmem:[#allocation7 + $0x1b] ss:$0 sm:$0xff]
    %v4410 = vpack.c.bf16 %v4345, %v4343
    %v4411 = vpack.c.bf16 %v4346, %v4344
    %v4412 = vpack.c.bf16 %v4349, %v4347
    %v4413 = vpack.c.bf16 %v4350, %v4348
    %v4414 = vpack.c.bf16 %v4353, %v4351
    %v4415 = vpack.c.bf16 %v4354, %v4352
    %v4416 = vpack.c.bf16 %v4357, %v4355
    %v4417 = vpack.c.bf16 %v4358, %v4356
    %v4418 = vpack.c.bf16 %v4361, %v4359
    %v4419 = vpack.c.bf16 %v4362, %v4360
    %v4420 = vpack.c.bf16 %v4365, %v4363
    %v4421 = vpack.c.bf16 %v4366, %v4364
    %v4422 = vpack.c.bf16 %v4369, %v4367
    %v4423 = vpack.c.bf16 %v4370, %v4368
    %v4424 = vpack.c.bf16 %v4373, %v4371
    %v4425 = vpack.c.bf16 %v4374, %v4372
    %v4426 = vpack.c.bf16 %v4377, %v4375
    %v4427 = vpack.c.bf16 %v4378, %v4376
    %v4428 = vpack.c.bf16 %v4381, %v4379
    %v4429 = vpack.c.bf16 %v4382, %v4380
    %v4430 = vpack.c.bf16 %v4385, %v4383
    %v4431 = vpack.c.bf16 %v4386, %v4384
    %v4432 = vpack.c.bf16 %v4389, %v4387
    %v4433 = vpack.c.bf16 %v4390, %v4388
    %v4434 = vpack.c.bf16 %v4393, %v4391
    %v4435 = vpack.c.bf16 %v4394, %v4392
    %v4436 = vpack.c.bf16 %v4397, %v4395
    %v4437 = vpack.c.bf16 %v4398, %v4396
    %v4438 = vpack.c.bf16 %v4401, %v4399
    %v4439 = vpack.c.bf16 %v4402, %v4400
    %v4440 = vpack.c.bf16 %v4405, %v4403
    %v4441 = vpack.c.bf16 %v4406, %v4404
    %v4442 = vld [vmem:[#allocation5] sm:$0xf]
    %v4443 = vld [vmem:[#allocation5 + $0x4] sm:$0xf]
    %v4444 = vld [vmem:[#allocation5 + $0x8] sm:$0xf]
    %v4445 = vld [vmem:[#allocation5 + $0xc] sm:$0xf]
    %v4446 = vld [vmem:[#allocation5 + $0x10] sm:$0xf]
    %v4447 = vld [vmem:[#allocation5 + $0x14] sm:$0xf]
    %v4448 = vld [vmem:[#allocation5 + $0x18] sm:$0xf]
    %v4449 = vld [vmem:[#allocation5 + $0x1c] sm:$0xf]
    %v4450 = vld [vmem:[#allocation5 + $0x20] sm:$0xf]
    %v4451 = vld [vmem:[#allocation5 + $0x24] sm:$0xf]
    %v4452 = vld [vmem:[#allocation5 + $0x28] sm:$0xf]
    %v4453 = vld [vmem:[#allocation5 + $0x2c] sm:$0xf]
    %v4454 = vld [vmem:[#allocation5 + $0x30] sm:$0xf]
    %v4455 = vld [vmem:[#allocation5 + $0x34] sm:$0xf]
    %v4456 = vld [vmem:[#allocation5 + $0x38] sm:$0xf]
    %v4457 = vld [vmem:[#allocation5 + $0x3c] sm:$0xf]
    %v4458 = vld [vmem:[#allocation5 + $0x40] sm:$0xf]
    %v4459 = vld [vmem:[#allocation5 + $0x44] sm:$0xf]
    %v4460 = vld [vmem:[#allocation5 + $0x48] sm:$0xf]
    %v4461 = vld [vmem:[#allocation5 + $0x4c] sm:$0xf]
    %v4462 = vld [vmem:[#allocation5 + $0x50] sm:$0xf]
    %v4463 = vld [vmem:[#allocation5 + $0x54] sm:$0xf]
    %v4464 = vld [vmem:[#allocation5 + $0x58] sm:$0xf]
    %v4465 = vld [vmem:[#allocation5 + $0x5c] sm:$0xf]
    %v4466 = vld [vmem:[#allocation5 + $0x60] sm:$0xf]
    %v4467 = vld [vmem:[#allocation5 + $0x64] sm:$0xf]
    %v4468 = vld [vmem:[#allocation5 + $0x68] sm:$0xf]
    %v4469 = vld [vmem:[#allocation5 + $0x6c] sm:$0xf]
    %v4470 = vld [vmem:[#allocation5 + $0x70] sm:$0xf]
    %v4471 = vld [vmem:[#allocation5 + $0x74] sm:$0xf]
    %v4472 = vld [vmem:[#allocation5 + $0x78] sm:$0xf]
    %v4473 = vld [vmem:[#allocation5 + $0x7c] sm:$0xf]
    %v4506 = vunpack.c.l.b16 %v4442
    %v4507 = vunpack.c.l.b16 %v4443
    %v4508 = vunpack.c.l.b16 %v4444
    %v4509 = vunpack.c.l.b16 %v4445
    %v4510 = vunpack.c.l.b16 %v4446
    %v4511 = vunpack.c.l.b16 %v4447
    %v4512 = vunpack.c.l.b16 %v4448
    %v4513 = vunpack.c.l.b16 %v4449
    %v4514 = vunpack.c.l.b16 %v4450
    %v4515 = vunpack.c.l.b16 %v4451
    %v4516 = vunpack.c.l.b16 %v4452
    %v4517 = vunpack.c.l.b16 %v4453
    %v4518 = vunpack.c.l.b16 %v4454
    %v4519 = vunpack.c.l.b16 %v4455
    %v4520 = vunpack.c.l.b16 %v4456
    %v4521 = vunpack.c.l.b16 %v4457
    %v4522 = vunpack.c.l.b16 %v4458
    %v4523 = vunpack.c.l.b16 %v4459
    %v4524 = vunpack.c.l.b16 %v4460
    %v4525 = vunpack.c.l.b16 %v4461
    %v4526 = vunpack.c.l.b16 %v4462
    %v4527 = vunpack.c.l.b16 %v4463
    %v4528 = vunpack.c.l.b16 %v4464
    %v4529 = vunpack.c.l.b16 %v4465
    %v4530 = vunpack.c.l.b16 %v4466
    %v4531 = vunpack.c.l.b16 %v4467
    %v4532 = vunpack.c.l.b16 %v4468
    %v4533 = vunpack.c.l.b16 %v4469
    %v4534 = vunpack.c.l.b16 %v4470
    %v4535 = vunpack.c.l.b16 %v4471
    %v4536 = vunpack.c.l.b16 %v4472
    %v4537 = vunpack.c.l.b16 %v4473
    %v4538 = vpack.c.b16 %v4507, %v4506
    %v4539 = vpack.c.b16 %v4509, %v4508
    %v4540 = vpack.c.b16 %v4511, %v4510
    %v4541 = vpack.c.b16 %v4513, %v4512
    %v4542 = vpack.c.b16 %v4515, %v4514
    %v4543 = vpack.c.b16 %v4517, %v4516
    %v4544 = vpack.c.b16 %v4519, %v4518
    %v4545 = vpack.c.b16 %v4521, %v4520
    %v4546 = vpack.c.b16 %v4523, %v4522
    %v4547 = vpack.c.b16 %v4525, %v4524
    %v4548 = vpack.c.b16 %v4527, %v4526
    %v4549 = vpack.c.b16 %v4529, %v4528
    %v4550 = vpack.c.b16 %v4531, %v4530
    %v4551 = vpack.c.b16 %v4533, %v4532
    %v4552 = vpack.c.b16 %v4535, %v4534
    %v4553 = vpack.c.b16 %v4537, %v4536
    %4570 = vmatprep.subr.bf16.mxu0 0
    %4571 = vmatpush1.bf16.msra.mxu0 %v4538
    %4572 = vmatprep.subr.bf16.mxu0 0
    %4573 = vmatpush1.bf16.msra.mxu0 %v4539
    %4574 = vmatprep.subr.bf16.mxu0 0
    %4575 = vmatpush1.bf16.msra.mxu0 %v4540
    %4576 = vmatprep.subr.bf16.mxu0 0
    %4577 = vmatpush1.bf16.msra.mxu0 %v4541
    %4578 = vmatprep.subr.bf16.mxu0 0
    %4579 = vmatpush1.bf16.msra.mxu0 %v4542
    %4580 = vmatprep.subr.bf16.mxu0 0
    %4581 = vmatpush1.bf16.msra.mxu0 %v4543
    %4582 = vmatprep.subr.bf16.mxu0 0
    %4583 = vmatpush1.bf16.msra.mxu0 %v4544
    %4584 = vmatprep.subr.bf16.mxu0 0
    %4585 = vmatpush1.bf16.msra.mxu0 %v4545
    %4586 = vmatprep.subr.bf16.mxu0 0
    %4587 = vmatpush1.bf16.msra.mxu0 %v4546
    %4588 = vmatprep.subr.bf16.mxu0 0
    %4589 = vmatpush1.bf16.msra.mxu0 %v4547
    %4590 = vmatprep.subr.bf16.mxu0 0
    %4591 = vmatpush1.bf16.msra.mxu0 %v4548
    %4592 = vmatprep.subr.bf16.mxu0 0
    %4593 = vmatpush1.bf16.msra.mxu0 %v4549
    %4594 = vmatprep.subr.bf16.mxu0 0
    %4595 = vmatpush1.bf16.msra.mxu0 %v4550
    %4596 = vmatprep.subr.bf16.mxu0 0
    %4597 = vmatpush1.bf16.msra.mxu0 %v4551
    %4598 = vmatprep.subr.bf16.mxu0 0
    %4599 = vmatpush1.bf16.msra.mxu0 %v4552
    %4600 = vmatprep.subr.bf16.mxu0 0
    %4601 = vmatpush1.bf16.msra.mxu0 %v4553
    %4602 = vmatprep.mubr.bf16.mxu0 %v4411
    %4603 = vmatmul.mubr.bf16.gmra.mrb[0].mxu0 %v4410
    %v4604 = vpop.f32.mrb[0].mxu0
    %v4605 = vadd.f32 %v4407, %v4604
    %v4606 = vpop.f32.mrb[0].mxu0
    %v4607 = vpop.f32.mrb[0].mxu0
    %v4608 = vadd.f32 %v4407, %v4607
    %v4609 = vpop.f32.mrb[0].mxu0
    %4610 = vmatprep.mubr.bf16.mxu0 %v4413
    %4611 = vmatmul.mubr.bf16.gmra.mrb[0].mxu0 %v4412
    %v4612 = vpop.f32.mrb[0].mxu0
    %v4613 = vadd.f32 %v4407, %v4612
    %v4614 = vpop.f32.mrb[0].mxu0
    %v4615 = vpop.f32.mrb[0].mxu0
    %v4616 = vadd.f32 %v4407, %v4615
    %v4617 = vpop.f32.mrb[0].mxu0
    %4618 = vmatprep.mubr.bf16.mxu0 %v4415
    %4619 = vmatmul.mubr.bf16.gmra.mrb[0].mxu0 %v4414
    %v4620 = vpop.f32.mrb[0].mxu0
    %v4621 = vadd.f32 %v4407, %v4620
    %v4622 = vpop.f32.mrb[0].mxu0
    %v4623 = vpop.f32.mrb[0].mxu0
    %v4624 = vadd.f32 %v4407, %v4623
    %v4625 = vpop.f32.mrb[0].mxu0
    %4626 = vmatprep.mubr.bf16.mxu0 %v4417
    %4627 = vmatmul.mubr.bf16.gmra.mrb[0].mxu0 %v4416
    %v4628 = vpop.f32.mrb[0].mxu0
    %v4629 = vadd.f32 %v4407, %v4628
    %v4630 = vpop.f32.mrb[0].mxu0
    %v4631 = vpop.f32.mrb[0].mxu0
    %v4632 = vadd.f32 %v4407, %v4631
    %v4633 = vpop.f32.mrb[0].mxu0
    %4634 = vmatprep.mubr.bf16.mxu0 %v4419
    %4635 = vmatmul.mubr.bf16.gmra.mrb[0].mxu0 %v4418
    %v4636 = vpop.f32.mrb[0].mxu0
    %v4637 = vadd.f32 %v4407, %v4636
    %v4638 = vpop.f32.mrb[0].mxu0
    %v4639 = vpop.f32.mrb[0].mxu0
    %v4640 = vadd.f32 %v4407, %v4639
    %v4641 = vpop.f32.mrb[0].mxu0
    %4642 = vmatprep.mubr.bf16.mxu0 %v4421
    %4643 = vmatmul.mubr.bf16.gmra.mrb[0].mxu0 %v4420
    %v4644 = vpop.f32.mrb[0].mxu0
    %v4645 = vadd.f32 %v4407, %v4644
    %v4646 = vpop.f32.mrb[0].mxu0
    %v4647 = vpop.f32.mrb[0].mxu0
    %v4648 = vadd.f32 %v4407, %v4647
    %v4649 = vpop.f32.mrb[0].mxu0
    %4650 = vmatprep.mubr.bf16.mxu0 %v4423
    %4651 = vmatmul.mubr.bf16.gmra.mrb[0].mxu0 %v4422
    %v4652 = vpop.f32.mrb[0].mxu0
    %v4653 = vadd.f32 %v4407, %v4652
    %v4654 = vpop.f32.mrb[0].mxu0
    %v4655 = vpop.f32.mrb[0].mxu0
    %v4656 = vadd.f32 %v4407, %v4655
    %v4657 = vpop.f32.mrb[0].mxu0
    %4658 = vmatprep.mubr.bf16.mxu0 %v4425
    %4659 = vmatmul.mubr.bf16.gmra.mrb[0].mxu0 %v4424
    %v4660 = vpop.f32.mrb[0].mxu0
    %v4661 = vadd.f32 %v4407, %v4660
    %v4662 = vpop.f32.mrb[0].mxu0
    %v4663 = vpop.f32.mrb[0].mxu0
    %v4664 = vadd.f32 %v4407, %v4663
    %v4665 = vpop.f32.mrb[0].mxu0
    %4666 = vmatprep.mubr.bf16.mxu0 %v4427
    %4667 = vmatmul.mubr.bf16.gmra.mrb[0].mxu0 %v4426
    %v4668 = vpop.f32.mrb[0].mxu0
    %v4669 = vadd.f32 %v4407, %v4668
    %v4670 = vpop.f32.mrb[0].mxu0
    %v4671 = vpop.f32.mrb[0].mxu0
    %v4672 = vadd.f32 %v4407, %v4671
    %v4673 = vpop.f32.mrb[0].mxu0
    %4674 = vmatprep.mubr.bf16.mxu0 %v4429
    %4675 = vmatmul.mubr.bf16.gmra.mrb[0].mxu0 %v4428
    %v4676 = vpop.f32.mrb[0].mxu0
    %v4677 = vadd.f32 %v4407, %v4676
    %v4678 = vpop.f32.mrb[0].mxu0
    %v4679 = vpop.f32.mrb[0].mxu0
    %v4680 = vadd.f32 %v4407, %v4679
    %v4681 = vpop.f32.mrb[0].mxu0
    %4682 = vmatprep.mubr.bf16.mxu0 %v4431
    %4683 = vmatmul.mubr.bf16.gmra.mrb[0].mxu0 %v4430
    %v4684 = vpop.f32.mrb[0].mxu0
    %v4685 = vadd.f32 %v4407, %v4684
    %v4686 = vpop.f32.mrb[0].mxu0
    %v4687 = vpop.f32.mrb[0].mxu0
    %v4688 = vadd.f32 %v4407, %v4687
    %v4689 = vpop.f32.mrb[0].mxu0
    %4690 = vmatprep.mubr.bf16.mxu0 %v4433
    %4691 = vmatmul.mubr.bf16.gmra.mrb[0].mxu0 %v4432
    %v4692 = vpop.f32.mrb[0].mxu0
    %v4693 = vadd.f32 %v4407, %v4692
    %v4694 = vpop.f32.mrb[0].mxu0
    %v4695 = vpop.f32.mrb[0].mxu0
    %v4696 = vadd.f32 %v4407, %v4695
    %v4697 = vpop.f32.mrb[0].mxu0
    %4698 = vmatprep.mubr.bf16.mxu0 %v4435
    %4699 = vmatmul.mubr.bf16.gmra.mrb[0].mxu0 %v4434
    %v4700 = vpop.f32.mrb[0].mxu0
    %v4701 = vadd.f32 %v4407, %v4700
    %v4702 = vpop.f32.mrb[0].mxu0
    %v4703 = vpop.f32.mrb[0].mxu0
    %v4704 = vadd.f32 %v4407, %v4703
    %v4705 = vpop.f32.mrb[0].mxu0
    %4706 = vmatprep.mubr.bf16.mxu0 %v4437
    %4707 = vmatmul.mubr.bf16.gmra.mrb[0].mxu0 %v4436
    %v4708 = vpop.f32.mrb[0].mxu0
    %v4709 = vadd.f32 %v4407, %v4708
    %v4710 = vpop.f32.mrb[0].mxu0
    %v4711 = vpop.f32.mrb[0].mxu0
    %v4712 = vadd.f32 %v4407, %v4711
    %v4713 = vpop.f32.mrb[0].mxu0
    %4714 = vmatprep.mubr.bf16.mxu0 %v4439
    %4715 = vmatmul.mubr.bf16.gmra.mrb[0].mxu0 %v4438
    %v4716 = vpop.f32.mrb[0].mxu0
    %v4717 = vadd.f32 %v4407, %v4716
    %v4718 = vpop.f32.mrb[0].mxu0
    %v4719 = vpop.f32.mrb[0].mxu0
    %v4720 = vadd.f32 %v4407, %v4719
    %v4721 = vpop.f32.mrb[0].mxu0
    %4722 = vmatprep.mubr.bf16.mxu0 %v4441
    %4723 = vmatmul.mubr.bf16.gmra.mrb[0].mxu0 %v4440
    %v4724 = vpop.f32.mrb[0].mxu0
    %v4725 = vadd.f32 %v4407, %v4724
    %v4726 = vpop.f32.mrb[0].mxu0
    %v4727 = vpop.f32.mrb[0].mxu0
    %v4728 = vadd.f32 %v4407, %v4727
    %v4729 = vpop.f32.mrb[0].mxu0
    %4730 = vdwg.mxu0
    %4731 = vadd.xlane.f32.xlu0 %v4605
    %v4732 = vpop.xlane.xlu0 %4731
    %4733 = vadd.xlane.f32.xlu0 %v4608
    %v4734 = vpop.xlane.xlu0 %4733
    %4735 = vadd.xlane.f32.xlu0 %v4613
    %v4736 = vpop.xlane.xlu0 %4735
    %4737 = vadd.xlane.f32.xlu0 %v4616
    %v4738 = vpop.xlane.xlu0 %4737
    %4739 = vadd.xlane.f32.xlu0 %v4621
    %v4740 = vpop.xlane.xlu0 %4739
    %4741 = vadd.xlane.f32.xlu0 %v4624
    %v4742 = vpop.xlane.xlu0 %4741
    %4743 = vadd.xlane.f32.xlu0 %v4629
    %v4744 = vpop.xlane.xlu0 %4743
    %4745 = vadd.xlane.f32.xlu0 %v4632
    %v4746 = vpop.xlane.xlu0 %4745
    %4747 = vadd.xlane.f32.xlu0 %v4637
    %v4748 = vpop.xlane.xlu0 %4747
    %4749 = vadd.xlane.f32.xlu0 %v4640
    %v4750 = vpop.xlane.xlu0 %4749
    %4751 = vadd.xlane.f32.xlu0 %v4645
    %v4752 = vpop.xlane.xlu0 %4751
    %4753 = vadd.xlane.f32.xlu0 %v4648
    %v4754 = vpop.xlane.xlu0 %4753
    %4755 = vadd.xlane.f32.xlu0 %v4653
    %v4756 = vpop.xlane.xlu0 %4755
    %4757 = vadd.xlane.f32.xlu0 %v4656
    %v4758 = vpop.xlane.xlu0 %4757
    %4759 = vadd.xlane.f32.xlu0 %v4661
    %v4760 = vpop.xlane.xlu0 %4759
    %4761 = vadd.xlane.f32.xlu0 %v4664
    %v4762 = vpop.xlane.xlu0 %4761
    %4763 = vadd.xlane.f32.xlu0 %v4669
    %v4764 = vpop.xlane.xlu0 %4763
    %4765 = vadd.xlane.f32.xlu0 %v4672
    %v4766 = vpop.xlane.xlu0 %4765
    %4767 = vadd.xlane.f32.xlu0 %v4677
    %v4768 = vpop.xlane.xlu0 %4767
    %4769 = vadd.xlane.f32.xlu0 %v4680
    %v4770 = vpop.xlane.xlu0 %4769
    %4771 = vadd.xlane.f32.xlu0 %v4685
    %v4772 = vpop.xlane.xlu0 %4771
    %4773 = vadd.xlane.f32.xlu0 %v4688
    %v4774 = vpop.xlane.xlu0 %4773
    %4775 = vadd.xlane.f32.xlu0 %v4693
    %v4776 = vpop.xlane.xlu0 %4775
    %4777 = vadd.xlane.f32.xlu0 %v4696
    %v4778 = vpop.xlane.xlu0 %4777
    %4779 = vadd.xlane.f32.xlu0 %v4701
    %v4780 = vpop.xlane.xlu0 %4779
    %4781 = vadd.xlane.f32.xlu0 %v4704
    %v4782 = vpop.xlane.xlu0 %4781
    %4783 = vadd.xlane.f32.xlu0 %v4709
    %v4784 = vpop.xlane.xlu0 %4783
    %4785 = vadd.xlane.f32.xlu0 %v4712
    %v4786 = vpop.xlane.xlu0 %4785
    %4787 = vadd.xlane.f32.xlu0 %v4717
    %v4788 = vpop.xlane.xlu0 %4787
    %4789 = vadd.xlane.f32.xlu0 %v4720
    %v4790 = vpop.xlane.xlu0 %4789
    %4791 = vadd.xlane.f32.xlu0 %v4725
    %v4792 = vpop.xlane.xlu0 %4791
    %4793 = vadd.xlane.f32.xlu0 %v4728
    %v4794 = vpop.xlane.xlu0 %4793
    %v4795 = vrcp.pop 128.0
    %v4796 = vmul.f32 %v4732, %v4795
    %v4797 = vmul.f32 %v4734, %v4795
    %v4798 = vmul.f32 %v4736, %v4795
    %v4799 = vmul.f32 %v4738, %v4795
    %v4800 = vmul.f32 %v4740, %v4795
    %v4801 = vmul.f32 %v4742, %v4795
    %v4802 = vmul.f32 %v4744, %v4795
    %v4803 = vmul.f32 %v4746, %v4795
    %v4804 = vmul.f32 %v4748, %v4795
    %v4805 = vmul.f32 %v4750, %v4795
    %v4806 = vmul.f32 %v4752, %v4795
    %v4807 = vmul.f32 %v4754, %v4795
    %v4808 = vmul.f32 %v4756, %v4795
    %v4809 = vmul.f32 %v4758, %v4795
    %v4810 = vmul.f32 %v4760, %v4795
    %v4811 = vmul.f32 %v4762, %v4795
    %v4812 = vmul.f32 %v4764, %v4795
    %v4813 = vmul.f32 %v4766, %v4795
    %v4814 = vmul.f32 %v4768, %v4795
    %v4815 = vmul.f32 %v4770, %v4795
    %v4816 = vmul.f32 %v4772, %v4795
    %v4817 = vmul.f32 %v4774, %v4795
    %v4818 = vmul.f32 %v4776, %v4795
    %v4819 = vmul.f32 %v4778, %v4795
    %v4820 = vmul.f32 %v4780, %v4795
    %v4821 = vmul.f32 %v4782, %v4795
    %v4822 = vmul.f32 %v4784, %v4795
    %v4823 = vmul.f32 %v4786, %v4795
    %v4824 = vmul.f32 %v4788, %v4795
    %v4825 = vmul.f32 %v4790, %v4795
    %v4826 = vmul.f32 %v4792, %v4795
    %v4827 = vmul.f32 %v4794, %v4795
    %v4828 = vsub.f32 %v4605, %v4796
    %v4829 = vsub.f32 %v4608, %v4797
    %v4830 = vsub.f32 %v4613, %v4798
    %v4831 = vsub.f32 %v4616, %v4799
    %v4832 = vsub.f32 %v4621, %v4800
    %v4833 = vsub.f32 %v4624, %v4801
    %v4834 = vsub.f32 %v4629, %v4802
    %v4835 = vsub.f32 %v4632, %v4803
    %v4836 = vsub.f32 %v4637, %v4804
    %v4837 = vsub.f32 %v4640, %v4805
    %v4838 = vsub.f32 %v4645, %v4806
    %v4839 = vsub.f32 %v4648, %v4807
    %v4840 = vsub.f32 %v4653, %v4808
    %v4841 = vsub.f32 %v4656, %v4809
    %v4842 = vsub.f32 %v4661, %v4810
    %v4843 = vsub.f32 %v4664, %v4811
    %v4844 = vsub.f32 %v4669, %v4812
    %v4845 = vsub.f32 %v4672, %v4813
    %v4846 = vsub.f32 %v4677, %v4814
    %v4847 = vsub.f32 %v4680, %v4815
    %v4848 = vsub.f32 %v4685, %v4816
    %v4849 = vsub.f32 %v4688, %v4817
    %v4850 = vsub.f32 %v4693, %v4818
    %v4851 = vsub.f32 %v4696, %v4819
    %v4852 = vsub.f32 %v4701, %v4820
    %v4853 = vsub.f32 %v4704, %v4821
    %v4854 = vsub.f32 %v4709, %v4822
    %v4855 = vsub.f32 %v4712, %v4823
    %v4856 = vsub.f32 %v4717, %v4824
    %v4857 = vsub.f32 %v4720, %v4825
    %v4858 = vsub.f32 %v4725, %v4826
    %v4859 = vsub.f32 %v4728, %v4827
    %v4860 = vmul.f32 %v4828, %v4828
    %v4861 = vmul.f32 %v4829, %v4829
    %v4862 = vmul.f32 %v4830, %v4830
    %v4863 = vmul.f32 %v4831, %v4831
    %v4864 = vmul.f32 %v4832, %v4832
    %v4865 = vmul.f32 %v4833, %v4833
    %v4866 = vmul.f32 %v4834, %v4834
    %v4867 = vmul.f32 %v4835, %v4835
    %v4868 = vmul.f32 %v4836, %v4836
    %v4869 = vmul.f32 %v4837, %v4837
    %v4870 = vmul.f32 %v4838, %v4838
    %v4871 = vmul.f32 %v4839, %v4839
    %v4872 = vmul.f32 %v4840, %v4840
    %v4873 = vmul.f32 %v4841, %v4841
    %v4874 = vmul.f32 %v4842, %v4842
    %v4875 = vmul.f32 %v4843, %v4843
    %v4876 = vmul.f32 %v4844, %v4844
    %v4877 = vmul.f32 %v4845, %v4845
    %v4878 = vmul.f32 %v4846, %v4846
    %v4879 = vmul.f32 %v4847, %v4847
    %v4880 = vmul.f32 %v4848, %v4848
    %v4881 = vmul.f32 %v4849, %v4849
    %v4882 = vmul.f32 %v4850, %v4850
    %v4883 = vmul.f32 %v4851, %v4851
    %v4884 = vmul.f32 %v4852, %v4852
    %v4885 = vmul.f32 %v4853, %v4853
    %v4886 = vmul.f32 %v4854, %v4854
    %v4887 = vmul.f32 %v4855, %v4855
    %v4888 = vmul.f32 %v4856, %v4856
    %v4889 = vmul.f32 %v4857, %v4857
    %v4890 = vmul.f32 %v4858, %v4858
    %v4891 = vmul.f32 %v4859, %v4859
    %4892 = vadd.xlane.f32.xlu0 %v4860
    %v4893 = vpop.xlane.xlu0 %4892
    %4894 = vadd.xlane.f32.xlu0 %v4861
    %v4895 = vpop.xlane.xlu0 %4894
    %4896 = vadd.xlane.f32.xlu0 %v4862
    %v4897 = vpop.xlane.xlu0 %4896
    %4898 = vadd.xlane.f32.xlu0 %v4863
    %v4899 = vpop.xlane.xlu0 %4898
    %4900 = vadd.xlane.f32.xlu0 %v4864
    %v4901 = vpop.xlane.xlu0 %4900
    %4902 = vadd.xlane.f32.xlu0 %v4865
    %v4903 = vpop.xlane.xlu0 %4902
    %4904 = vadd.xlane.f32.xlu0 %v4866
    %v4905 = vpop.xlane.xlu0 %4904
    %4906 = vadd.xlane.f32.xlu0 %v4867
    %v4907 = vpop.xlane.xlu0 %4906
    %4908 = vadd.xlane.f32.xlu0 %v4868
    %v4909 = vpop.xlane.xlu0 %4908
    %4910 = vadd.xlane.f32.xlu0 %v4869
    %v4911 = vpop.xlane.xlu0 %4910
    %4912 = vadd.xlane.f32.xlu0 %v4870
    %v4913 = vpop.xlane.xlu0 %4912
    %4914 = vadd.xlane.f32.xlu0 %v4871
    %v4915 = vpop.xlane.xlu0 %4914
    %4916 = vadd.xlane.f32.xlu0 %v4872
    %v4917 = vpop.xlane.xlu0 %4916
    %4918 = vadd.xlane.f32.xlu0 %v4873
    %v4919 = vpop.xlane.xlu0 %4918
    %4920 = vadd.xlane.f32.xlu0 %v4874
    %v4921 = vpop.xlane.xlu0 %4920
    %4922 = vadd.xlane.f32.xlu0 %v4875
    %v4923 = vpop.xlane.xlu0 %4922
    %4924 = vadd.xlane.f32.xlu0 %v4876
    %v4925 = vpop.xlane.xlu0 %4924
    %4926 = vadd.xlane.f32.xlu0 %v4877
    %v4927 = vpop.xlane.xlu0 %4926
    %4928 = vadd.xlane.f32.xlu0 %v4878
    %v4929 = vpop.xlane.xlu0 %4928
    %4930 = vadd.xlane.f32.xlu0 %v4879
    %v4931 = vpop.xlane.xlu0 %4930
    %4932 = vadd.xlane.f32.xlu0 %v4880
    %v4933 = vpop.xlane.xlu0 %4932
    %4934 = vadd.xlane.f32.xlu0 %v4881
    %v4935 = vpop.xlane.xlu0 %4934
    %4936 = vadd.xlane.f32.xlu0 %v4882
    %v4937 = vpop.xlane.xlu0 %4936
    %4938 = vadd.xlane.f32.xlu0 %v4883
    %v4939 = vpop.xlane.xlu0 %4938
    %4940 = vadd.xlane.f32.xlu0 %v4884
    %v4941 = vpop.xlane.xlu0 %4940
    %4942 = vadd.xlane.f32.xlu0 %v4885
    %v4943 = vpop.xlane.xlu0 %4942
    %4944 = vadd.xlane.f32.xlu0 %v4886
    %v4945 = vpop.xlane.xlu0 %4944
    %4946 = vadd.xlane.f32.xlu0 %v4887
    %v4947 = vpop.xlane.xlu0 %4946
    %4948 = vadd.xlane.f32.xlu0 %v4888
    %v4949 = vpop.xlane.xlu0 %4948
    %4950 = vadd.xlane.f32.xlu0 %v4889
    %v4951 = vpop.xlane.xlu0 %4950
    %4952 = vadd.xlane.f32.xlu0 %v4890
    %v4953 = vpop.xlane.xlu0 %4952
    %4954 = vadd.xlane.f32.xlu0 %v4891
    %v4955 = vpop.xlane.xlu0 %4954
    %v4956 = vmul.f32 %v4893, %v4795
    %v4957 = vmul.f32 %v4895, %v4795
    %v4958 = vmul.f32 %v4897, %v4795
    %v4959 = vmul.f32 %v4899, %v4795
    %v4960 = vmul.f32 %v4901, %v4795
    %v4961 = vmul.f32 %v4903, %v4795
    %v4962 = vmul.f32 %v4905, %v4795
    %v4963 = vmul.f32 %v4907, %v4795
    %v4964 = vmul.f32 %v4909, %v4795
    %v4965 = vmul.f32 %v4911, %v4795
    %v4966 = vmul.f32 %v4913, %v4795
    %v4967 = vmul.f32 %v4915, %v4795
    %v4968 = vmul.f32 %v4917, %v4795
    %v4969 = vmul.f32 %v4919, %v4795
    %v4970 = vmul.f32 %v4921, %v4795
    %v4971 = vmul.f32 %v4923, %v4795
    %v4972 = vmul.f32 %v4925, %v4795
    %v4973 = vmul.f32 %v4927, %v4795
    %v4974 = vmul.f32 %v4929, %v4795
    %v4975 = vmul.f32 %v4931, %v4795
    %v4976 = vmul.f32 %v4933, %v4795
    %v4977 = vmul.f32 %v4935, %v4795
    %v4978 = vmul.f32 %v4937, %v4795
    %v4979 = vmul.f32 %v4939, %v4795
    %v4980 = vmul.f32 %v4941, %v4795
    %v4981 = vmul.f32 %v4943, %v4795
    %v4982 = vmul.f32 %v4945, %v4795
    %v4983 = vmul.f32 %v4947, %v4795
    %v4984 = vmul.f32 %v4949, %v4795
    %v4985 = vmul.f32 %v4951, %v4795
    %v4986 = vmul.f32 %v4953, %v4795
    %v4987 = vmul.f32 %v4955, %v4795
    %v4988 = vadd.f32 %v4956, 1e-05
    %v4989 = vadd.f32 %v4957, 1e-05
    %v4990 = vadd.f32 %v4958, 1e-05
    %v4991 = vadd.f32 %v4959, 1e-05
    %v4992 = vadd.f32 %v4960, 1e-05
    %v4993 = vadd.f32 %v4961, 1e-05
    %v4994 = vadd.f32 %v4962, 1e-05
    %v4995 = vadd.f32 %v4963, 1e-05
    %v4996 = vadd.f32 %v4964, 1e-05
    %v4997 = vadd.f32 %v4965, 1e-05
    %v4998 = vadd.f32 %v4966, 1e-05
    %v4999 = vadd.f32 %v4967, 1e-05
    %v5000 = vadd.f32 %v4968, 1e-05
    %v5001 = vadd.f32 %v4969, 1e-05
    %v5002 = vadd.f32 %v4970, 1e-05
    %v5003 = vadd.f32 %v4971, 1e-05
    %v5004 = vadd.f32 %v4972, 1e-05
    %v5005 = vadd.f32 %v4973, 1e-05
    %v5006 = vadd.f32 %v4974, 1e-05
    %v5007 = vadd.f32 %v4975, 1e-05
    %v5008 = vadd.f32 %v4976, 1e-05
    %v5009 = vadd.f32 %v4977, 1e-05
    %v5010 = vadd.f32 %v4978, 1e-05
    %v5011 = vadd.f32 %v4979, 1e-05
    %v5012 = vadd.f32 %v4980, 1e-05
    %v5013 = vadd.f32 %v4981, 1e-05
    %v5014 = vadd.f32 %v4982, 1e-05
    %v5015 = vadd.f32 %v4983, 1e-05
    %v5016 = vadd.f32 %v4984, 1e-05
    %v5017 = vadd.f32 %v4985, 1e-05
    %v5018 = vadd.f32 %v4986, 1e-05
    %v5019 = vadd.f32 %v4987, 1e-05
    %v5020 = vrsqrt.pop %v4988
    %v5021 = vrsqrt.pop %v4989
    %v5022 = vrsqrt.pop %v4990
    %v5023 = vrsqrt.pop %v4991
    %v5024 = vrsqrt.pop %v4992
    %v5025 = vrsqrt.pop %v4993
    %v5026 = vrsqrt.pop %v4994
    %v5027 = vrsqrt.pop %v4995
    %v5028 = vrsqrt.pop %v4996
    %v5029 = vrsqrt.pop %v4997
    %v5030 = vrsqrt.pop %v4998
    %v5031 = vrsqrt.pop %v4999
    %v5032 = vrsqrt.pop %v5000
    %v5033 = vrsqrt.pop %v5001
    %v5034 = vrsqrt.pop %v5002
    %v5035 = vrsqrt.pop %v5003
    %v5036 = vrsqrt.pop %v5004
    %v5037 = vrsqrt.pop %v5005
    %v5038 = vrsqrt.pop %v5006
    %v5039 = vrsqrt.pop %v5007
    %v5040 = vrsqrt.pop %v5008
    %v5041 = vrsqrt.pop %v5009
    %v5042 = vrsqrt.pop %v5010
    %v5043 = vrsqrt.pop %v5011
    %v5044 = vrsqrt.pop %v5012
    %v5045 = vrsqrt.pop %v5013
    %v5046 = vrsqrt.pop %v5014
    %v5047 = vrsqrt.pop %v5015
    %v5048 = vrsqrt.pop %v5016
    %v5049 = vrsqrt.pop %v5017
    %v5050 = vrsqrt.pop %v5018
    %v5051 = vrsqrt.pop %v5019
    %v5052 = vmul.f32 %v4828, %v5020
    %v5053 = vmul.f32 %v4829, %v5021
    %v5054 = vmul.f32 %v4830, %v5022
    %v5055 = vmul.f32 %v4831, %v5023
    %v5056 = vmul.f32 %v4832, %v5024
    %v5057 = vmul.f32 %v4833, %v5025
    %v5058 = vmul.f32 %v4834, %v5026
    %v5059 = vmul.f32 %v4835, %v5027
    %v5060 = vmul.f32 %v4836, %v5028
    %v5061 = vmul.f32 %v4837, %v5029
    %v5062 = vmul.f32 %v4838, %v5030
    %v5063 = vmul.f32 %v4839, %v5031
    %v5064 = vmul.f32 %v4840, %v5032
    %v5065 = vmul.f32 %v4841, %v5033
    %v5066 = vmul.f32 %v4842, %v5034
    %v5067 = vmul.f32 %v4843, %v5035
    %v5068 = vmul.f32 %v4844, %v5036
    %v5069 = vmul.f32 %v4845, %v5037
    %v5070 = vmul.f32 %v4846, %v5038
    %v5071 = vmul.f32 %v4847, %v5039
    %v5072 = vmul.f32 %v4848, %v5040
    %v5073 = vmul.f32 %v4849, %v5041
    %v5074 = vmul.f32 %v4850, %v5042
    %v5075 = vmul.f32 %v4851, %v5043
    %v5076 = vmul.f32 %v4852, %v5044
    %v5077 = vmul.f32 %v4853, %v5045
    %v5078 = vmul.f32 %v4854, %v5046
    %v5079 = vmul.f32 %v4855, %v5047
    %v5080 = vmul.f32 %v4856, %v5048
    %v5081 = vmul.f32 %v4857, %v5049
    %v5082 = vmul.f32 %v4858, %v5050
    %v5083 = vmul.f32 %v4859, %v5051
    %v5084 = vmul.f32 %v5052, %v4408
    %v5085 = vmul.f32 %v5053, %v4408
    %v5086 = vmul.f32 %v5054, %v4408
    %v5087 = vmul.f32 %v5055, %v4408
    %v5088 = vmul.f32 %v5056, %v4408
    %v5089 = vmul.f32 %v5057, %v4408
    %v5090 = vmul.f32 %v5058, %v4408
    %v5091 = vmul.f32 %v5059, %v4408
    %v5092 = vmul.f32 %v5060, %v4408
    %v5093 = vmul.f32 %v5061, %v4408
    %v5094 = vmul.f32 %v5062, %v4408
    %v5095 = vmul.f32 %v5063, %v4408
    %v5096 = vmul.f32 %v5064, %v4408
    %v5097 = vmul.f32 %v5065, %v4408
    %v5098 = vmul.f32 %v5066, %v4408
    %v5099 = vmul.f32 %v5067, %v4408
    %v5100 = vmul.f32 %v5068, %v4408
    %v5101 = vmul.f32 %v5069, %v4408
    %v5102 = vmul.f32 %v5070, %v4408
    %v5103 = vmul.f32 %v5071, %v4408
    %v5104 = vmul.f32 %v5072, %v4408
    %v5105 = vmul.f32 %v5073, %v4408
    %v5106 = vmul.f32 %v5074, %v4408
    %v5107 = vmul.f32 %v5075, %v4408
    %v5108 = vmul.f32 %v5076, %v4408
    %v5109 = vmul.f32 %v5077, %v4408
    %v5110 = vmul.f32 %v5078, %v4408
    %v5111 = vmul.f32 %v5079, %v4408
    %v5112 = vmul.f32 %v5080, %v4408
    %v5113 = vmul.f32 %v5081, %v4408
    %v5114 = vmul.f32 %v5082, %v4408
    %v5115 = vmul.f32 %v5083, %v4408
    %v5116 = vadd.f32 %v5084, %v4409
    %v5117 = vadd.f32 %v5085, %v4409
    %v5118 = vadd.f32 %v5086, %v4409
    %v5119 = vadd.f32 %v5087, %v4409
    %v5120 = vadd.f32 %v5088, %v4409
    %v5121 = vadd.f32 %v5089, %v4409
    %v5122 = vadd.f32 %v5090, %v4409
    %v5123 = vadd.f32 %v5091, %v4409
    %v5124 = vadd.f32 %v5092, %v4409
    %v5125 = vadd.f32 %v5093, %v4409
    %v5126 = vadd.f32 %v5094, %v4409
    %v5127 = vadd.f32 %v5095, %v4409
    %v5128 = vadd.f32 %v5096, %v4409
    %v5129 = vadd.f32 %v5097, %v4409
    %v5130 = vadd.f32 %v5098, %v4409
    %v5131 = vadd.f32 %v5099, %v4409
    %v5132 = vadd.f32 %v5100, %v4409
    %v5133 = vadd.f32 %v5101, %v4409
    %v5134 = vadd.f32 %v5102, %v4409
    %v5135 = vadd.f32 %v5103, %v4409
    %v5136 = vadd.f32 %v5104, %v4409
    %v5137 = vadd.f32 %v5105, %v4409
    %v5138 = vadd.f32 %v5106, %v4409
    %v5139 = vadd.f32 %v5107, %v4409
    %v5140 = vadd.f32 %v5108, %v4409
    %v5141 = vadd.f32 %v5109, %v4409
    %v5142 = vadd.f32 %v5110, %v4409
    %v5143 = vadd.f32 %v5111, %v4409
    %v5144 = vadd.f32 %v5112, %v4409
    %v5145 = vadd.f32 %v5113, %v4409
    %v5146 = vadd.f32 %v5114, %v4409
    %v5147 = vadd.f32 %v5115, %v4409
    %v5148 = vmul.f32 %v5116, 0.1
    %v5149 = vmul.f32 %v5117, 0.1
    %v5150 = vmul.f32 %v5118, 0.1
    %v5151 = vmul.f32 %v5119, 0.1
    %v5152 = vmul.f32 %v5120, 0.1
    %v5153 = vmul.f32 %v5121, 0.1
    %v5154 = vmul.f32 %v5122, 0.1
    %v5155 = vmul.f32 %v5123, 0.1
    %v5156 = vmul.f32 %v5124, 0.1
    %v5157 = vmul.f32 %v5125, 0.1
    %v5158 = vmul.f32 %v5126, 0.1
    %v5159 = vmul.f32 %v5127, 0.1
    %v5160 = vmul.f32 %v5128, 0.1
    %v5161 = vmul.f32 %v5129, 0.1
    %v5162 = vmul.f32 %v5130, 0.1
    %v5163 = vmul.f32 %v5131, 0.1
    %v5164 = vmul.f32 %v5132, 0.1
    %v5165 = vmul.f32 %v5133, 0.1
    %v5166 = vmul.f32 %v5134, 0.1
    %v5167 = vmul.f32 %v5135, 0.1
    %v5168 = vmul.f32 %v5136, 0.1
    %v5169 = vmul.f32 %v5137, 0.1
    %v5170 = vmul.f32 %v5138, 0.1
    %v5171 = vmul.f32 %v5139, 0.1
    %v5172 = vmul.f32 %v5140, 0.1
    %v5173 = vmul.f32 %v5141, 0.1
    %v5174 = vmul.f32 %v5142, 0.1
    %v5175 = vmul.f32 %v5143, 0.1
    %v5176 = vmul.f32 %v5144, 0.1
    %v5177 = vmul.f32 %v5145, 0.1
    %v5178 = vmul.f32 %v5146, 0.1
    %v5179 = vmul.f32 %v5147, 0.1
    %v5180 = vmax.f32 %v5116, %v5148
    %v5181 = vmax.f32 %v5117, %v5149
    %v5182 = vmax.f32 %v5118, %v5150
    %v5183 = vmax.f32 %v5119, %v5151
    %v5184 = vmax.f32 %v5120, %v5152
    %v5185 = vmax.f32 %v5121, %v5153
    %v5186 = vmax.f32 %v5122, %v5154
    %v5187 = vmax.f32 %v5123, %v5155
    %v5188 = vmax.f32 %v5124, %v5156
    %v5189 = vmax.f32 %v5125, %v5157
    %v5190 = vmax.f32 %v5126, %v5158
    %v5191 = vmax.f32 %v5127, %v5159
    %v5192 = vmax.f32 %v5128, %v5160
    %v5193 = vmax.f32 %v5129, %v5161
    %v5194 = vmax.f32 %v5130, %v5162
    %v5195 = vmax.f32 %v5131, %v5163
    %v5196 = vmax.f32 %v5132, %v5164
    %v5197 = vmax.f32 %v5133, %v5165
    %v5198 = vmax.f32 %v5134, %v5166
    %v5199 = vmax.f32 %v5135, %v5167
    %v5200 = vmax.f32 %v5136, %v5168
    %v5201 = vmax.f32 %v5137, %v5169
    %v5202 = vmax.f32 %v5138, %v5170
    %v5203 = vmax.f32 %v5139, %v5171
    %v5204 = vmax.f32 %v5140, %v5172
    %v5205 = vmax.f32 %v5141, %v5173
    %v5206 = vmax.f32 %v5142, %v5174
    %v5207 = vmax.f32 %v5143, %v5175
    %v5208 = vmax.f32 %v5144, %v5176
    %v5209 = vmax.f32 %v5145, %v5177
    %v5210 = vmax.f32 %v5146, %v5178
    %v5211 = vmax.f32 %v5147, %v5179
    %v5212 = vld [vmem:[%s5] sm:$0xf]
    %v5213 = vpack.c.bf16 %v5181, %v5180
    %v5214 = vpack.c.bf16 %v5183, %v5182
    %v5215 = vpack.c.bf16 %v5185, %v5184
    %v5216 = vpack.c.bf16 %v5187, %v5186
    %v5217 = vpack.c.bf16 %v5189, %v5188
    %v5218 = vpack.c.bf16 %v5191, %v5190
    %v5219 = vpack.c.bf16 %v5193, %v5192
    %v5220 = vpack.c.bf16 %v5195, %v5194
    %v5221 = vpack.c.bf16 %v5197, %v5196
    %v5222 = vpack.c.bf16 %v5199, %v5198
    %v5223 = vpack.c.bf16 %v5201, %v5200
    %v5224 = vpack.c.bf16 %v5203, %v5202
    %v5225 = vpack.c.bf16 %v5205, %v5204
    %v5226 = vpack.c.bf16 %v5207, %v5206
    %v5227 = vpack.c.bf16 %v5209, %v5208
    %v5228 = vpack.c.bf16 %v5211, %v5210
    %v5229 = vld [vmem:[%s7] sm:$0xff]
    %5231 = vset.pattern.permute.xlu0 0
    %5232 = vperm.xlu0 %5231, %v5229
    %v5233 = vpop.permute.xlu0 %5232
    %5235 = vmatprep.subr.bf16.mxu0 0
    %5236 = vmatpush1.bf16.xpose.msra.mxu0 %v5213
    %5237 = vmatprep.subr.bf16.mxu0 0
    %5238 = vmatpush1.bf16.xpose.msra.mxu0 %v5214
    %5239 = vmatprep.subr.bf16.mxu0 0
    %5240 = vmatpush1.bf16.xpose.msra.mxu0 %v5215
    %5241 = vmatprep.subr.bf16.mxu0 0
    %5242 = vmatpush1.bf16.xpose.msra.mxu0 %v5216
    %5243 = vmatprep.subr.bf16.mxu0 0
    %5244 = vmatpush1.bf16.xpose.msra.mxu0 %v5217
    %5245 = vmatprep.subr.bf16.mxu0 0
    %5246 = vmatpush1.bf16.xpose.msra.mxu0 %v5218
    %5247 = vmatprep.subr.bf16.mxu0 0
    %5248 = vmatpush1.bf16.xpose.msra.mxu0 %v5219
    %5249 = vmatprep.subr.bf16.mxu0 0
    %5250 = vmatpush1.bf16.xpose.msra.mxu0 %v5220
    %5251 = vmatprep.subr.bf16.mxu0 0
    %5252 = vmatpush1.bf16.xpose.msra.mxu0 %v5221
    %5253 = vmatprep.subr.bf16.mxu0 0
    %5254 = vmatpush1.bf16.xpose.msra.mxu0 %v5222
    %5255 = vmatprep.subr.bf16.mxu0 0
    %5256 = vmatpush1.bf16.xpose.msra.mxu0 %v5223
    %5257 = vmatprep.subr.bf16.mxu0 0
    %5258 = vmatpush1.bf16.xpose.msra.mxu0 %v5224
    %5259 = vmatprep.subr.bf16.mxu0 0
    %5260 = vmatpush1.bf16.xpose.msra.mxu0 %v5225
    %5261 = vmatprep.subr.bf16.mxu0 0
    %5262 = vmatpush1.bf16.xpose.msra.mxu0 %v5226
    %5263 = vmatprep.subr.bf16.mxu0 0
    %5264 = vmatpush1.bf16.xpose.msra.mxu0 %v5227
    %5265 = vmatprep.subr.bf16.mxu0 0
    %5266 = vmatpush1.bf16.xpose.msra.mxu0 %v5228
    %5267 = vmatprep.mubr.bf16.mxu0 0
    %5268 = vmatmul.mubr.bf16.gmra.mrb[0].mxu0 %v5212
    %v5269 = vpop.f32.mrb[0].mxu0
    %v5270 = vadd.f32 %v5233, %v5269
    %v5271 = vpop.f32.mrb[0].mxu0
    %v5272 = vadd.f32 %v5233, %v5271
    %v5273 = vpop.f32.mrb[0].mxu0
    %v5274 = vpop.f32.mrb[0].mxu0
    %5275 = vdwg.mxu0
    %5276 = vst [vmem:[#allocation8] sm:$0xff] %v5270
    %5277 = vst [vmem:[#allocation8 + $0x8] sm:$0xff] %v5272
    // Predicated region
    $region46: #{tpu_custom_call.1} parent=1 // pred_check
      _
    $region47: #{tpu_custom_call.1} parent=1 // pred_check_branch
      %5279 = sbr.rel (0) target = $region49
    $region48: #{tpu_custom_call.1} parent=1 // pred_region
      %s5281 = ssub.s32 256, 256
      %5282 = vsyncadd [#allocation4], %s5281
      %s5284 = sshll.u32 [#allocation8], 4
      %s5285 = int_to_ptr.vmem [resolvable:$true] %s5284
      %5287 = dma.vmem_to_hbm [thread:$0]  %s5285, 256, %s8, [#allocation4]
    $region49: #{tpu_custom_call.1} parent=1 // pred_fallthru
      _
    // Predicated region
    $region50: #{tpu_custom_call.1} parent=1 // pred_check
      _
    $region51: #{tpu_custom_call.1} parent=1 // pred_check_branch
      %5289 = sbr.rel (0) target = $region53
    $region52: #{tpu_custom_call.1} parent=1 // pred_region
      %5290 = dma.done [#allocation4], 256
    $region53: #{tpu_custom_call.1} parent=1 // pred_fallthru
      _
    %5291 = vsyncpa [#allocation3], 1
    %5292 = vsyncpa [#allocation6], 1
    %5293 = vsyncpa [#allocation4], 1

</llo_original>
